<compile_context>
chip_gen: v7x
topology: tpu7x:2x2x1
jax: 0.10.0
libtpu: 0.0.40
codegen_flags: <defaults>
</compile_context>

<pallas_src>
import jax
import jax.numpy as jnp
import numpy as np
from jax.experimental import pallas as pl
from jax.experimental.pallas import tpu as pltpu


def _round_up(x, m):
    return ((x + m - 1) // m) * m


def _pick_query_tile(n_padded):
    # Single query step per batch for small volumes (avoids per-step overhead
    # and redundant kv recompute); otherwise the largest 128-multiple tile
    # <= 512 that divides the padded token count.
    if n_padded <= 512:
        return n_padded
    for cand in (512, 256, 128):
        if n_padded % cand == 0:
            return cand
    return 128  # unreachable: n_padded is always a multiple of 128


def _make_kernel(C8, n_valid, n_padded):
    needs_mask = n_padded != n_valid

    def kernel(x_ref, wq_ref, bq_ref, wk_ref, bk_ref, wv_ref, bv_ref, out_ref):
        tq = out_ref.shape[2]
        start = pl.multiple_of(pl.program_id(1) * tq, 128)

        xf = x_ref[0].astype(jnp.float32)                        # (C, Np) all tokens
        xq = x_ref[0, :, pl.ds(start, tq)].astype(jnp.float32)   # (C, tq) this query tile

        # 1x1x1-conv key/value projections over all tokens (f32: contraction
        # depth is only C).  Recomputed per query tile -- cheap relative to
        # the softmax, and it keeps the query grid axis "parallel".
        k = (jnp.dot(wk_ref[...], xf, preferred_element_type=jnp.float32)
             + bk_ref[...])                                      # (C8, Np)
        v = (jnp.dot(wv_ref[...], xf, preferred_element_type=jnp.float32)
             + bv_ref[...])                                      # (C,  Np)

        # Query projection produced directly in (tq, C8) layout so its columns
        # broadcast over lanes in the score accumulation below.
        q_t = (jnp.einsum('ct,oc->to', xq, wq_ref[...],
                          preferred_element_type=jnp.float32)
               + bq_ref[...])                                    # (tq, C8)

        # scores[t, j] = sum_c q[t, c] * k[c, j]: the contraction is only
        # C8 = C//8 deep, so accumulate it as C8 VPU broadcast multiply-adds
        # instead of a zero-padded MXU pass.  (No 1/sqrt(d) scale -- matches
        # the original attresUnet module; do not "fix".)
        s = q_t[:, 0:1] * k[0:1, :]                              # (tq, Np)
        for c in range(1, C8):
            s = s + q_t[:, c:c + 1] * k[c:c + 1, :]

        if needs_mask:  # zero-padded key tokens must not receive attention
            col = jax.lax.broadcasted_iota(jnp.int32, s.shape, 1)
            s = jnp.where(col < n_valid, s, -1e30)

        s = s - jnp.max(s, axis=-1, keepdims=True)
        p = jnp.exp(s)
        p = p * pl.reciprocal(jnp.sum(p, axis=-1, keepdims=True), approx=True)

        # out[c, t] = sum_j v[c, j] * p[t, j] == bmm(value, attention^T);
        # bf16 operands with f32 accumulation = native single-pass MXU path.
        o = jnp.einsum('cj,tj->ct',
                       v.astype(jnp.bfloat16), p.astype(jnp.bfloat16),
                       preferred_element_type=jnp.float32)       # (C, tq)

        out_ref[0] = (o + xq).astype(out_ref.dtype)

    return kernel


def self_attention_pallas(x, wq, bq, wk, bk, wv, bv, *, tq=None):
    """x: (B, C, H, W, D) float32. wq/wk: (C//8, C), wv: (C, C), biases 1-D."""
    B, C, H, W, D = x.shape
    C8 = wq.shape[0]
    N = H * W * D
    Np = _round_up(N, 128)

    # Channel-major token layout: pure reshape, then zero-pad tokens to a
    # 128-lane multiple (padded keys are masked, padded outputs sliced off).
    x_cn = x.reshape(B, C, N)
    if Np != N:
        x_cn = jnp.pad(x_cn, ((0, 0), (0, 0), (0, Np - N)))

    if tq is None:
        tq = _pick_query_tile(Np)
    assert Np % tq == 0 and tq % 128 == 0, (N, Np, tq)
    nq = Np // tq

    wq = wq.astype(jnp.float32)
    wk = wk.astype(jnp.float32)
    wv = wv.astype(jnp.float32)
    bq_row = bq.astype(jnp.float32).reshape(1, C8)   # broadcasts over (tq, C8)
    bk_col = bk.astype(jnp.float32).reshape(C8, 1)   # broadcasts over (C8, Np)
    bv_col = bv.astype(jnp.float32).reshape(C, 1)    # broadcasts over (C,  Np)

    # VMEM budget: x block + output tile (double-buffered) + k/v + score/prob
    # temporaries; cap with headroom under v7x's 64 MiB physical VMEM.
    # TODO(synk): for token counts where this estimate exceeds the cap, tile
    # the key/value axis with online softmax (flash style) so the (tq, Np)
    # score tile and full-N k/v drop out of the live set.
    vmem_est = (2 * C * Np * 4 + 2 * C * tq * 4
                + (C8 + C) * Np * 4 + C * Np * 2
                + 4 * tq * Np * 4 + (1 << 20))
    vmem_limit = int(min(max(2 * vmem_est, 32 * 1024 * 1024),
                         56 * 1024 * 1024))

    cost = pl.CostEstimate(
        flops=int(2 * B * (nq * (C8 + C) * C * Np + C8 * C * Np
                           + (C8 + C) * Np * Np)),
        transcendentals=int(B * Np * Np),
        bytes_accessed=int(4 * (2 * B * C * Np
                                + (2 * C8 + C) * C + 2 * C8 + C)),
    )

    kernel = _make_kernel(C8=C8, n_valid=N, n_padded=Np)

    out_cn = pl.pallas_call(
        kernel,
        out_shape=jax.ShapeDtypeStruct((B, C, Np), x.dtype),
        grid=(B, nq),
        in_specs=[
            # Full-token x block: its index depends only on b, so it is DMAed
            # once per batch element and stays resident across query tiles.
            # (Double-buffered by default; pl.Buffered(1) would reclaim
            # C*Np*4 bytes but is left at the default for safety.)
            pl.BlockSpec((1, C, Np), lambda b, i: (b, 0, 0)),
            pl.BlockSpec((C8, C), lambda b, i: (0, 0)),   # wq
            pl.BlockSpec((1, C8), lambda b, i: (0, 0)),   # bq (row)
            pl.BlockSpec((C8, C), lambda b, i: (0, 0)),   # wk
            pl.BlockSpec((C8, 1), lambda b, i: (0, 0)),   # bk (col)
            pl.BlockSpec((C, C), lambda b, i: (0, 0)),    # wv
            pl.BlockSpec((C, 1), lambda b, i: (0, 0)),    # bv (col)
        ],
        out_specs=pl.BlockSpec((1, C, tq), lambda b, i: (b, 0, i)),
        compiler_params=pltpu.CompilerParams(
            dimension_semantics=("parallel", "parallel"),
            vmem_limit_bytes=vmem_limit),
        cost_estimate=cost,
    )(x_cn, wq, bq_row, wk, bk_col, wv, bv_col)

    out = out_cn[:, :, :N] if Np != N else out_cn
    return out.reshape(B, C, H, W, D)


def self_attention_ref(x, wq, bq, wk, bk, wv, bv):
    """Pure-JAX reference mirroring the PyTorch forward exactly."""
    B, C, H, W, D = x.shape
    N = H * W * D

    def conv1(w, b):
        return jnp.einsum('oc,bchwd->bohwd', w, x) + b[None, :, None, None, None]

    q = conv1(wq, bq).reshape(B, -1, N).transpose(0, 2, 1)            # (B, N, C8)
    k = conv1(wk, bk).reshape(B, -1, N)                               # (B, C8, N)
    attn = jax.nn.softmax(jnp.einsum('bnc,bcm->bnm', q, k), axis=-1)  # (B, N, N)
    v = conv1(wv, bv).reshape(B, -1, N)                               # (B, C, N)
    out = jnp.einsum('bcn,bmn->bcm', v, attn).reshape(B, -1, H, W, D)
    return out + x


if __name__ == "__main__":
    key = jax.random.PRNGKey(0)

    def make_inputs(k0, B, C, H, W, D):
        C8 = C // 8
        ks = jax.random.split(k0, 7)
        x = jax.random.normal(ks[0], (B, C, H, W, D), dtype=jnp.float32)
        wq = jax.random.normal(ks[1], (C8, C), dtype=jnp.float32) * 0.1
        bq = jax.random.normal(ks[2], (C8,), dtype=jnp.float32) * 0.1
        wk = jax.random.normal(ks[3], (C8, C), dtype=jnp.float32) * 0.1
        bk = jax.random.normal(ks[4], (C8,), dtype=jnp.float32) * 0.1
        wv = jax.random.normal(ks[5], (C, C), dtype=jnp.float32) * 0.1
        bv = jax.random.normal(ks[6], (C,), dtype=jnp.float32) * 0.1
        return x, wq, bq, wk, bk, wv, bv

    def check(args, tq=None):
        out = jax.block_until_ready(self_attention_pallas(*args, tq=tq))
        ref = self_attention_ref(*args)
        # Tolerance relaxed vs exact f32: bf16 MXU operands for the
        # value @ attention^T matmul plus the EUP approximate reciprocal in
        # the softmax normalization.
        np.testing.assert_allclose(np.asarray(out), np.asarray(ref),
                                   rtol=2e-2, atol=2e-2)

    keys = jax.random.split(key, 3)
    # in_channels=16 -> C//8 = 2; N = 512 (single query tile per batch).
    check(make_inputs(keys[0], 2, 16, 8, 8, 8))
    # N = 125 -> padded to 128 (exercises the key-padding mask path).
    check(make_inputs(keys[1], 1, 16, 5, 5, 5))
    # Same volume, forced tq=128 -> 4 query tiles per batch (exercises tiled
    # query slicing and the fully "parallel" query grid axis).
    check(make_inputs(keys[2], 2, 16, 8, 8, 8), tq=128)

    print("KERNEL_OK")
</pallas_src>

<mosaic_0001>
module attributes {stable_mosaic.version = 11 : i64} {
  func.func @kernel(%arg0: i32, %arg1: i32, %arg2: memref<1x16x512xf32, #tpu.memory_space<vmem>>, %arg3: memref<2x16xf32, #tpu.memory_space<vmem>>, %arg4: memref<1x2xf32, #tpu.memory_space<vmem>>, %arg5: memref<2x16xf32, #tpu.memory_space<vmem>>, %arg6: memref<2x1xf32, #tpu.memory_space<vmem>>, %arg7: memref<16x16xf32, #tpu.memory_space<vmem>>, %arg8: memref<16x1xf32, #tpu.memory_space<vmem>>, %arg9: memref<1x16x512xf32, #tpu.memory_space<vmem>>) attributes {dimension_semantics = [#tpu.dimension_semantics<parallel>, #tpu.dimension_semantics<parallel>], iteration_bounds = array<i64: 2, 1>, scalar_prefetch = 0 : i64, scratch_operands = 0 : i64, tpu.core_type = #tpu.core_type<tc>, window_params = [{transform_indices = @transform_0, window_bounds = array<i64: 1, 16, 512>}, {pipeline_mode = #tpu.pipeline_mode<synchronous>, transform_indices = @transform_1, window_bounds = array<i64: 2, 16>}, {pipeline_mode = #tpu.pipeline_mode<synchronous>, transform_indices = @transform_2, window_bounds = array<i64: 1, 2>}, {pipeline_mode = #tpu.pipeline_mode<synchronous>, transform_indices = @transform_3, window_bounds = array<i64: 2, 16>}, {pipeline_mode = #tpu.pipeline_mode<synchronous>, transform_indices = @transform_4, window_bounds = array<i64: 2, 1>}, {pipeline_mode = #tpu.pipeline_mode<synchronous>, transform_indices = @transform_5, window_bounds = array<i64: 16, 16>}, {pipeline_mode = #tpu.pipeline_mode<synchronous>, transform_indices = @transform_6, window_bounds = array<i64: 16, 1>}, {transform_indices = @transform_7, window_bounds = array<i64: 1, 16, 512>}]} {
    %c512_i32 = arith.constant 512 : i32
    %0 = arith.muli %arg1, %c512_i32 : i32
    %1 = tpu.assume_multiple %0, 128 : i32
    %c0 = arith.constant 0 : index
    %c0_0 = arith.constant 0 : index
    %c0_1 = arith.constant 0 : index
    %2 = vector.load %arg2[%c0, %c0_0, %c0_1] : memref<1x16x512xf32, #tpu.memory_space<vmem>>, vector<1x16x512xf32>
    %3 = vector.shape_cast %2 : vector<1x16x512xf32> to vector<16x512xf32>
    %c0_2 = arith.constant 0 : index
    %c0_3 = arith.constant 0 : index
    %4 = arith.index_cast %1 : i32 to index
    %5 = vector.load %arg2[%c0_2, %c0_3, %4] : memref<1x16x512xf32, #tpu.memory_space<vmem>>, vector<1x16x512xf32>
    %6 = vector.shape_cast %5 : vector<1x16x512xf32> to vector<16x512xf32>
    %c0_4 = arith.constant 0 : index
    %c0_5 = arith.constant 0 : index
    %7 = vector.load %arg5[%c0_4, %c0_5] : memref<2x16xf32, #tpu.memory_space<vmem>>, vector<2x16xf32>
    %cst = arith.constant dense<0.000000e+00> : vector<2x512xf32>
    %8 = tpu.matmul %7, %3, %cst {dimension_numbers = #tpu.dot_dimension_numbers<[1], [0], [0], [1], [0, 0, 1, 1], [], []>} : vector<2x16xf32>, vector<16x512xf32>, vector<2x512xf32> -> vector<2x512xf32>
    %c0_6 = arith.constant 0 : index
    %c0_7 = arith.constant 0 : index
    %9 = vector.load %arg6[%c0_6, %c0_7] : memref<2x1xf32, #tpu.memory_space<vmem>>, vector<2x1xf32>
    %10 = vector.broadcast %9 : vector<2x1xf32> to vector<2x512xf32>
    %11 = arith.addf %8, %10 : vector<2x512xf32>
    %c0_8 = arith.constant 0 : index
    %c0_9 = arith.constant 0 : index
    %12 = vector.load %arg7[%c0_8, %c0_9] : memref<16x16xf32, #tpu.memory_space<vmem>>, vector<16x16xf32>
    %cst_10 = arith.constant dense<0.000000e+00> : vector<16x512xf32>
    %13 = tpu.matmul %12, %3, %cst_10 {dimension_numbers = #tpu.dot_dimension_numbers<[1], [0], [0], [1], [0, 0, 1, 1], [], []>} : vector<16x16xf32>, vector<16x512xf32>, vector<16x512xf32> -> vector<16x512xf32>
    %c0_11 = arith.constant 0 : index
    %c0_12 = arith.constant 0 : index
    %14 = vector.load %arg8[%c0_11, %c0_12] : memref<16x1xf32, #tpu.memory_space<vmem>>, vector<16x1xf32>
    %15 = vector.broadcast %14 : vector<16x1xf32> to vector<16x512xf32>
    %16 = arith.addf %13, %15 : vector<16x512xf32>
    %c0_13 = arith.constant 0 : index
    %c0_14 = arith.constant 0 : index
    %17 = vector.load %arg3[%c0_13, %c0_14] : memref<2x16xf32, #tpu.memory_space<vmem>>, vector<2x16xf32>
    "tpu.trace_start"() <{level = 10 : i32, message = "ct,oc->to"}> : () -> ()
    %cst_15 = arith.constant dense<0.000000e+00> : vector<512x2xf32>
    %18 = tpu.matmul %6, %17, %cst_15 {dimension_numbers = #tpu.dot_dimension_numbers<[0], [1], [1], [0], [0, 1, 1, 0], [], []>} : vector<16x512xf32>, vector<2x16xf32>, vector<512x2xf32> -> vector<512x2xf32>
    "tpu.trace_stop"() : () -> ()
    %c0_16 = arith.constant 0 : index
    %c0_17 = arith.constant 0 : index
    %19 = vector.load %arg4[%c0_16, %c0_17] : memref<1x2xf32, #tpu.memory_space<vmem>>, vector<1x2xf32>
    %20 = vector.broadcast %19 : vector<1x2xf32> to vector<512x2xf32>
    %21 = arith.addf %18, %20 : vector<512x2xf32>
    %22 = vector.extract_strided_slice %21 {offsets = [0, 0], sizes = [512, 1], strides = [1, 1]} : vector<512x2xf32> to vector<512x1xf32>
    %23 = vector.extract_strided_slice %11 {offsets = [0, 0], sizes = [1, 512], strides = [1, 1]} : vector<2x512xf32> to vector<1x512xf32>
    %24 = vector.broadcast %22 : vector<512x1xf32> to vector<512x512xf32>
    %25 = vector.broadcast %23 : vector<1x512xf32> to vector<512x512xf32>
    %26 = arith.mulf %24, %25 : vector<512x512xf32>
    %27 = vector.extract_strided_slice %21 {offsets = [0, 1], sizes = [512, 1], strides = [1, 1]} : vector<512x2xf32> to vector<512x1xf32>
    %28 = vector.extract_strided_slice %11 {offsets = [1, 0], sizes = [1, 512], strides = [1, 1]} : vector<2x512xf32> to vector<1x512xf32>
    %29 = vector.broadcast %27 : vector<512x1xf32> to vector<512x512xf32>
    %30 = vector.broadcast %28 : vector<1x512xf32> to vector<512x512xf32>
    %31 = arith.mulf %29, %30 : vector<512x512xf32>
    %32 = arith.addf %26, %31 : vector<512x512xf32>
    %cst_18 = arith.constant dense<0xFF800000> : vector<512xf32>
    %33 = vector.multi_reduction <maximumf>, %32, %cst_18 [1] : vector<512x512xf32> to vector<512xf32>
    %34 = vector.shape_cast %33 : vector<512xf32> to vector<512x1xf32>
    %35 = vector.broadcast %34 : vector<512x1xf32> to vector<512x512xf32>
    %36 = arith.subf %32, %35 : vector<512x512xf32>
    %37 = math.exp %36 : vector<512x512xf32>
    %cst_19 = arith.constant dense<0.000000e+00> : vector<512xf32>
    %38 = vector.multi_reduction <add>, %37, %cst_19 [1] : vector<512x512xf32> to vector<512xf32>
    %39 = vector.shape_cast %38 : vector<512xf32> to vector<512x1xf32>
    %40 = tpu.reciprocal %39 {approx = true} : vector<512x1xf32> -> vector<512x1xf32>
    %41 = vector.broadcast %40 : vector<512x1xf32> to vector<512x512xf32>
    %42 = arith.mulf %37, %41 : vector<512x512xf32>
    %43 = arith.truncf %16 : vector<16x512xf32> to vector<16x512xbf16>
    %44 = arith.truncf %42 : vector<512x512xf32> to vector<512x512xbf16>
    "tpu.trace_start"() <{level = 10 : i32, message = "cj,tj->ct"}> : () -> ()
    %cst_20 = arith.constant dense<0.000000e+00> : vector<16x512xf32>
    %45 = tpu.matmul %43, %44, %cst_20 {dimension_numbers = #tpu.dot_dimension_numbers<[1], [1], [0], [0], [0, 0, 1, 0], [], []>} : vector<16x512xbf16>, vector<512x512xbf16>, vector<16x512xf32> -> vector<16x512xf32>
    "tpu.trace_stop"() : () -> ()
    %46 = arith.addf %45, %6 : vector<16x512xf32>
    %c0_21 = arith.constant 0 : index
    %c0_22 = arith.constant 0 : index
    %c0_23 = arith.constant 0 : index
    %47 = vector.load %arg9[%c0_21, %c0_22, %c0_23] : memref<1x16x512xf32, #tpu.memory_space<vmem>>, vector<1x16x512xf32>
    %48 = vector.shape_cast %47 : vector<1x16x512xf32> to vector<16x512xf32>
    %49 = vector.shape_cast %46 : vector<16x512xf32> to vector<1x16x512xf32>
    tpu.vector_store %arg9[%c0_21, %c0_22, %c0_23], %49 {strides = array<i32>} : memref<1x16x512xf32, #tpu.memory_space<vmem>>, vector<1x16x512xf32>,
    return
  }
  func.func @transform_0(%arg0: i32, %arg1: i32) -> (i32, i32, i32) {
    %c0_i32 = arith.constant 0 : i32
    %c0_i32_0 = arith.constant 0 : i32
    %c0_i32_1 = arith.constant 0 : i32
    return %arg0, %c0_i32, %c0_i32_0 : i32, i32, i32
  }
  func.func @transform_1(%arg0: i32, %arg1: i32) -> (i32, i32) {
    %c0_i32 = arith.constant 0 : i32
    %c0_i32_0 = arith.constant 0 : i32
    %c0_i32_1 = arith.constant 0 : i32
    return %c0_i32, %c0_i32_0 : i32, i32
  }
  func.func @transform_2(%arg0: i32, %arg1: i32) -> (i32, i32) {
    %c0_i32 = arith.constant 0 : i32
    %c0_i32_0 = arith.constant 0 : i32
    %c0_i32_1 = arith.constant 0 : i32
    return %c0_i32, %c0_i32_0 : i32, i32
  }
  func.func @transform_3(%arg0: i32, %arg1: i32) -> (i32, i32) {
    %c0_i32 = arith.constant 0 : i32
    %c0_i32_0 = arith.constant 0 : i32
    %c0_i32_1 = arith.constant 0 : i32
    return %c0_i32, %c0_i32_0 : i32, i32
  }
  func.func @transform_4(%arg0: i32, %arg1: i32) -> (i32, i32) {
    %c0_i32 = arith.constant 0 : i32
    %c0_i32_0 = arith.constant 0 : i32
    %c0_i32_1 = arith.constant 0 : i32
    return %c0_i32, %c0_i32_0 : i32, i32
  }
  func.func @transform_5(%arg0: i32, %arg1: i32) -> (i32, i32) {
    %c0_i32 = arith.constant 0 : i32
    %c0_i32_0 = arith.constant 0 : i32
    %c0_i32_1 = arith.constant 0 : i32
    return %c0_i32, %c0_i32_0 : i32, i32
  }
  func.func @transform_6(%arg0: i32, %arg1: i32) -> (i32, i32) {
    %c0_i32 = arith.constant 0 : i32
    %c0_i32_0 = arith.constant 0 : i32
    %c0_i32_1 = arith.constant 0 : i32
    return %c0_i32, %c0_i32_0 : i32, i32
  }
  func.func @transform_7(%arg0: i32, %arg1: i32) -> (i32, i32, i32) {
    %c0_i32 = arith.constant 0 : i32
    %c0_i32_0 = arith.constant 0 : i32
    return %arg0, %c0_i32, %arg1 : i32, i32, i32
  }
}

</mosaic_0001>

<llo_original>
// kernel: tpu_custom_call.1
$region0: #{tpu_custom_call.1}
  #allocation0 [shape = 'u32[]', space=smem, size = 0x4, offset = 0x4, fixed_abs, tag = 'smem constant byte address 0x4 - core index']
  #allocation1 [shape = 'u32[144,128]{1,0:T(1,128)}', space=vmem, size = 0x12000, scoped, tag = 'internal scratch']
  %s0 = inlined_call_operand.hbm [shape: f32[2,16,512], index: 0, kind: input, shape index: {}]
  %s1 = inlined_call_operand.vmem [shape: f32[2,16], index: 1, kind: input, shape index: {}]
  %s2 = inlined_call_operand.vmem [shape: f32[1,2], index: 2, kind: input, shape index: {}]
  %s3 = inlined_call_operand.vmem [shape: f32[2,16], index: 3, kind: input, shape index: {}]
  %s4 = inlined_call_operand.vmem [shape: f32[2,1], index: 4, kind: input, shape index: {}]
  %s5 = inlined_call_operand.vmem [shape: f32[16,16], index: 5, kind: input, shape index: {}]
  %s6 = inlined_call_operand.vmem [shape: f32[16,1], index: 6, kind: input, shape index: {}]
  %s7 = inlined_call_operand.hbm [shape: f32[2,16,512], index: 7, kind: output, shape index: {}]
  %s8 = sld [smem:[#allocation0]]
  $region65: #{tpu_custom_call.1} parent=0
    _
  %s10 = ssub.s32 1, %s8
  %s11 = scalar_select 0, %s10, %s8
  $region1: #{tpu_custom_call.1} parent=0
    #allocation2 [shape = 'u8[65536]{0}', space=vmem, size = 0x10000, scoped, tag = 'input window, operand 0']
    #allocation3 [shape = 's32[2]{0}', space=sflag, size = 0x8, scoped, tag = 'scoped memory for tpu_custom_call.1']
    #allocation4 [shape = 's32[2]{0}', space=sflag, size = 0x8, scoped, tag = 'scoped memory for tpu_custom_call.1']
    #allocation5 [shape = 'u8[65536]{0}', space=vmem, size = 0x10000, scoped, tag = 'output window, operand 0']
    %12 = vsyncpa [#allocation3], 0
    %s13 = scalar_lea.sflag [#allocation3], 1
    %14 = vsyncpa %s13, 0
    %15 = vsyncpa [#allocation4], 0
    %s16 = scalar_lea.sflag [#allocation4], 1
    %17 = vsyncpa %s16, 0
    loop: start=0, step=1, limit=4
    $region2: #{tpu_custom_call.1} parent=1 // loop_pre_header
      _
    $region3: #{tpu_custom_call.1} parent=1 // loop_header
      %s19 = sphi 0, %s23
      %p20 = scmp.ge.s32.totalorder %s19, 4
      %s26 = sphi 0, %s38
      %s27 = sphi 0, %s34
      %s28 = sphi 0, %s26
      %s29 = sphi 0, %s27
      %s30 = sphi 0, %s28
      %s31 = sphi 0, %s29
      %s41 = sphi 0, %s43
      %s44 = sphi 0, %s41
      %s45 = sphi 0, %s44
      %s61 = sphi 0, %s45
      %s65 = sphi 0, %s65
      %s67 = sphi 0, %s65
      %s68 = sphi 0, %s67
      %s82 = sphi 0, %s68
      %s86 = sphi 0, %s86
      %s88 = sphi 0, %s86
      %s89 = sphi 0, %s88
      %s103 = sphi 0, %s89
      %s107 = sphi 0, %s107
      %s109 = sphi 0, %s107
      %s110 = sphi 0, %s109
      %s124 = sphi 0, %s110
      %s128 = sphi 0, %s128
      %s130 = sphi 0, %s128
      %s131 = sphi 0, %s130
      %s145 = sphi 0, %s131
      %s149 = sphi 0, %s149
      %s151 = sphi 0, %s149
      %s152 = sphi 0, %s151
      %s166 = sphi 0, %s152
      %s170 = sphi 0, %s170
      %s172 = sphi 0, %s170
      %s173 = sphi 0, %s172
      %s187 = sphi 0, %s173
      %s195 = sphi 0, %s197
      %s198 = sphi 0, %s195
      %s199 = sphi 0, %s198
      %s215 = sphi 0, %s199
    $region4: #{tpu_custom_call.1} parent=1 // loop_header_branch
      %22 = sbr.rel (%p20) target = $region8
    $region5: #{tpu_custom_call.1} parent=1 // loop_body
      %s24 = ssub.s32 %s19, 1
      %s25 = ssub.s32 %s19, 2
      %s32 = sadd.s32 1, %s27
      %p33 = scmp.ge.s32.totalorder %s32, 1
      %s34 = scalar_select %p33, 0, %s32
      %s35 = sadd.s32 1, %s26
      %s36 = scalar_select %p33, %s35, %s26
      %p37 = scmp.ge.s32.totalorder %s36, 2
      %s38 = scalar_select %p37, 0, %s36
      %s39 = ssub.s32 %s26, %s38
      %p40 = scmp.eq.s32.totalorder %s39, 0
      %s42 = sadd.s32 %s41, 1
      %s43 = scalar_select %p40, %s41, %s42
      %p46 = pneg %p40
      %p47 = scmp.eq.s32.totalorder %s19, 1
      %p48 = por %p46, %p47
      %p49 = scmp.ne.s32.totalorder %s41, %s44
      %p50 = scmp.eq.s32.totalorder %s19, 0
      %p51 = por %p49, %p50
      %p52 = scmp.ne.s32.totalorder %s41, %s44
      %p53 = scmp.eq.s32.totalorder %s24, 1
      %p54 = por %p52, %p53
      %p55 = scmp.ne.s32.totalorder %s44, %s45
      %p56 = scmp.eq.s32.totalorder %s24, 0
      %p57 = por %p55, %p56
      %p58 = scmp.ne.s32.totalorder %s44, %s45
      %p59 = scmp.eq.s32.totalorder %s25, 1
      %p60 = por %p58, %p59
      %p62 = scmp.ne.s32.totalorder %s45, %s61
      %p63 = scmp.eq.s32.totalorder %s25, 0
      %p64 = por %p62, %p63
      %s66 = sadd.s32 %s65, 1
      %p69 = scmp.eq.s32.totalorder %s19, 1
      %p70 = scmp.ne.s32.totalorder %s65, %s67
      %p71 = scmp.eq.s32.totalorder %s19, 0
      %p72 = por %p70, %p71
      %p73 = scmp.ne.s32.totalorder %s65, %s67
      %p74 = scmp.eq.s32.totalorder %s24, 1
      %p75 = por %p73, %p74
      %p76 = scmp.ne.s32.totalorder %s67, %s68
      %p77 = scmp.eq.s32.totalorder %s24, 0
      %p78 = por %p76, %p77
      %p79 = scmp.ne.s32.totalorder %s67, %s68
      %p80 = scmp.eq.s32.totalorder %s25, 1
      %p81 = por %p79, %p80
      %p83 = scmp.ne.s32.totalorder %s68, %s82
      %p84 = scmp.eq.s32.totalorder %s25, 0
      %p85 = por %p83, %p84
      %s87 = sadd.s32 %s86, 1
      %p90 = scmp.eq.s32.totalorder %s19, 1
      %p91 = scmp.ne.s32.totalorder %s86, %s88
      %p92 = scmp.eq.s32.totalorder %s19, 0
      %p93 = por %p91, %p92
      %p94 = scmp.ne.s32.totalorder %s86, %s88
      %p95 = scmp.eq.s32.totalorder %s24, 1
      %p96 = por %p94, %p95
      %p97 = scmp.ne.s32.totalorder %s88, %s89
      %p98 = scmp.eq.s32.totalorder %s24, 0
      %p99 = por %p97, %p98
      %p100 = scmp.ne.s32.totalorder %s88, %s89
      %p101 = scmp.eq.s32.totalorder %s25, 1
      %p102 = por %p100, %p101
      %p104 = scmp.ne.s32.totalorder %s89, %s103
      %p105 = scmp.eq.s32.totalorder %s25, 0
      %p106 = por %p104, %p105
      %s108 = sadd.s32 %s107, 1
      %p111 = scmp.eq.s32.totalorder %s19, 1
      %p112 = scmp.ne.s32.totalorder %s107, %s109
      %p113 = scmp.eq.s32.totalorder %s19, 0
      %p114 = por %p112, %p113
      %p115 = scmp.ne.s32.totalorder %s107, %s109
      %p116 = scmp.eq.s32.totalorder %s24, 1
      %p117 = por %p115, %p116
      %p118 = scmp.ne.s32.totalorder %s109, %s110
      %p119 = scmp.eq.s32.totalorder %s24, 0
      %p120 = por %p118, %p119
      %p121 = scmp.ne.s32.totalorder %s109, %s110
      %p122 = scmp.eq.s32.totalorder %s25, 1
      %p123 = por %p121, %p122
      %p125 = scmp.ne.s32.totalorder %s110, %s124
      %p126 = scmp.eq.s32.totalorder %s25, 0
      %p127 = por %p125, %p126
      %s129 = sadd.s32 %s128, 1
      %p132 = scmp.eq.s32.totalorder %s19, 1
      %p133 = scmp.ne.s32.totalorder %s128, %s130
      %p134 = scmp.eq.s32.totalorder %s19, 0
      %p135 = por %p133, %p134
      %p136 = scmp.ne.s32.totalorder %s128, %s130
      %p137 = scmp.eq.s32.totalorder %s24, 1
      %p138 = por %p136, %p137
      %p139 = scmp.ne.s32.totalorder %s130, %s131
      %p140 = scmp.eq.s32.totalorder %s24, 0
      %p141 = por %p139, %p140
      %p142 = scmp.ne.s32.totalorder %s130, %s131
      %p143 = scmp.eq.s32.totalorder %s25, 1
      %p144 = por %p142, %p143
      %p146 = scmp.ne.s32.totalorder %s131, %s145
      %p147 = scmp.eq.s32.totalorder %s25, 0
      %p148 = por %p146, %p147
      %s150 = sadd.s32 %s149, 1
      %p153 = scmp.eq.s32.totalorder %s19, 1
      %p154 = scmp.ne.s32.totalorder %s149, %s151
      %p155 = scmp.eq.s32.totalorder %s19, 0
      %p156 = por %p154, %p155
      %p157 = scmp.ne.s32.totalorder %s149, %s151
      %p158 = scmp.eq.s32.totalorder %s24, 1
      %p159 = por %p157, %p158
      %p160 = scmp.ne.s32.totalorder %s151, %s152
      %p161 = scmp.eq.s32.totalorder %s24, 0
      %p162 = por %p160, %p161
      %p163 = scmp.ne.s32.totalorder %s151, %s152
      %p164 = scmp.eq.s32.totalorder %s25, 1
      %p165 = por %p163, %p164
      %p167 = scmp.ne.s32.totalorder %s152, %s166
      %p168 = scmp.eq.s32.totalorder %s25, 0
      %p169 = por %p167, %p168
      %s171 = sadd.s32 %s170, 1
      %p174 = scmp.eq.s32.totalorder %s19, 1
      %p175 = scmp.ne.s32.totalorder %s170, %s172
      %p176 = scmp.eq.s32.totalorder %s19, 0
      %p177 = por %p175, %p176
      %p178 = scmp.ne.s32.totalorder %s170, %s172
      %p179 = scmp.eq.s32.totalorder %s24, 1
      %p180 = por %p178, %p179
      %p181 = scmp.ne.s32.totalorder %s172, %s173
      %p182 = scmp.eq.s32.totalorder %s24, 0
      %p183 = por %p181, %p182
      %p184 = scmp.ne.s32.totalorder %s172, %s173
      %p185 = scmp.eq.s32.totalorder %s25, 1
      %p186 = por %p184, %p185
      %p188 = scmp.ne.s32.totalorder %s173, %s187
      %p189 = scmp.eq.s32.totalorder %s25, 0
      %p190 = por %p188, %p189
      %s191 = ssub.s32 %s26, %s38
      %s192 = ssub.s32 %s27, %s34
      %s193 = sor.u32 %s191, %s192
      %p194 = scmp.eq.s32.totalorder %s193, 0
      %s196 = sadd.s32 %s195, 1
      %s197 = scalar_select %p194, %s195, %s196
      %p200 = pneg %p194
      %p201 = scmp.eq.s32.totalorder %s19, 1
      %p202 = por %p200, %p201
      %p203 = scmp.ne.s32.totalorder %s195, %s198
      %p204 = scmp.eq.s32.totalorder %s19, 0
      %p205 = por %p203, %p204
      %p206 = scmp.ne.s32.totalorder %s195, %s198
      %p207 = scmp.eq.s32.totalorder %s24, 1
      %p208 = por %p206, %p207
      %p209 = scmp.ne.s32.totalorder %s198, %s199
      %p210 = scmp.eq.s32.totalorder %s24, 0
      %p211 = por %p209, %p210
      %p212 = scmp.ne.s32.totalorder %s198, %s199
      %p213 = scmp.eq.s32.totalorder %s25, 1
      %p214 = por %p212, %p213
      %p216 = scmp.ne.s32.totalorder %s199, %s215
      %p217 = scmp.eq.s32.totalorder %s25, 0
      %p218 = por %p216, %p217
      %p219 = scmp.le.s32.totalorder 1, %s19
      %p220 = scmp.lt.s32.totalorder %s19, 3
      %p221 = pnand %p219, %p220
      %p222 = pneg %p221
      // Predicated region
      $region9: #{tpu_custom_call.1} parent=5 // pred_check
        _
      $region10: #{tpu_custom_call.1} parent=5 // pred_check_branch
        %224 = sbr.rel (%p221) target = $region12
      $region11: #{tpu_custom_call.1} parent=5 // pred_region
        %s225 = ssub.s32 %s19, 1
        // Predicated region
        $region13: #{tpu_custom_call.1} parent=11 // pred_check
          %p226 = pneg %p78
        $region14: #{tpu_custom_call.1} parent=11 // pred_check_branch
          %228 = sbr.rel (%p226) target = $region16
        $region15: #{tpu_custom_call.1} parent=11 // pred_region
          _
        $region16: #{tpu_custom_call.1} parent=11 // pred_fallthru
          _
        // Predicated region
        $region17: #{tpu_custom_call.1} parent=11 // pred_check
          %p229 = pneg %p99
        $region18: #{tpu_custom_call.1} parent=11 // pred_check_branch
          %231 = sbr.rel (%p229) target = $region20
        $region19: #{tpu_custom_call.1} parent=11 // pred_region
          _
        $region20: #{tpu_custom_call.1} parent=11 // pred_fallthru
          _
        // Predicated region
        $region21: #{tpu_custom_call.1} parent=11 // pred_check
          %p232 = pneg %p120
        $region22: #{tpu_custom_call.1} parent=11 // pred_check_branch
          %234 = sbr.rel (%p232) target = $region24
        $region23: #{tpu_custom_call.1} parent=11 // pred_region
          _
        $region24: #{tpu_custom_call.1} parent=11 // pred_fallthru
          _
        // Predicated region
        $region25: #{tpu_custom_call.1} parent=11 // pred_check
          %p235 = pneg %p141
        $region26: #{tpu_custom_call.1} parent=11 // pred_check_branch
          %237 = sbr.rel (%p235) target = $region28
        $region27: #{tpu_custom_call.1} parent=11 // pred_region
          _
        $region28: #{tpu_custom_call.1} parent=11 // pred_fallthru
          _
        // Predicated region
        $region29: #{tpu_custom_call.1} parent=11 // pred_check
          %p238 = pneg %p162
        $region30: #{tpu_custom_call.1} parent=11 // pred_check_branch
          %240 = sbr.rel (%p238) target = $region32
        $region31: #{tpu_custom_call.1} parent=11 // pred_region
          _
        $region32: #{tpu_custom_call.1} parent=11 // pred_fallthru
          _
        // Predicated region
        $region33: #{tpu_custom_call.1} parent=11 // pred_check
          %p241 = pneg %p183
        $region34: #{tpu_custom_call.1} parent=11 // pred_check_branch
          %243 = sbr.rel (%p241) target = $region36
        $region35: #{tpu_custom_call.1} parent=11 // pred_region
          _
        $region36: #{tpu_custom_call.1} parent=11 // pred_fallthru
          _
      $region12: #{tpu_custom_call.1} parent=5 // pred_fallthru
        _
      %p244 = scmp.lt.s32.totalorder %s19, 2
      // Predicated region
      $region37: #{tpu_custom_call.1} parent=5 // pred_check
        %p245 = pneg %p244
      $region38: #{tpu_custom_call.1} parent=5 // pred_check_branch
        %247 = sbr.rel (%p245) target = $region40
      $region39: #{tpu_custom_call.1} parent=5 // pred_region
        // Predicated region
        $region41: #{tpu_custom_call.1} parent=39 // pred_check
          %p248 = pneg %p51
        $region42: #{tpu_custom_call.1} parent=39 // pred_check_branch
          %250 = sbr.rel (%p248) target = $region44
        $region43: #{tpu_custom_call.1} parent=39 // pred_region
          %s251 = sand.u32 %s41, 1
          %s252 = scalar_lea.sflag [#allocation3], %s251
          %s253 = sand.u32 %s41, 1
          %s254 = smul.addr %s253, 64
          %s255 = scalar_lea.vmem [#allocation2], %s254
          %s257 = ssub.s32 1024, 1024
          %258 = vsyncadd %s252, %s257
          %s259 = smul.addr %s26, 8
          %s260 = smul.addr %s259, 128
          %s261 = scalar_lea.hbm %s0, %s260
          %s262 = sshll.u32 %s255, 4
          %s263 = int_to_ptr.vmem [resolvable:$true] %s262
          %268 = dma.hbm_to_vmem [thread:$0]  %s261, 1024, %s263, %s252, 512, 512, 32
        $region44: #{tpu_custom_call.1} parent=39 // pred_fallthru
          _
      $region40: #{tpu_custom_call.1} parent=5 // pred_fallthru
        _
      %p269 = scmp.le.s32.totalorder 1, %s19
      %p270 = scmp.lt.s32.totalorder %s19, 3
      %p271 = pnand %p269, %p270
      %p272 = pneg %p271
      // Predicated region
      $region45: #{tpu_custom_call.1} parent=5 // pred_check
        _
      $region46: #{tpu_custom_call.1} parent=5 // pred_check_branch
        %274 = sbr.rel (%p271) target = $region48
      $region47: #{tpu_custom_call.1} parent=5 // pred_region
        %s275 = ssub.s32 %s19, 1
        %s276 = sand.u32 %s44, 1
        %s277 = scalar_lea.sflag [#allocation3], %s276
        %s278 = sand.u32 %s44, 1
        %s279 = smul.addr %s278, 64
        %s280 = scalar_lea.vmem [#allocation2], %s279
        // Predicated region
        $region49: #{tpu_custom_call.1} parent=47 // pred_check
          %p281 = pneg %p57
        $region50: #{tpu_custom_call.1} parent=47 // pred_check_branch
          %283 = sbr.rel (%p281) target = $region52
        $region51: #{tpu_custom_call.1} parent=47 // pred_region
          %284 = dma.done %s277, 1024
        $region52: #{tpu_custom_call.1} parent=47 // pred_fallthru
          _
        %s285 = sand.u32 %s44, 1
        %s286 = scalar_lea.sflag [#allocation3], %s285
        %s287 = sand.u32 %s44, 1
        %s288 = smul.addr %s287, 64
        %s289 = scalar_lea.vmem [#allocation2], %s288
        %p290 = pneg %p57
        %p291 = pneg %p54
        %p292 = pneg %p78
        %p293 = pneg %p75
        %p294 = pneg %p99
        %p295 = pneg %p96
        %p296 = pneg %p120
        %p297 = pneg %p117
        %p298 = pneg %p141
        %p299 = pneg %p138
        %p300 = pneg %p162
        %p301 = pneg %p159
        %p302 = pneg %p183
        %p303 = pneg %p180
        %p304 = pneg %p211
        %p305 = pneg %p208
        %s306 = sand.u32 %s198, 1
        %s307 = scalar_lea.sflag [#allocation4], %s306
        %s308 = sand.u32 %s198, 1
        %s309 = smul.addr %s308, 64
        %s310 = scalar_lea.vmem [#allocation5], %s309
        %s311 = smul.u32 4, %s29
        %s312 = smul.u32 %s29, 512
        %v313 = vld [vmem:[%s280] sm:$0xff]
        %v314 = vld [vmem:[%s280 + $0x8] sm:$0xff]
        %v315 = vld [vmem:[%s280 + $0x10] sm:$0xff]
        %v316 = vld [vmem:[%s280 + $0x18] sm:$0xff]
        %v317 = vld [vmem:[%s280 + $0x20] sm:$0xff]
        %v318 = vld [vmem:[%s280 + $0x28] sm:$0xff]
        %v319 = vld [vmem:[%s280 + $0x30] sm:$0xff]
        %v320 = vld [vmem:[%s280 + $0x38] sm:$0xff]
        %s321 = sshra.s32 %s312, 7
        %s322 = sand.u32 %s312, 127
        %s323 = smul.addr %s321, 8
        %s324 = scalar_lea.vmem %s280, %s323 [#allocation2]
        %v325 = vld [vmem:[%s324] sm:$0xff]
        %v326 = vld [vmem:[%s324 + $0x8] sm:$0xff]
        %v327 = vld [vmem:[%s324 + $0x10] sm:$0xff]
        %v328 = vld [vmem:[%s324 + $0x18] sm:$0xff]
        %v329 = vld [vmem:[%s324 + $0x20] sm:$0xff]
        %v330 = vld [vmem:[%s324 + $0x28] sm:$0xff]
        %v331 = vld [vmem:[%s324 + $0x30] sm:$0xff]
        %v332 = vld [vmem:[%s324 + $0x38] sm:$0xff]
        %v333 = vld [vmem:[%s3] sm:$0x3]
        %v334 = vld [vmem:[%s4] sm:$0x3]
        %336 = vset.pattern.permute.xlu0 0
        %337 = vperm.xlu0 %336, %v334
        %v338 = vpop.permute.xlu0 %337
        %vm340 = vcmask 130048
        %v342 = vsel %vm340, %v333, 0
        %344 = vmatprep.subr.mxu0 %v314
        %345 = vmatpush1.msra.mxu0 %v313
        %346 = vmatprep.subr.mxu0 %v318
        %347 = vmatpush1.msra.mxu0 %v317
        %348 = vmatprep.subr.mxu0 0.0
        %349 = vmatpush1.msra.mxu0 0.0
        %350 = vmatprep.subr.mxu0 0.0
        %351 = vmatpush1.msra.mxu0 0.0
        %352 = vmatprep.subr.mxu0 0.0
        %353 = vmatpush1.msra.mxu0 0.0
        %354 = vmatprep.subr.mxu0 0.0
        %355 = vmatpush1.msra.mxu0 0.0
        %356 = vmatprep.subr.mxu0 0.0
        %357 = vmatpush1.msra.mxu0 0.0
        %358 = vmatprep.subr.mxu0 0.0
        %359 = vmatpush1.msra.mxu0 0.0
        %360 = vmatprep.subr.mxu0 0.0
        %361 = vmatpush1.msra.mxu0 0.0
        %362 = vmatprep.subr.mxu0 0.0
        %363 = vmatpush1.msra.mxu0 0.0
        %364 = vmatprep.subr.mxu0 0.0
        %365 = vmatpush1.msra.mxu0 0.0
        %366 = vmatprep.subr.mxu0 0.0
        %367 = vmatpush1.msra.mxu0 0.0
        %368 = vmatprep.subr.mxu0 0.0
        %369 = vmatpush1.msra.mxu0 0.0
        %370 = vmatprep.subr.mxu0 0.0
        %371 = vmatpush1.msra.mxu0 0.0
        %372 = vmatprep.subr.mxu0 0.0
        %373 = vmatpush1.msra.mxu0 0.0
        %374 = vmatprep.subr.mxu0 0.0
        %375 = vmatpush1.msra.mxu0 0.0
        %376 = vmatprep.subr.mxu0 0.0
        %377 = vmatpush1.msra.mxu0 0.0
        %378 = vmatprep.subr.mxu0 0.0
        %379 = vmatpush1.msra.mxu0 0.0
        %380 = vmatprep.subr.mxu0 0.0
        %381 = vmatpush1.msra.mxu0 0.0
        %382 = vmatprep.subr.mxu0 0.0
        %383 = vmatpush1.msra.mxu0 0.0
        %384 = vmatprep.subr.mxu0 0.0
        %385 = vmatpush1.msra.mxu0 0.0
        %386 = vmatprep.subr.mxu0 0.0
        %387 = vmatpush1.msra.mxu0 0.0
        %388 = vmatprep.subr.mxu0 0.0
        %389 = vmatpush1.msra.mxu0 0.0
        %390 = vmatprep.subr.mxu0 0.0
        %391 = vmatpush1.msra.mxu0 0.0
        %392 = vmatprep.subr.mxu0 0.0
        %393 = vmatpush1.msra.mxu0 0.0
        %394 = vmatprep.subr.mxu0 0.0
        %395 = vmatpush1.msra.mxu0 0.0
        %396 = vmatprep.subr.mxu0 0.0
        %397 = vmatpush1.msra.mxu0 0.0
        %398 = vmatprep.subr.mxu0 0.0
        %399 = vmatpush1.msra.mxu0 0.0
        %400 = vmatprep.subr.mxu0 0.0
        %401 = vmatpush1.msra.mxu0 0.0
        %402 = vmatprep.subr.mxu0 0.0
        %403 = vmatpush1.msra.mxu0 0.0
        %404 = vmatprep.subr.mxu0 0.0
        %405 = vmatpush1.msra.mxu0 0.0
        %406 = vmatprep.subr.mxu0 0.0
        %407 = vmatpush1.msra.mxu0 0.0
        %408 = vmatprep.mubr.f32.mxu0 0.0
        %409 = vmatmul.mubr.f32.gmra.mrb[0].mxu0 %v342
        %v410 = vpop.f32.mrb[0].mxu0
        %v411 = vadd.f32 %v338, %v410
        %v412 = vpop.f32.mrb[0].mxu0
        %v413 = vadd.f32 %v338, %v412
        %414 = vdwg.mxu0
        %415 = vmatprep.subr.mxu0 %v316
        %416 = vmatpush1.msra.mxu0 %v315
        %417 = vmatprep.subr.mxu0 %v320
        %418 = vmatpush1.msra.mxu0 %v319
        %419 = vmatprep.subr.mxu0 0.0
        %420 = vmatpush1.msra.mxu0 0.0
        %421 = vmatprep.subr.mxu0 0.0
        %422 = vmatpush1.msra.mxu0 0.0
        %423 = vmatprep.subr.mxu0 0.0
        %424 = vmatpush1.msra.mxu0 0.0
        %425 = vmatprep.subr.mxu0 0.0
        %426 = vmatpush1.msra.mxu0 0.0
        %427 = vmatprep.subr.mxu0 0.0
        %428 = vmatpush1.msra.mxu0 0.0
        %429 = vmatprep.subr.mxu0 0.0
        %430 = vmatpush1.msra.mxu0 0.0
        %431 = vmatprep.subr.mxu0 0.0
        %432 = vmatpush1.msra.mxu0 0.0
        %433 = vmatprep.subr.mxu0 0.0
        %434 = vmatpush1.msra.mxu0 0.0
        %435 = vmatprep.subr.mxu0 0.0
        %436 = vmatpush1.msra.mxu0 0.0
        %437 = vmatprep.subr.mxu0 0.0
        %438 = vmatpush1.msra.mxu0 0.0
        %439 = vmatprep.subr.mxu0 0.0
        %440 = vmatpush1.msra.mxu0 0.0
        %441 = vmatprep.subr.mxu0 0.0
        %442 = vmatpush1.msra.mxu0 0.0
        %443 = vmatprep.subr.mxu0 0.0
        %444 = vmatpush1.msra.mxu0 0.0
        %445 = vmatprep.subr.mxu0 0.0
        %446 = vmatpush1.msra.mxu0 0.0
        %447 = vmatprep.subr.mxu0 0.0
        %448 = vmatpush1.msra.mxu0 0.0
        %449 = vmatprep.subr.mxu0 0.0
        %450 = vmatpush1.msra.mxu0 0.0
        %451 = vmatprep.subr.mxu0 0.0
        %452 = vmatpush1.msra.mxu0 0.0
        %453 = vmatprep.subr.mxu0 0.0
        %454 = vmatpush1.msra.mxu0 0.0
        %455 = vmatprep.subr.mxu0 0.0
        %456 = vmatpush1.msra.mxu0 0.0
        %457 = vmatprep.subr.mxu0 0.0
        %458 = vmatpush1.msra.mxu0 0.0
        %459 = vmatprep.subr.mxu0 0.0
        %460 = vmatpush1.msra.mxu0 0.0
        %461 = vmatprep.subr.mxu0 0.0
        %462 = vmatpush1.msra.mxu0 0.0
        %463 = vmatprep.subr.mxu0 0.0
        %464 = vmatpush1.msra.mxu0 0.0
        %465 = vmatprep.subr.mxu0 0.0
        %466 = vmatpush1.msra.mxu0 0.0
        %467 = vmatprep.subr.mxu0 0.0
        %468 = vmatpush1.msra.mxu0 0.0
        %469 = vmatprep.subr.mxu0 0.0
        %470 = vmatpush1.msra.mxu0 0.0
        %471 = vmatprep.subr.mxu0 0.0
        %472 = vmatpush1.msra.mxu0 0.0
        %473 = vmatprep.subr.mxu0 0.0
        %474 = vmatpush1.msra.mxu0 0.0
        %475 = vmatprep.subr.mxu0 0.0
        %476 = vmatpush1.msra.mxu0 0.0
        %477 = vmatprep.subr.mxu0 0.0
        %478 = vmatpush1.msra.mxu0 0.0
        %479 = vmatprep.mubr.f32.mxu0 0.0
        %480 = vmatmul.mubr.f32.gmra.mrb[0].mxu0 %v342
        %v481 = vpop.f32.mrb[0].mxu0
        %v482 = vadd.f32 %v338, %v481
        %v483 = vpop.f32.mrb[0].mxu0
        %v484 = vadd.f32 %v338, %v483
        %485 = vdwg.mxu0
        %v486 = vld [vmem:[%s5] sm:$0xff]
        %v487 = vld [vmem:[%s5 + $0x8] sm:$0xff]
        %v488 = vld [vmem:[%s6] sm:$0xff]
        %v489 = vld [vmem:[%s6 + $0x8] sm:$0xff]
        %491 = vset.pattern.permute.xlu0 0
        %492 = vperm.xlu0 %491, %v488
        %v493 = vpop.permute.xlu0 %492
        %496 = vset.pattern.permute.xlu0 0
        %497 = vperm.xlu0 %496, %v489
        %v498 = vpop.permute.xlu0 %497
        %v501 = vsel %vm340, %v486, 0
        %v504 = vsel %vm340, %v487, 0
        %506 = vmatprep.subr.mxu0 %v314
        %507 = vmatpush1.msra.mxu0 %v313
        %508 = vmatprep.subr.mxu0 %v318
        %509 = vmatpush1.msra.mxu0 %v317
        %510 = vmatprep.subr.mxu0 0.0
        %511 = vmatpush1.msra.mxu0 0.0
        %512 = vmatprep.subr.mxu0 0.0
        %513 = vmatpush1.msra.mxu0 0.0
        %514 = vmatprep.subr.mxu0 0.0
        %515 = vmatpush1.msra.mxu0 0.0
        %516 = vmatprep.subr.mxu0 0.0
        %517 = vmatpush1.msra.mxu0 0.0
        %518 = vmatprep.subr.mxu0 0.0
        %519 = vmatpush1.msra.mxu0 0.0
        %520 = vmatprep.subr.mxu0 0.0
        %521 = vmatpush1.msra.mxu0 0.0
        %522 = vmatprep.subr.mxu0 0.0
        %523 = vmatpush1.msra.mxu0 0.0
        %524 = vmatprep.subr.mxu0 0.0
        %525 = vmatpush1.msra.mxu0 0.0
        %526 = vmatprep.subr.mxu0 0.0
        %527 = vmatpush1.msra.mxu0 0.0
        %528 = vmatprep.subr.mxu0 0.0
        %529 = vmatpush1.msra.mxu0 0.0
        %530 = vmatprep.subr.mxu0 0.0
        %531 = vmatpush1.msra.mxu0 0.0
        %532 = vmatprep.subr.mxu0 0.0
        %533 = vmatpush1.msra.mxu0 0.0
        %534 = vmatprep.subr.mxu0 0.0
        %535 = vmatpush1.msra.mxu0 0.0
        %536 = vmatprep.subr.mxu0 0.0
        %537 = vmatpush1.msra.mxu0 0.0
        %538 = vmatprep.subr.mxu0 0.0
        %539 = vmatpush1.msra.mxu0 0.0
        %540 = vmatprep.subr.mxu0 0.0
        %541 = vmatpush1.msra.mxu0 0.0
        %542 = vmatprep.subr.mxu0 0.0
        %543 = vmatpush1.msra.mxu0 0.0
        %544 = vmatprep.subr.mxu0 0.0
        %545 = vmatpush1.msra.mxu0 0.0
        %546 = vmatprep.subr.mxu0 0.0
        %547 = vmatpush1.msra.mxu0 0.0
        %548 = vmatprep.subr.mxu0 0.0
        %549 = vmatpush1.msra.mxu0 0.0
        %550 = vmatprep.subr.mxu0 0.0
        %551 = vmatpush1.msra.mxu0 0.0
        %552 = vmatprep.subr.mxu0 0.0
        %553 = vmatpush1.msra.mxu0 0.0
        %554 = vmatprep.subr.mxu0 0.0
        %555 = vmatpush1.msra.mxu0 0.0
        %556 = vmatprep.subr.mxu0 0.0
        %557 = vmatpush1.msra.mxu0 0.0
        %558 = vmatprep.subr.mxu0 0.0
        %559 = vmatpush1.msra.mxu0 0.0
        %560 = vmatprep.subr.mxu0 0.0
        %561 = vmatpush1.msra.mxu0 0.0
        %562 = vmatprep.subr.mxu0 0.0
        %563 = vmatpush1.msra.mxu0 0.0
        %564 = vmatprep.subr.mxu0 0.0
        %565 = vmatpush1.msra.mxu0 0.0
        %566 = vmatprep.subr.mxu0 0.0
        %567 = vmatpush1.msra.mxu0 0.0
        %568 = vmatprep.subr.mxu0 0.0
        %569 = vmatpush1.msra.mxu0 0.0
        %570 = vmatprep.mubr.f32.mxu0 0.0
        %571 = vmatmul.mubr.f32.gmra.mrb[0].mxu0 %v501
        %v572 = vpop.f32.mrb[0].mxu0
        %v573 = vadd.f32 %v493, %v572
        %v574 = vpop.f32.mrb[0].mxu0
        %v575 = vadd.f32 %v493, %v574
        %576 = vmatprep.mubr.f32.mxu0 0.0
        %577 = vmatmul.mubr.f32.gmra.mrb[0].mxu0 %v504
        %v578 = vpop.f32.mrb[0].mxu0
        %v579 = vadd.f32 %v498, %v578
        %v580 = vpop.f32.mrb[0].mxu0
        %v581 = vadd.f32 %v498, %v580
        %582 = vdwg.mxu0
        %583 = vmatprep.subr.mxu0 %v316
        %584 = vmatpush1.msra.mxu0 %v315
        %585 = vmatprep.subr.mxu0 %v320
        %586 = vmatpush1.msra.mxu0 %v319
        %587 = vmatprep.subr.mxu0 0.0
        %588 = vmatpush1.msra.mxu0 0.0
        %589 = vmatprep.subr.mxu0 0.0
        %590 = vmatpush1.msra.mxu0 0.0
        %591 = vmatprep.subr.mxu0 0.0
        %592 = vmatpush1.msra.mxu0 0.0
        %593 = vmatprep.subr.mxu0 0.0
        %594 = vmatpush1.msra.mxu0 0.0
        %595 = vmatprep.subr.mxu0 0.0
        %596 = vmatpush1.msra.mxu0 0.0
        %597 = vmatprep.subr.mxu0 0.0
        %598 = vmatpush1.msra.mxu0 0.0
        %599 = vmatprep.subr.mxu0 0.0
        %600 = vmatpush1.msra.mxu0 0.0
        %601 = vmatprep.subr.mxu0 0.0
        %602 = vmatpush1.msra.mxu0 0.0
        %603 = vmatprep.subr.mxu0 0.0
        %604 = vmatpush1.msra.mxu0 0.0
        %605 = vmatprep.subr.mxu0 0.0
        %606 = vmatpush1.msra.mxu0 0.0
        %607 = vmatprep.subr.mxu0 0.0
        %608 = vmatpush1.msra.mxu0 0.0
        %609 = vmatprep.subr.mxu0 0.0
        %610 = vmatpush1.msra.mxu0 0.0
        %611 = vmatprep.subr.mxu0 0.0
        %612 = vmatpush1.msra.mxu0 0.0
        %613 = vmatprep.subr.mxu0 0.0
        %614 = vmatpush1.msra.mxu0 0.0
        %615 = vmatprep.subr.mxu0 0.0
        %616 = vmatpush1.msra.mxu0 0.0
        %617 = vmatprep.subr.mxu0 0.0
        %618 = vmatpush1.msra.mxu0 0.0
        %619 = vmatprep.subr.mxu0 0.0
        %620 = vmatpush1.msra.mxu0 0.0
        %621 = vmatprep.subr.mxu0 0.0
        %622 = vmatpush1.msra.mxu0 0.0
        %623 = vmatprep.subr.mxu0 0.0
        %624 = vmatpush1.msra.mxu0 0.0
        %625 = vmatprep.subr.mxu0 0.0
        %626 = vmatpush1.msra.mxu0 0.0
        %627 = vmatprep.subr.mxu0 0.0
        %628 = vmatpush1.msra.mxu0 0.0
        %629 = vmatprep.subr.mxu0 0.0
        %630 = vmatpush1.msra.mxu0 0.0
        %631 = vmatprep.subr.mxu0 0.0
        %632 = vmatpush1.msra.mxu0 0.0
        %633 = vmatprep.subr.mxu0 0.0
        %634 = vmatpush1.msra.mxu0 0.0
        %635 = vmatprep.subr.mxu0 0.0
        %636 = vmatpush1.msra.mxu0 0.0
        %637 = vmatprep.subr.mxu0 0.0
        %638 = vmatpush1.msra.mxu0 0.0
        %639 = vmatprep.subr.mxu0 0.0
        %640 = vmatpush1.msra.mxu0 0.0
        %641 = vmatprep.subr.mxu0 0.0
        %642 = vmatpush1.msra.mxu0 0.0
        %643 = vmatprep.subr.mxu0 0.0
        %644 = vmatpush1.msra.mxu0 0.0
        %645 = vmatprep.subr.mxu0 0.0
        %646 = vmatpush1.msra.mxu0 0.0
        %647 = vmatprep.mubr.f32.mxu0 0.0
        %648 = vmatmul.mubr.f32.gmra.mrb[0].mxu0 %v501
        %v649 = vpop.f32.mrb[0].mxu0
        %v650 = vadd.f32 %v493, %v649
        %v651 = vpop.f32.mrb[0].mxu0
        %v652 = vadd.f32 %v493, %v651
        %653 = vmatprep.mubr.f32.mxu0 0.0
        %654 = vmatmul.mubr.f32.gmra.mrb[0].mxu0 %v504
        %v655 = vpop.f32.mrb[0].mxu0
        %v656 = vadd.f32 %v498, %v655
        %v657 = vpop.f32.mrb[0].mxu0
        %v658 = vadd.f32 %v498, %v657
        %659 = vdwg.mxu0
        %v660 = vld [vmem:[%s1] sm:$0x3]
        %v661 = vld [vmem:[%s2] sm:$0x1]
        %v663 = vlaneseq
        %v664 = vshrl.u32 %v663, 7
        %v665 = vsub.s32 0, %v664
        %v666 = vrot.slane %v661, %v665
        %668 = vxpose.xlu0.b32.start [1/16] %v325, 128
        %669 = vxpose.xlu0.b32.cont [2/16] %v329, 128
        %670 = vxpose.xlu0.b32.cont [3/16] 0.0, 128
        %671 = vxpose.xlu0.b32.cont [4/16] 0.0, 128
        %672 = vxpose.xlu0.b32.cont [5/16] 0.0, 128
        %673 = vxpose.xlu0.b32.cont [6/16] 0.0, 128
        %674 = vxpose.xlu0.b32.cont [7/16] 0.0, 128
        %675 = vxpose.xlu0.b32.cont [8/16] 0.0, 128
        %676 = vxpose.xlu0.b32.cont [9/16] 0.0, 128
        %677 = vxpose.xlu0.b32.cont [10/16] 0.0, 128
        %678 = vxpose.xlu0.b32.cont [11/16] 0.0, 128
        %679 = vxpose.xlu0.b32.cont [12/16] 0.0, 128
        %680 = vxpose.xlu0.b32.cont [13/16] 0.0, 128
        %681 = vxpose.xlu0.b32.cont [14/16] 0.0, 128
        %682 = vxpose.xlu0.b32.cont [15/16] 0.0, 128
        %683 = vxpose.xlu0.b32.end [16/16] 0.0, 128
        %v684 = vpop.trf.xlu0
        %v685 = vpop.trf.xlu0
        %v686 = vpop.trf.xlu0
        %v687 = vpop.trf.xlu0
        %v688 = vpop.trf.xlu0
        %v689 = vpop.trf.xlu0
        %v690 = vpop.trf.xlu0
        %v691 = vpop.trf.xlu0
        %v692 = vpop.trf.xlu0
        %v693 = vpop.trf.xlu0
        %v694 = vpop.trf.xlu0
        %v695 = vpop.trf.xlu0
        %v696 = vpop.trf.xlu0
        %v697 = vpop.trf.xlu0
        %v698 = vpop.trf.xlu0
        %v699 = vpop.trf.xlu0
        %700 = vxpose.xlu0.b32.start [1/16] %v326, 128
        %701 = vxpose.xlu0.b32.cont [2/16] %v330, 128
        %702 = vxpose.xlu0.b32.cont [3/16] 0.0, 128
        %703 = vxpose.xlu0.b32.cont [4/16] 0.0, 128
        %704 = vxpose.xlu0.b32.cont [5/16] 0.0, 128
        %705 = vxpose.xlu0.b32.cont [6/16] 0.0, 128
        %706 = vxpose.xlu0.b32.cont [7/16] 0.0, 128
        %707 = vxpose.xlu0.b32.cont [8/16] 0.0, 128
        %708 = vxpose.xlu0.b32.cont [9/16] 0.0, 128
        %709 = vxpose.xlu0.b32.cont [10/16] 0.0, 128
        %710 = vxpose.xlu0.b32.cont [11/16] 0.0, 128
        %711 = vxpose.xlu0.b32.cont [12/16] 0.0, 128
        %712 = vxpose.xlu0.b32.cont [13/16] 0.0, 128
        %713 = vxpose.xlu0.b32.cont [14/16] 0.0, 128
        %714 = vxpose.xlu0.b32.cont [15/16] 0.0, 128
        %715 = vxpose.xlu0.b32.end [16/16] 0.0, 128
        %v716 = vpop.trf.xlu0
        %v717 = vpop.trf.xlu0
        %v718 = vpop.trf.xlu0
        %v719 = vpop.trf.xlu0
        %v720 = vpop.trf.xlu0
        %v721 = vpop.trf.xlu0
        %v722 = vpop.trf.xlu0
        %v723 = vpop.trf.xlu0
        %v724 = vpop.trf.xlu0
        %v725 = vpop.trf.xlu0
        %v726 = vpop.trf.xlu0
        %v727 = vpop.trf.xlu0
        %v728 = vpop.trf.xlu0
        %v729 = vpop.trf.xlu0
        %v730 = vpop.trf.xlu0
        %v731 = vpop.trf.xlu0
        %732 = vxpose.xlu0.b32.start [1/16] %v327, 128
        %733 = vxpose.xlu0.b32.cont [2/16] %v331, 128
        %734 = vxpose.xlu0.b32.cont [3/16] 0.0, 128
        %735 = vxpose.xlu0.b32.cont [4/16] 0.0, 128
        %736 = vxpose.xlu0.b32.cont [5/16] 0.0, 128
        %737 = vxpose.xlu0.b32.cont [6/16] 0.0, 128
        %738 = vxpose.xlu0.b32.cont [7/16] 0.0, 128
        %739 = vxpose.xlu0.b32.cont [8/16] 0.0, 128
        %740 = vxpose.xlu0.b32.cont [9/16] 0.0, 128
        %741 = vxpose.xlu0.b32.cont [10/16] 0.0, 128
        %742 = vxpose.xlu0.b32.cont [11/16] 0.0, 128
        %743 = vxpose.xlu0.b32.cont [12/16] 0.0, 128
        %744 = vxpose.xlu0.b32.cont [13/16] 0.0, 128
        %745 = vxpose.xlu0.b32.cont [14/16] 0.0, 128
        %746 = vxpose.xlu0.b32.cont [15/16] 0.0, 128
        %747 = vxpose.xlu0.b32.end [16/16] 0.0, 128
        %v748 = vpop.trf.xlu0
        %v749 = vpop.trf.xlu0
        %v750 = vpop.trf.xlu0
        %v751 = vpop.trf.xlu0
        %v752 = vpop.trf.xlu0
        %v753 = vpop.trf.xlu0
        %v754 = vpop.trf.xlu0
        %v755 = vpop.trf.xlu0
        %v756 = vpop.trf.xlu0
        %v757 = vpop.trf.xlu0
        %v758 = vpop.trf.xlu0
        %v759 = vpop.trf.xlu0
        %v760 = vpop.trf.xlu0
        %v761 = vpop.trf.xlu0
        %v762 = vpop.trf.xlu0
        %v763 = vpop.trf.xlu0
        %764 = vxpose.xlu0.b32.start [1/16] %v328, 128
        %765 = vxpose.xlu0.b32.cont [2/16] %v332, 128
        %766 = vxpose.xlu0.b32.cont [3/16] 0.0, 128
        %767 = vxpose.xlu0.b32.cont [4/16] 0.0, 128
        %768 = vxpose.xlu0.b32.cont [5/16] 0.0, 128
        %769 = vxpose.xlu0.b32.cont [6/16] 0.0, 128
        %770 = vxpose.xlu0.b32.cont [7/16] 0.0, 128
        %771 = vxpose.xlu0.b32.cont [8/16] 0.0, 128
        %772 = vxpose.xlu0.b32.cont [9/16] 0.0, 128
        %773 = vxpose.xlu0.b32.cont [10/16] 0.0, 128
        %774 = vxpose.xlu0.b32.cont [11/16] 0.0, 128
        %775 = vxpose.xlu0.b32.cont [12/16] 0.0, 128
        %776 = vxpose.xlu0.b32.cont [13/16] 0.0, 128
        %777 = vxpose.xlu0.b32.cont [14/16] 0.0, 128
        %778 = vxpose.xlu0.b32.cont [15/16] 0.0, 128
        %779 = vxpose.xlu0.b32.end [16/16] 0.0, 128
        %v780 = vpop.trf.xlu0
        %v781 = vpop.trf.xlu0
        %v782 = vpop.trf.xlu0
        %v783 = vpop.trf.xlu0
        %v784 = vpop.trf.xlu0
        %v785 = vpop.trf.xlu0
        %v786 = vpop.trf.xlu0
        %v787 = vpop.trf.xlu0
        %v788 = vpop.trf.xlu0
        %v789 = vpop.trf.xlu0
        %v790 = vpop.trf.xlu0
        %v791 = vpop.trf.xlu0
        %v792 = vpop.trf.xlu0
        %v793 = vpop.trf.xlu0
        %v794 = vpop.trf.xlu0
        %v795 = vpop.trf.xlu0
        %v797 = vsel %vm340, %v684, 0
        %v800 = vsel %vm340, %v685, 0
        %v803 = vsel %vm340, %v686, 0
        %v806 = vsel %vm340, %v687, 0
        %v809 = vsel %vm340, %v688, 0
        %v812 = vsel %vm340, %v689, 0
        %v815 = vsel %vm340, %v690, 0
        %v818 = vsel %vm340, %v691, 0
        %v821 = vsel %vm340, %v692, 0
        %v824 = vsel %vm340, %v693, 0
        %v827 = vsel %vm340, %v694, 0
        %v830 = vsel %vm340, %v695, 0
        %v833 = vsel %vm340, %v696, 0
        %v836 = vsel %vm340, %v697, 0
        %v839 = vsel %vm340, %v698, 0
        %v842 = vsel %vm340, %v699, 0
        %v845 = vsel %vm340, %v716, 0
        %v848 = vsel %vm340, %v717, 0
        %v851 = vsel %vm340, %v718, 0
        %v854 = vsel %vm340, %v719, 0
        %v857 = vsel %vm340, %v720, 0
        %v860 = vsel %vm340, %v721, 0
        %v863 = vsel %vm340, %v722, 0
        %v866 = vsel %vm340, %v723, 0
        %v869 = vsel %vm340, %v724, 0
        %v872 = vsel %vm340, %v725, 0
        %v875 = vsel %vm340, %v726, 0
        %v878 = vsel %vm340, %v727, 0
        %v881 = vsel %vm340, %v728, 0
        %v884 = vsel %vm340, %v729, 0
        %v887 = vsel %vm340, %v730, 0
        %v890 = vsel %vm340, %v731, 0
        %v893 = vsel %vm340, %v748, 0
        %v896 = vsel %vm340, %v749, 0
        %v899 = vsel %vm340, %v750, 0
        %v902 = vsel %vm340, %v751, 0
        %v905 = vsel %vm340, %v752, 0
        %v908 = vsel %vm340, %v753, 0
        %v911 = vsel %vm340, %v754, 0
        %v914 = vsel %vm340, %v755, 0
        %v917 = vsel %vm340, %v756, 0
        %v920 = vsel %vm340, %v757, 0
        %v923 = vsel %vm340, %v758, 0
        %v926 = vsel %vm340, %v759, 0
        %v929 = vsel %vm340, %v760, 0
        %v932 = vsel %vm340, %v761, 0
        %v935 = vsel %vm340, %v762, 0
        %v938 = vsel %vm340, %v763, 0
        %v941 = vsel %vm340, %v780, 0
        %v944 = vsel %vm340, %v781, 0
        %v947 = vsel %vm340, %v782, 0
        %v950 = vsel %vm340, %v783, 0
        %v953 = vsel %vm340, %v784, 0
        %v956 = vsel %vm340, %v785, 0
        %v959 = vsel %vm340, %v786, 0
        %v962 = vsel %vm340, %v787, 0
        %v965 = vsel %vm340, %v788, 0
        %v968 = vsel %vm340, %v789, 0
        %v971 = vsel %vm340, %v790, 0
        %v974 = vsel %vm340, %v791, 0
        %v977 = vsel %vm340, %v792, 0
        %v980 = vsel %vm340, %v793, 0
        %v983 = vsel %vm340, %v794, 0
        %v986 = vsel %vm340, %v795, 0
        %v989 = vsel %vm340, %v660, 0
        %991 = vmatprep.subr.mxu0 0.0
        %992 = vmatpush1.xpose.msra.mxu0 %v989
        %993 = vmatprep.subr.mxu0 0.0
        %994 = vmatpush1.xpose.msra.mxu0 0.0
        %995 = vmatprep.subr.mxu0 0.0
        %996 = vmatpush1.xpose.msra.mxu0 0.0
        %997 = vmatprep.subr.mxu0 0.0
        %998 = vmatpush1.xpose.msra.mxu0 0.0
        %999 = vmatprep.subr.mxu0 0.0
        %1000 = vmatpush1.xpose.msra.mxu0 0.0
        %1001 = vmatprep.subr.mxu0 0.0
        %1002 = vmatpush1.xpose.msra.mxu0 0.0
        %1003 = vmatprep.subr.mxu0 0.0
        %1004 = vmatpush1.xpose.msra.mxu0 0.0
        %1005 = vmatprep.subr.mxu0 0.0
        %1006 = vmatpush1.xpose.msra.mxu0 0.0
        %1007 = vmatprep.subr.mxu0 0.0
        %1008 = vmatpush1.xpose.msra.mxu0 0.0
        %1009 = vmatprep.subr.mxu0 0.0
        %1010 = vmatpush1.xpose.msra.mxu0 0.0
        %1011 = vmatprep.subr.mxu0 0.0
        %1012 = vmatpush1.xpose.msra.mxu0 0.0
        %1013 = vmatprep.subr.mxu0 0.0
        %1014 = vmatpush1.xpose.msra.mxu0 0.0
        %1015 = vmatprep.subr.mxu0 0.0
        %1016 = vmatpush1.xpose.msra.mxu0 0.0
        %1017 = vmatprep.subr.mxu0 0.0
        %1018 = vmatpush1.xpose.msra.mxu0 0.0
        %1019 = vmatprep.subr.mxu0 0.0
        %1020 = vmatpush1.xpose.msra.mxu0 0.0
        %1021 = vmatprep.subr.mxu0 0.0
        %1022 = vmatpush1.xpose.msra.mxu0 0.0
        %1023 = vmatprep.subr.mxu0 0.0
        %1024 = vmatpush1.xpose.msra.mxu0 0.0
        %1025 = vmatprep.subr.mxu0 0.0
        %1026 = vmatpush1.xpose.msra.mxu0 0.0
        %1027 = vmatprep.subr.mxu0 0.0
        %1028 = vmatpush1.xpose.msra.mxu0 0.0
        %1029 = vmatprep.subr.mxu0 0.0
        %1030 = vmatpush1.xpose.msra.mxu0 0.0
        %1031 = vmatprep.subr.mxu0 0.0
        %1032 = vmatpush1.xpose.msra.mxu0 0.0
        %1033 = vmatprep.subr.mxu0 0.0
        %1034 = vmatpush1.xpose.msra.mxu0 0.0
        %1035 = vmatprep.subr.mxu0 0.0
        %1036 = vmatpush1.xpose.msra.mxu0 0.0
        %1037 = vmatprep.subr.mxu0 0.0
        %1038 = vmatpush1.xpose.msra.mxu0 0.0
        %1039 = vmatprep.subr.mxu0 0.0
        %1040 = vmatpush1.xpose.msra.mxu0 0.0
        %1041 = vmatprep.subr.mxu0 0.0
        %1042 = vmatpush1.xpose.msra.mxu0 0.0
        %1043 = vmatprep.subr.mxu0 0.0
        %1044 = vmatpush1.xpose.msra.mxu0 0.0
        %1045 = vmatprep.subr.mxu0 0.0
        %1046 = vmatpush1.xpose.msra.mxu0 0.0
        %1047 = vmatprep.subr.mxu0 0.0
        %1048 = vmatpush1.xpose.msra.mxu0 0.0
        %1049 = vmatprep.subr.mxu0 0.0
        %1050 = vmatpush1.xpose.msra.mxu0 0.0
        %1051 = vmatprep.subr.mxu0 0.0
        %1052 = vmatpush1.xpose.msra.mxu0 0.0
        %1053 = vmatprep.subr.mxu0 0.0
        %1054 = vmatpush1.xpose.msra.mxu0 0.0
        %1055 = vmatprep.mubr.f32.mxu0 0.0
        %1056 = vmatmul.mubr.f32.gmra.mrb[0].mxu0 %v797
        %v1057 = vpop.f32.mrb[0].mxu0
        %v1058 = vadd.f32 %v666, %v1057
        %v1059 = vpop.f32.mrb[0].mxu0
        %1060 = vmatprep.mubr.f32.mxu0 0.0
        %1061 = vmatmul.mubr.f32.gmra.mrb[0].mxu0 %v800
        %v1062 = vpop.f32.mrb[0].mxu0
        %v1063 = vadd.f32 %v666, %v1062
        %v1064 = vpop.f32.mrb[0].mxu0
        %1065 = vmatprep.mubr.f32.mxu0 0.0
        %1066 = vmatmul.mubr.f32.gmra.mrb[0].mxu0 %v803
        %v1067 = vpop.f32.mrb[0].mxu0
        %v1068 = vadd.f32 %v666, %v1067
        %v1069 = vpop.f32.mrb[0].mxu0
        %1070 = vmatprep.mubr.f32.mxu0 0.0
        %1071 = vmatmul.mubr.f32.gmra.mrb[0].mxu0 %v806
        %v1072 = vpop.f32.mrb[0].mxu0
        %v1073 = vadd.f32 %v666, %v1072
        %v1074 = vpop.f32.mrb[0].mxu0
        %1075 = vmatprep.mubr.f32.mxu0 0.0
        %1076 = vmatmul.mubr.f32.gmra.mrb[0].mxu0 %v809
        %v1077 = vpop.f32.mrb[0].mxu0
        %v1078 = vadd.f32 %v666, %v1077
        %v1079 = vpop.f32.mrb[0].mxu0
        %1080 = vmatprep.mubr.f32.mxu0 0.0
        %1081 = vmatmul.mubr.f32.gmra.mrb[0].mxu0 %v812
        %v1082 = vpop.f32.mrb[0].mxu0
        %v1083 = vadd.f32 %v666, %v1082
        %v1084 = vpop.f32.mrb[0].mxu0
        %1085 = vmatprep.mubr.f32.mxu0 0.0
        %1086 = vmatmul.mubr.f32.gmra.mrb[0].mxu0 %v815
        %v1087 = vpop.f32.mrb[0].mxu0
        %v1088 = vadd.f32 %v666, %v1087
        %v1089 = vpop.f32.mrb[0].mxu0
        %1090 = vmatprep.mubr.f32.mxu0 0.0
        %1091 = vmatmul.mubr.f32.gmra.mrb[0].mxu0 %v818
        %v1092 = vpop.f32.mrb[0].mxu0
        %v1093 = vadd.f32 %v666, %v1092
        %v1094 = vpop.f32.mrb[0].mxu0
        %1095 = vmatprep.mubr.f32.mxu0 0.0
        %1096 = vmatmul.mubr.f32.gmra.mrb[0].mxu0 %v821
        %v1097 = vpop.f32.mrb[0].mxu0
        %v1098 = vadd.f32 %v666, %v1097
        %v1099 = vpop.f32.mrb[0].mxu0
        %1100 = vmatprep.mubr.f32.mxu0 0.0
        %1101 = vmatmul.mubr.f32.gmra.mrb[0].mxu0 %v824
        %v1102 = vpop.f32.mrb[0].mxu0
        %v1103 = vadd.f32 %v666, %v1102
        %v1104 = vpop.f32.mrb[0].mxu0
        %1105 = vmatprep.mubr.f32.mxu0 0.0
        %1106 = vmatmul.mubr.f32.gmra.mrb[0].mxu0 %v827
        %v1107 = vpop.f32.mrb[0].mxu0
        %v1108 = vadd.f32 %v666, %v1107
        %v1109 = vpop.f32.mrb[0].mxu0
        %1110 = vmatprep.mubr.f32.mxu0 0.0
        %1111 = vmatmul.mubr.f32.gmra.mrb[0].mxu0 %v830
        %v1112 = vpop.f32.mrb[0].mxu0
        %v1113 = vadd.f32 %v666, %v1112
        %v1114 = vpop.f32.mrb[0].mxu0
        %1115 = vmatprep.mubr.f32.mxu0 0.0
        %1116 = vmatmul.mubr.f32.gmra.mrb[0].mxu0 %v833
        %v1117 = vpop.f32.mrb[0].mxu0
        %v1118 = vadd.f32 %v666, %v1117
        %v1119 = vpop.f32.mrb[0].mxu0
        %1120 = vmatprep.mubr.f32.mxu0 0.0
        %1121 = vmatmul.mubr.f32.gmra.mrb[0].mxu0 %v836
        %v1122 = vpop.f32.mrb[0].mxu0
        %v1123 = vadd.f32 %v666, %v1122
        %v1124 = vpop.f32.mrb[0].mxu0
        %1125 = vmatprep.mubr.f32.mxu0 0.0
        %1126 = vmatmul.mubr.f32.gmra.mrb[0].mxu0 %v839
        %v1127 = vpop.f32.mrb[0].mxu0
        %v1128 = vadd.f32 %v666, %v1127
        %v1129 = vpop.f32.mrb[0].mxu0
        %1130 = vmatprep.mubr.f32.mxu0 0.0
        %1131 = vmatmul.mubr.f32.gmra.mrb[0].mxu0 %v842
        %v1132 = vpop.f32.mrb[0].mxu0
        %v1133 = vadd.f32 %v666, %v1132
        %v1134 = vpop.f32.mrb[0].mxu0
        %1135 = vmatprep.mubr.f32.mxu0 0.0
        %1136 = vmatmul.mubr.f32.gmra.mrb[0].mxu0 %v845
        %v1137 = vpop.f32.mrb[0].mxu0
        %v1138 = vadd.f32 %v666, %v1137
        %v1139 = vpop.f32.mrb[0].mxu0
        %1140 = vmatprep.mubr.f32.mxu0 0.0
        %1141 = vmatmul.mubr.f32.gmra.mrb[0].mxu0 %v848
        %v1142 = vpop.f32.mrb[0].mxu0
        %v1143 = vadd.f32 %v666, %v1142
        %v1144 = vpop.f32.mrb[0].mxu0
        %1145 = vmatprep.mubr.f32.mxu0 0.0
        %1146 = vmatmul.mubr.f32.gmra.mrb[0].mxu0 %v851
        %v1147 = vpop.f32.mrb[0].mxu0
        %v1148 = vadd.f32 %v666, %v1147
        %v1149 = vpop.f32.mrb[0].mxu0
        %1150 = vmatprep.mubr.f32.mxu0 0.0
        %1151 = vmatmul.mubr.f32.gmra.mrb[0].mxu0 %v854
        %v1152 = vpop.f32.mrb[0].mxu0
        %v1153 = vadd.f32 %v666, %v1152
        %v1154 = vpop.f32.mrb[0].mxu0
        %1155 = vmatprep.mubr.f32.mxu0 0.0
        %1156 = vmatmul.mubr.f32.gmra.mrb[0].mxu0 %v857
        %v1157 = vpop.f32.mrb[0].mxu0
        %v1158 = vadd.f32 %v666, %v1157
        %v1159 = vpop.f32.mrb[0].mxu0
        %1160 = vmatprep.mubr.f32.mxu0 0.0
        %1161 = vmatmul.mubr.f32.gmra.mrb[0].mxu0 %v860
        %v1162 = vpop.f32.mrb[0].mxu0
        %v1163 = vadd.f32 %v666, %v1162
        %v1164 = vpop.f32.mrb[0].mxu0
        %1165 = vmatprep.mubr.f32.mxu0 0.0
        %1166 = vmatmul.mubr.f32.gmra.mrb[0].mxu0 %v863
        %v1167 = vpop.f32.mrb[0].mxu0
        %v1168 = vadd.f32 %v666, %v1167
        %v1169 = vpop.f32.mrb[0].mxu0
        %1170 = vmatprep.mubr.f32.mxu0 0.0
        %1171 = vmatmul.mubr.f32.gmra.mrb[0].mxu0 %v866
        %v1172 = vpop.f32.mrb[0].mxu0
        %v1173 = vadd.f32 %v666, %v1172
        %v1174 = vpop.f32.mrb[0].mxu0
        %1175 = vmatprep.mubr.f32.mxu0 0.0
        %1176 = vmatmul.mubr.f32.gmra.mrb[0].mxu0 %v869
        %v1177 = vpop.f32.mrb[0].mxu0
        %v1178 = vadd.f32 %v666, %v1177
        %v1179 = vpop.f32.mrb[0].mxu0
        %1180 = vmatprep.mubr.f32.mxu0 0.0
        %1181 = vmatmul.mubr.f32.gmra.mrb[0].mxu0 %v872
        %v1182 = vpop.f32.mrb[0].mxu0
        %v1183 = vadd.f32 %v666, %v1182
        %v1184 = vpop.f32.mrb[0].mxu0
        %1185 = vmatprep.mubr.f32.mxu0 0.0
        %1186 = vmatmul.mubr.f32.gmra.mrb[0].mxu0 %v875
        %v1187 = vpop.f32.mrb[0].mxu0
        %v1188 = vadd.f32 %v666, %v1187
        %v1189 = vpop.f32.mrb[0].mxu0
        %1190 = vmatprep.mubr.f32.mxu0 0.0
        %1191 = vmatmul.mubr.f32.gmra.mrb[0].mxu0 %v878
        %v1192 = vpop.f32.mrb[0].mxu0
        %v1193 = vadd.f32 %v666, %v1192
        %v1194 = vpop.f32.mrb[0].mxu0
        %1195 = vmatprep.mubr.f32.mxu0 0.0
        %1196 = vmatmul.mubr.f32.gmra.mrb[0].mxu0 %v881
        %v1197 = vpop.f32.mrb[0].mxu0
        %v1198 = vadd.f32 %v666, %v1197
        %v1199 = vpop.f32.mrb[0].mxu0
        %1200 = vmatprep.mubr.f32.mxu0 0.0
        %1201 = vmatmul.mubr.f32.gmra.mrb[0].mxu0 %v884
        %v1202 = vpop.f32.mrb[0].mxu0
        %v1203 = vadd.f32 %v666, %v1202
        %v1204 = vpop.f32.mrb[0].mxu0
        %1205 = vmatprep.mubr.f32.mxu0 0.0
        %1206 = vmatmul.mubr.f32.gmra.mrb[0].mxu0 %v887
        %v1207 = vpop.f32.mrb[0].mxu0
        %v1208 = vadd.f32 %v666, %v1207
        %v1209 = vpop.f32.mrb[0].mxu0
        %1210 = vmatprep.mubr.f32.mxu0 0.0
        %1211 = vmatmul.mubr.f32.gmra.mrb[0].mxu0 %v890
        %v1212 = vpop.f32.mrb[0].mxu0
        %v1213 = vadd.f32 %v666, %v1212
        %v1214 = vpop.f32.mrb[0].mxu0
        %1215 = vmatprep.mubr.f32.mxu0 0.0
        %1216 = vmatmul.mubr.f32.gmra.mrb[0].mxu0 %v893
        %v1217 = vpop.f32.mrb[0].mxu0
        %v1218 = vadd.f32 %v666, %v1217
        %v1219 = vpop.f32.mrb[0].mxu0
        %1220 = vmatprep.mubr.f32.mxu0 0.0
        %1221 = vmatmul.mubr.f32.gmra.mrb[0].mxu0 %v896
        %v1222 = vpop.f32.mrb[0].mxu0
        %v1223 = vadd.f32 %v666, %v1222
        %v1224 = vpop.f32.mrb[0].mxu0
        %1225 = vmatprep.mubr.f32.mxu0 0.0
        %1226 = vmatmul.mubr.f32.gmra.mrb[0].mxu0 %v899
        %v1227 = vpop.f32.mrb[0].mxu0
        %v1228 = vadd.f32 %v666, %v1227
        %v1229 = vpop.f32.mrb[0].mxu0
        %1230 = vmatprep.mubr.f32.mxu0 0.0
        %1231 = vmatmul.mubr.f32.gmra.mrb[0].mxu0 %v902
        %v1232 = vpop.f32.mrb[0].mxu0
        %v1233 = vadd.f32 %v666, %v1232
        %v1234 = vpop.f32.mrb[0].mxu0
        %1235 = vmatprep.mubr.f32.mxu0 0.0
        %1236 = vmatmul.mubr.f32.gmra.mrb[0].mxu0 %v905
        %v1237 = vpop.f32.mrb[0].mxu0
        %v1238 = vadd.f32 %v666, %v1237
        %v1239 = vpop.f32.mrb[0].mxu0
        %1240 = vmatprep.mubr.f32.mxu0 0.0
        %1241 = vmatmul.mubr.f32.gmra.mrb[0].mxu0 %v908
        %v1242 = vpop.f32.mrb[0].mxu0
        %v1243 = vadd.f32 %v666, %v1242
        %v1244 = vpop.f32.mrb[0].mxu0
        %1245 = vmatprep.mubr.f32.mxu0 0.0
        %1246 = vmatmul.mubr.f32.gmra.mrb[0].mxu0 %v911
        %v1247 = vpop.f32.mrb[0].mxu0
        %v1248 = vadd.f32 %v666, %v1247
        %v1249 = vpop.f32.mrb[0].mxu0
        %1250 = vmatprep.mubr.f32.mxu0 0.0
        %1251 = vmatmul.mubr.f32.gmra.mrb[0].mxu0 %v914
        %v1252 = vpop.f32.mrb[0].mxu0
        %v1253 = vadd.f32 %v666, %v1252
        %v1254 = vpop.f32.mrb[0].mxu0
        %1255 = vmatprep.mubr.f32.mxu0 0.0
        %1256 = vmatmul.mubr.f32.gmra.mrb[0].mxu0 %v917
        %v1257 = vpop.f32.mrb[0].mxu0
        %v1258 = vadd.f32 %v666, %v1257
        %v1259 = vpop.f32.mrb[0].mxu0
        %1260 = vmatprep.mubr.f32.mxu0 0.0
        %1261 = vmatmul.mubr.f32.gmra.mrb[0].mxu0 %v920
        %v1262 = vpop.f32.mrb[0].mxu0
        %v1263 = vadd.f32 %v666, %v1262
        %v1264 = vpop.f32.mrb[0].mxu0
        %1265 = vmatprep.mubr.f32.mxu0 0.0
        %1266 = vmatmul.mubr.f32.gmra.mrb[0].mxu0 %v923
        %v1267 = vpop.f32.mrb[0].mxu0
        %v1268 = vadd.f32 %v666, %v1267
        %v1269 = vpop.f32.mrb[0].mxu0
        %1270 = vmatprep.mubr.f32.mxu0 0.0
        %1271 = vmatmul.mubr.f32.gmra.mrb[0].mxu0 %v926
        %v1272 = vpop.f32.mrb[0].mxu0
        %v1273 = vadd.f32 %v666, %v1272
        %v1274 = vpop.f32.mrb[0].mxu0
        %1275 = vmatprep.mubr.f32.mxu0 0.0
        %1276 = vmatmul.mubr.f32.gmra.mrb[0].mxu0 %v929
        %v1277 = vpop.f32.mrb[0].mxu0
        %v1278 = vadd.f32 %v666, %v1277
        %v1279 = vpop.f32.mrb[0].mxu0
        %1280 = vmatprep.mubr.f32.mxu0 0.0
        %1281 = vmatmul.mubr.f32.gmra.mrb[0].mxu0 %v932
        %v1282 = vpop.f32.mrb[0].mxu0
        %v1283 = vadd.f32 %v666, %v1282
        %v1284 = vpop.f32.mrb[0].mxu0
        %1285 = vmatprep.mubr.f32.mxu0 0.0
        %1286 = vmatmul.mubr.f32.gmra.mrb[0].mxu0 %v935
        %v1287 = vpop.f32.mrb[0].mxu0
        %v1288 = vadd.f32 %v666, %v1287
        %v1289 = vpop.f32.mrb[0].mxu0
        %1290 = vmatprep.mubr.f32.mxu0 0.0
        %1291 = vmatmul.mubr.f32.gmra.mrb[0].mxu0 %v938
        %v1292 = vpop.f32.mrb[0].mxu0
        %v1293 = vadd.f32 %v666, %v1292
        %v1294 = vpop.f32.mrb[0].mxu0
        %1295 = vmatprep.mubr.f32.mxu0 0.0
        %1296 = vmatmul.mubr.f32.gmra.mrb[0].mxu0 %v941
        %v1297 = vpop.f32.mrb[0].mxu0
        %v1298 = vadd.f32 %v666, %v1297
        %v1299 = vpop.f32.mrb[0].mxu0
        %1300 = vmatprep.mubr.f32.mxu0 0.0
        %1301 = vmatmul.mubr.f32.gmra.mrb[0].mxu0 %v944
        %v1302 = vpop.f32.mrb[0].mxu0
        %v1303 = vadd.f32 %v666, %v1302
        %v1304 = vpop.f32.mrb[0].mxu0
        %1305 = vmatprep.mubr.f32.mxu0 0.0
        %1306 = vmatmul.mubr.f32.gmra.mrb[0].mxu0 %v947
        %v1307 = vpop.f32.mrb[0].mxu0
        %v1308 = vadd.f32 %v666, %v1307
        %v1309 = vpop.f32.mrb[0].mxu0
        %1310 = vmatprep.mubr.f32.mxu0 0.0
        %1311 = vmatmul.mubr.f32.gmra.mrb[0].mxu0 %v950
        %v1312 = vpop.f32.mrb[0].mxu0
        %v1313 = vadd.f32 %v666, %v1312
        %v1314 = vpop.f32.mrb[0].mxu0
        %1315 = vmatprep.mubr.f32.mxu0 0.0
        %1316 = vmatmul.mubr.f32.gmra.mrb[0].mxu0 %v953
        %v1317 = vpop.f32.mrb[0].mxu0
        %v1318 = vadd.f32 %v666, %v1317
        %v1319 = vpop.f32.mrb[0].mxu0
        %1320 = vmatprep.mubr.f32.mxu0 0.0
        %1321 = vmatmul.mubr.f32.gmra.mrb[0].mxu0 %v956
        %v1322 = vpop.f32.mrb[0].mxu0
        %v1323 = vadd.f32 %v666, %v1322
        %v1324 = vpop.f32.mrb[0].mxu0
        %1325 = vmatprep.mubr.f32.mxu0 0.0
        %1326 = vmatmul.mubr.f32.gmra.mrb[0].mxu0 %v959
        %v1327 = vpop.f32.mrb[0].mxu0
        %v1328 = vadd.f32 %v666, %v1327
        %v1329 = vpop.f32.mrb[0].mxu0
        %1330 = vmatprep.mubr.f32.mxu0 0.0
        %1331 = vmatmul.mubr.f32.gmra.mrb[0].mxu0 %v962
        %v1332 = vpop.f32.mrb[0].mxu0
        %v1333 = vadd.f32 %v666, %v1332
        %v1334 = vpop.f32.mrb[0].mxu0
        %1335 = vmatprep.mubr.f32.mxu0 0.0
        %1336 = vmatmul.mubr.f32.gmra.mrb[0].mxu0 %v965
        %v1337 = vpop.f32.mrb[0].mxu0
        %v1338 = vadd.f32 %v666, %v1337
        %v1339 = vpop.f32.mrb[0].mxu0
        %1340 = vmatprep.mubr.f32.mxu0 0.0
        %1341 = vmatmul.mubr.f32.gmra.mrb[0].mxu0 %v968
        %v1342 = vpop.f32.mrb[0].mxu0
        %v1343 = vadd.f32 %v666, %v1342
        %v1344 = vpop.f32.mrb[0].mxu0
        %1345 = vmatprep.mubr.f32.mxu0 0.0
        %1346 = vmatmul.mubr.f32.gmra.mrb[0].mxu0 %v971
        %v1347 = vpop.f32.mrb[0].mxu0
        %v1348 = vadd.f32 %v666, %v1347
        %v1349 = vpop.f32.mrb[0].mxu0
        %1350 = vmatprep.mubr.f32.mxu0 0.0
        %1351 = vmatmul.mubr.f32.gmra.mrb[0].mxu0 %v974
        %v1352 = vpop.f32.mrb[0].mxu0
        %v1353 = vadd.f32 %v666, %v1352
        %v1354 = vpop.f32.mrb[0].mxu0
        %1355 = vmatprep.mubr.f32.mxu0 0.0
        %1356 = vmatmul.mubr.f32.gmra.mrb[0].mxu0 %v977
        %v1357 = vpop.f32.mrb[0].mxu0
        %v1358 = vadd.f32 %v666, %v1357
        %v1359 = vpop.f32.mrb[0].mxu0
        %1360 = vmatprep.mubr.f32.mxu0 0.0
        %1361 = vmatmul.mubr.f32.gmra.mrb[0].mxu0 %v980
        %v1362 = vpop.f32.mrb[0].mxu0
        %v1363 = vadd.f32 %v666, %v1362
        %v1364 = vpop.f32.mrb[0].mxu0
        %1365 = vmatprep.mubr.f32.mxu0 0.0
        %1366 = vmatmul.mubr.f32.gmra.mrb[0].mxu0 %v983
        %v1367 = vpop.f32.mrb[0].mxu0
        %v1368 = vadd.f32 %v666, %v1367
        %v1369 = vpop.f32.mrb[0].mxu0
        %1370 = vmatprep.mubr.f32.mxu0 0.0
        %1371 = vmatmul.mubr.f32.gmra.mrb[0].mxu0 %v986
        %v1372 = vpop.f32.mrb[0].mxu0
        %v1373 = vadd.f32 %v666, %v1372
        %v1374 = vpop.f32.mrb[0].mxu0
        %1375 = vdwg.mxu0
        %1377 = vset.pattern.permute.xlu0 0
        %1378 = vperm.xlu0 %1377, %v1058
        %v1379 = vpop.permute.xlu0 %1378
        %1382 = vset.pattern.permute.xlu0 0
        %1383 = vperm.xlu0 %1382, %v1063
        %v1384 = vpop.permute.xlu0 %1383
        %1387 = vset.pattern.permute.xlu0 0
        %1388 = vperm.xlu0 %1387, %v1068
        %v1389 = vpop.permute.xlu0 %1388
        %1392 = vset.pattern.permute.xlu0 0
        %1393 = vperm.xlu0 %1392, %v1073
        %v1394 = vpop.permute.xlu0 %1393
        %1397 = vset.pattern.permute.xlu0 0
        %1398 = vperm.xlu0 %1397, %v1078
        %v1399 = vpop.permute.xlu0 %1398
        %1402 = vset.pattern.permute.xlu0 0
        %1403 = vperm.xlu0 %1402, %v1083
        %v1404 = vpop.permute.xlu0 %1403
        %1407 = vset.pattern.permute.xlu0 0
        %1408 = vperm.xlu0 %1407, %v1088
        %v1409 = vpop.permute.xlu0 %1408
        %1412 = vset.pattern.permute.xlu0 0
        %1413 = vperm.xlu0 %1412, %v1093
        %v1414 = vpop.permute.xlu0 %1413
        %1417 = vset.pattern.permute.xlu0 0
        %1418 = vperm.xlu0 %1417, %v1098
        %v1419 = vpop.permute.xlu0 %1418
        %1422 = vset.pattern.permute.xlu0 0
        %1423 = vperm.xlu0 %1422, %v1103
        %v1424 = vpop.permute.xlu0 %1423
        %1427 = vset.pattern.permute.xlu0 0
        %1428 = vperm.xlu0 %1427, %v1108
        %v1429 = vpop.permute.xlu0 %1428
        %1432 = vset.pattern.permute.xlu0 0
        %1433 = vperm.xlu0 %1432, %v1113
        %v1434 = vpop.permute.xlu0 %1433
        %1437 = vset.pattern.permute.xlu0 0
        %1438 = vperm.xlu0 %1437, %v1118
        %v1439 = vpop.permute.xlu0 %1438
        %1442 = vset.pattern.permute.xlu0 0
        %1443 = vperm.xlu0 %1442, %v1123
        %v1444 = vpop.permute.xlu0 %1443
        %1447 = vset.pattern.permute.xlu0 0
        %1448 = vperm.xlu0 %1447, %v1128
        %v1449 = vpop.permute.xlu0 %1448
        %1452 = vset.pattern.permute.xlu0 0
        %1453 = vperm.xlu0 %1452, %v1133
        %v1454 = vpop.permute.xlu0 %1453
        %1457 = vset.pattern.permute.xlu0 0
        %1458 = vperm.xlu0 %1457, %v1138
        %v1459 = vpop.permute.xlu0 %1458
        %1462 = vset.pattern.permute.xlu0 0
        %1463 = vperm.xlu0 %1462, %v1143
        %v1464 = vpop.permute.xlu0 %1463
        %1467 = vset.pattern.permute.xlu0 0
        %1468 = vperm.xlu0 %1467, %v1148
        %v1469 = vpop.permute.xlu0 %1468
        %1472 = vset.pattern.permute.xlu0 0
        %1473 = vperm.xlu0 %1472, %v1153
        %v1474 = vpop.permute.xlu0 %1473
        %1477 = vset.pattern.permute.xlu0 0
        %1478 = vperm.xlu0 %1477, %v1158
        %v1479 = vpop.permute.xlu0 %1478
        %1482 = vset.pattern.permute.xlu0 0
        %1483 = vperm.xlu0 %1482, %v1163
        %v1484 = vpop.permute.xlu0 %1483
        %1487 = vset.pattern.permute.xlu0 0
        %1488 = vperm.xlu0 %1487, %v1168
        %v1489 = vpop.permute.xlu0 %1488
        %1492 = vset.pattern.permute.xlu0 0
        %1493 = vperm.xlu0 %1492, %v1173
        %v1494 = vpop.permute.xlu0 %1493
        %1497 = vset.pattern.permute.xlu0 0
        %1498 = vperm.xlu0 %1497, %v1178
        %v1499 = vpop.permute.xlu0 %1498
        %1502 = vset.pattern.permute.xlu0 0
        %1503 = vperm.xlu0 %1502, %v1183
        %v1504 = vpop.permute.xlu0 %1503
        %1507 = vset.pattern.permute.xlu0 0
        %1508 = vperm.xlu0 %1507, %v1188
        %v1509 = vpop.permute.xlu0 %1508
        %1512 = vset.pattern.permute.xlu0 0
        %1513 = vperm.xlu0 %1512, %v1193
        %v1514 = vpop.permute.xlu0 %1513
        %1517 = vset.pattern.permute.xlu0 0
        %1518 = vperm.xlu0 %1517, %v1198
        %v1519 = vpop.permute.xlu0 %1518
        %1522 = vset.pattern.permute.xlu0 0
        %1523 = vperm.xlu0 %1522, %v1203
        %v1524 = vpop.permute.xlu0 %1523
        %1527 = vset.pattern.permute.xlu0 0
        %1528 = vperm.xlu0 %1527, %v1208
        %v1529 = vpop.permute.xlu0 %1528
        %1532 = vset.pattern.permute.xlu0 0
        %1533 = vperm.xlu0 %1532, %v1213
        %v1534 = vpop.permute.xlu0 %1533
        %1537 = vset.pattern.permute.xlu0 0
        %1538 = vperm.xlu0 %1537, %v1218
        %v1539 = vpop.permute.xlu0 %1538
        %1542 = vset.pattern.permute.xlu0 0
        %1543 = vperm.xlu0 %1542, %v1223
        %v1544 = vpop.permute.xlu0 %1543
        %1547 = vset.pattern.permute.xlu0 0
        %1548 = vperm.xlu0 %1547, %v1228
        %v1549 = vpop.permute.xlu0 %1548
        %1552 = vset.pattern.permute.xlu0 0
        %1553 = vperm.xlu0 %1552, %v1233
        %v1554 = vpop.permute.xlu0 %1553
        %1557 = vset.pattern.permute.xlu0 0
        %1558 = vperm.xlu0 %1557, %v1238
        %v1559 = vpop.permute.xlu0 %1558
        %1562 = vset.pattern.permute.xlu0 0
        %1563 = vperm.xlu0 %1562, %v1243
        %v1564 = vpop.permute.xlu0 %1563
        %1567 = vset.pattern.permute.xlu0 0
        %1568 = vperm.xlu0 %1567, %v1248
        %v1569 = vpop.permute.xlu0 %1568
        %1572 = vset.pattern.permute.xlu0 0
        %1573 = vperm.xlu0 %1572, %v1253
        %v1574 = vpop.permute.xlu0 %1573
        %1577 = vset.pattern.permute.xlu0 0
        %1578 = vperm.xlu0 %1577, %v1258
        %v1579 = vpop.permute.xlu0 %1578
        %1582 = vset.pattern.permute.xlu0 0
        %1583 = vperm.xlu0 %1582, %v1263
        %v1584 = vpop.permute.xlu0 %1583
        %1587 = vset.pattern.permute.xlu0 0
        %1588 = vperm.xlu0 %1587, %v1268
        %v1589 = vpop.permute.xlu0 %1588
        %1592 = vset.pattern.permute.xlu0 0
        %1593 = vperm.xlu0 %1592, %v1273
        %v1594 = vpop.permute.xlu0 %1593
        %1597 = vset.pattern.permute.xlu0 0
        %1598 = vperm.xlu0 %1597, %v1278
        %v1599 = vpop.permute.xlu0 %1598
        %1602 = vset.pattern.permute.xlu0 0
        %1603 = vperm.xlu0 %1602, %v1283
        %v1604 = vpop.permute.xlu0 %1603
        %1607 = vset.pattern.permute.xlu0 0
        %1608 = vperm.xlu0 %1607, %v1288
        %v1609 = vpop.permute.xlu0 %1608
        %1612 = vset.pattern.permute.xlu0 0
        %1613 = vperm.xlu0 %1612, %v1293
        %v1614 = vpop.permute.xlu0 %1613
        %1617 = vset.pattern.permute.xlu0 0
        %1618 = vperm.xlu0 %1617, %v1298
        %v1619 = vpop.permute.xlu0 %1618
        %1622 = vset.pattern.permute.xlu0 0
        %1623 = vperm.xlu0 %1622, %v1303
        %v1624 = vpop.permute.xlu0 %1623
        %1627 = vset.pattern.permute.xlu0 0
        %1628 = vperm.xlu0 %1627, %v1308
        %v1629 = vpop.permute.xlu0 %1628
        %1632 = vset.pattern.permute.xlu0 0
        %1633 = vperm.xlu0 %1632, %v1313
        %v1634 = vpop.permute.xlu0 %1633
        %1637 = vset.pattern.permute.xlu0 0
        %1638 = vperm.xlu0 %1637, %v1318
        %v1639 = vpop.permute.xlu0 %1638
        %1642 = vset.pattern.permute.xlu0 0
        %1643 = vperm.xlu0 %1642, %v1323
        %v1644 = vpop.permute.xlu0 %1643
        %1647 = vset.pattern.permute.xlu0 0
        %1648 = vperm.xlu0 %1647, %v1328
        %v1649 = vpop.permute.xlu0 %1648
        %1652 = vset.pattern.permute.xlu0 0
        %1653 = vperm.xlu0 %1652, %v1333
        %v1654 = vpop.permute.xlu0 %1653
        %1657 = vset.pattern.permute.xlu0 0
        %1658 = vperm.xlu0 %1657, %v1338
        %v1659 = vpop.permute.xlu0 %1658
        %1662 = vset.pattern.permute.xlu0 0
        %1663 = vperm.xlu0 %1662, %v1343
        %v1664 = vpop.permute.xlu0 %1663
        %1667 = vset.pattern.permute.xlu0 0
        %1668 = vperm.xlu0 %1667, %v1348
        %v1669 = vpop.permute.xlu0 %1668
        %1672 = vset.pattern.permute.xlu0 0
        %1673 = vperm.xlu0 %1672, %v1353
        %v1674 = vpop.permute.xlu0 %1673
        %1677 = vset.pattern.permute.xlu0 0
        %1678 = vperm.xlu0 %1677, %v1358
        %v1679 = vpop.permute.xlu0 %1678
        %1682 = vset.pattern.permute.xlu0 0
        %1683 = vperm.xlu0 %1682, %v1363
        %v1684 = vpop.permute.xlu0 %1683
        %1687 = vset.pattern.permute.xlu0 0
        %1688 = vperm.xlu0 %1687, %v1368
        %v1689 = vpop.permute.xlu0 %1688
        %1692 = vset.pattern.permute.xlu0 0
        %1693 = vperm.xlu0 %1692, %v1373
        %v1694 = vpop.permute.xlu0 %1693
        %v1696 = vlaneseq
        %v1697 = vshrl.u32 %v1696, 7
        %v1698 = vsub.s32 0, %v1697
        %v1699 = vrot.slane %v411, %v1698
        %v1700 = vlaneseq
        %v1701 = vshrl.u32 %v1700, 7
        %v1702 = vsub.s32 0, %v1701
        %v1703 = vrot.slane %v413, %v1702
        %v1704 = vlaneseq
        %v1705 = vshrl.u32 %v1704, 7
        %v1706 = vsub.s32 0, %v1705
        %v1707 = vrot.slane %v482, %v1706
        %v1708 = vlaneseq
        %v1709 = vshrl.u32 %v1708, 7
        %v1710 = vsub.s32 0, %v1709
        %v1711 = vrot.slane %v484, %v1710
        %v1712 = vmul.f32 %v1379, %v1699
        %v1713 = vmul.f32 %v1379, %v1703
        %v1714 = vmul.f32 %v1379, %v1707
        %v1715 = vmul.f32 %v1379, %v1711
        %v1716 = vmul.f32 %v1384, %v1699
        %v1717 = vmul.f32 %v1384, %v1703
        %v1718 = vmul.f32 %v1384, %v1707
        %v1719 = vmul.f32 %v1384, %v1711
        %v1720 = vmul.f32 %v1389, %v1699
        %v1721 = vmul.f32 %v1389, %v1703
        %v1722 = vmul.f32 %v1389, %v1707
        %v1723 = vmul.f32 %v1389, %v1711
        %v1724 = vmul.f32 %v1394, %v1699
        %v1725 = vmul.f32 %v1394, %v1703
        %v1726 = vmul.f32 %v1394, %v1707
        %v1727 = vmul.f32 %v1394, %v1711
        %v1728 = vmul.f32 %v1399, %v1699
        %v1729 = vmul.f32 %v1399, %v1703
        %v1730 = vmul.f32 %v1399, %v1707
        %v1731 = vmul.f32 %v1399, %v1711
        %v1732 = vmul.f32 %v1404, %v1699
        %v1733 = vmul.f32 %v1404, %v1703
        %v1734 = vmul.f32 %v1404, %v1707
        %v1735 = vmul.f32 %v1404, %v1711
        %v1736 = vmul.f32 %v1409, %v1699
        %v1737 = vmul.f32 %v1409, %v1703
        %v1738 = vmul.f32 %v1409, %v1707
        %v1739 = vmul.f32 %v1409, %v1711
        %v1740 = vmul.f32 %v1414, %v1699
        %v1741 = vmul.f32 %v1414, %v1703
        %v1742 = vmul.f32 %v1414, %v1707
        %v1743 = vmul.f32 %v1414, %v1711
        %v1744 = vmul.f32 %v1419, %v1699
        %v1745 = vmul.f32 %v1419, %v1703
        %v1746 = vmul.f32 %v1419, %v1707
        %v1747 = vmul.f32 %v1419, %v1711
        %v1748 = vmul.f32 %v1424, %v1699
        %v1749 = vmul.f32 %v1424, %v1703
        %v1750 = vmul.f32 %v1424, %v1707
        %v1751 = vmul.f32 %v1424, %v1711
        %v1752 = vmul.f32 %v1429, %v1699
        %v1753 = vmul.f32 %v1429, %v1703
        %v1754 = vmul.f32 %v1429, %v1707
        %v1755 = vmul.f32 %v1429, %v1711
        %v1756 = vmul.f32 %v1434, %v1699
        %v1757 = vmul.f32 %v1434, %v1703
        %v1758 = vmul.f32 %v1434, %v1707
        %v1759 = vmul.f32 %v1434, %v1711
        %v1760 = vmul.f32 %v1439, %v1699
        %v1761 = vmul.f32 %v1439, %v1703
        %v1762 = vmul.f32 %v1439, %v1707
        %v1763 = vmul.f32 %v1439, %v1711
        %v1764 = vmul.f32 %v1444, %v1699
        %v1765 = vmul.f32 %v1444, %v1703
        %v1766 = vmul.f32 %v1444, %v1707
        %v1767 = vmul.f32 %v1444, %v1711
        %v1768 = vmul.f32 %v1449, %v1699
        %v1769 = vmul.f32 %v1449, %v1703
        %v1770 = vmul.f32 %v1449, %v1707
        %v1771 = vmul.f32 %v1449, %v1711
        %v1772 = vmul.f32 %v1454, %v1699
        %v1773 = vmul.f32 %v1454, %v1703
        %v1774 = vmul.f32 %v1454, %v1707
        %v1775 = vmul.f32 %v1454, %v1711
        %v1776 = vmul.f32 %v1459, %v1699
        %v1777 = vmul.f32 %v1459, %v1703
        %v1778 = vmul.f32 %v1459, %v1707
        %v1779 = vmul.f32 %v1459, %v1711
        %v1780 = vmul.f32 %v1464, %v1699
        %v1781 = vmul.f32 %v1464, %v1703
        %v1782 = vmul.f32 %v1464, %v1707
        %v1783 = vmul.f32 %v1464, %v1711
        %v1784 = vmul.f32 %v1469, %v1699
        %v1785 = vmul.f32 %v1469, %v1703
        %v1786 = vmul.f32 %v1469, %v1707
        %v1787 = vmul.f32 %v1469, %v1711
        %v1788 = vmul.f32 %v1474, %v1699
        %v1789 = vmul.f32 %v1474, %v1703
        %v1790 = vmul.f32 %v1474, %v1707
        %v1791 = vmul.f32 %v1474, %v1711
        %v1792 = vmul.f32 %v1479, %v1699
        %v1793 = vmul.f32 %v1479, %v1703
        %v1794 = vmul.f32 %v1479, %v1707
        %v1795 = vmul.f32 %v1479, %v1711
        %v1796 = vmul.f32 %v1484, %v1699
        %v1797 = vmul.f32 %v1484, %v1703
        %v1798 = vmul.f32 %v1484, %v1707
        %v1799 = vmul.f32 %v1484, %v1711
        %v1800 = vmul.f32 %v1489, %v1699
        %v1801 = vmul.f32 %v1489, %v1703
        %v1802 = vmul.f32 %v1489, %v1707
        %v1803 = vmul.f32 %v1489, %v1711
        %v1804 = vmul.f32 %v1494, %v1699
        %v1805 = vmul.f32 %v1494, %v1703
        %v1806 = vmul.f32 %v1494, %v1707
        %v1807 = vmul.f32 %v1494, %v1711
        %v1808 = vmul.f32 %v1499, %v1699
        %v1809 = vmul.f32 %v1499, %v1703
        %v1810 = vmul.f32 %v1499, %v1707
        %v1811 = vmul.f32 %v1499, %v1711
        %v1812 = vmul.f32 %v1504, %v1699
        %v1813 = vmul.f32 %v1504, %v1703
        %v1814 = vmul.f32 %v1504, %v1707
        %v1815 = vmul.f32 %v1504, %v1711
        %v1816 = vmul.f32 %v1509, %v1699
        %v1817 = vmul.f32 %v1509, %v1703
        %v1818 = vmul.f32 %v1509, %v1707
        %v1819 = vmul.f32 %v1509, %v1711
        %v1820 = vmul.f32 %v1514, %v1699
        %v1821 = vmul.f32 %v1514, %v1703
        %v1822 = vmul.f32 %v1514, %v1707
        %v1823 = vmul.f32 %v1514, %v1711
        %v1824 = vmul.f32 %v1519, %v1699
        %v1825 = vmul.f32 %v1519, %v1703
        %v1826 = vmul.f32 %v1519, %v1707
        %v1827 = vmul.f32 %v1519, %v1711
        %v1828 = vmul.f32 %v1524, %v1699
        %v1829 = vmul.f32 %v1524, %v1703
        %v1830 = vmul.f32 %v1524, %v1707
        %v1831 = vmul.f32 %v1524, %v1711
        %v1832 = vmul.f32 %v1529, %v1699
        %v1833 = vmul.f32 %v1529, %v1703
        %v1834 = vmul.f32 %v1529, %v1707
        %v1835 = vmul.f32 %v1529, %v1711
        %v1836 = vmul.f32 %v1534, %v1699
        %v1837 = vmul.f32 %v1534, %v1703
        %v1838 = vmul.f32 %v1534, %v1707
        %v1839 = vmul.f32 %v1534, %v1711
        %v1840 = vmul.f32 %v1539, %v1699
        %v1841 = vmul.f32 %v1539, %v1703
        %v1842 = vmul.f32 %v1539, %v1707
        %v1843 = vmul.f32 %v1539, %v1711
        %v1844 = vmul.f32 %v1544, %v1699
        %v1845 = vmul.f32 %v1544, %v1703
        %v1846 = vmul.f32 %v1544, %v1707
        %v1847 = vmul.f32 %v1544, %v1711
        %v1848 = vmul.f32 %v1549, %v1699
        %v1849 = vmul.f32 %v1549, %v1703
        %v1850 = vmul.f32 %v1549, %v1707
        %v1851 = vmul.f32 %v1549, %v1711
        %v1852 = vmul.f32 %v1554, %v1699
        %v1853 = vmul.f32 %v1554, %v1703
        %v1854 = vmul.f32 %v1554, %v1707
        %v1855 = vmul.f32 %v1554, %v1711
        %v1856 = vmul.f32 %v1559, %v1699
        %v1857 = vmul.f32 %v1559, %v1703
        %v1858 = vmul.f32 %v1559, %v1707
        %v1859 = vmul.f32 %v1559, %v1711
        %v1860 = vmul.f32 %v1564, %v1699
        %v1861 = vmul.f32 %v1564, %v1703
        %v1862 = vmul.f32 %v1564, %v1707
        %v1863 = vmul.f32 %v1564, %v1711
        %v1864 = vmul.f32 %v1569, %v1699
        %v1865 = vmul.f32 %v1569, %v1703
        %v1866 = vmul.f32 %v1569, %v1707
        %v1867 = vmul.f32 %v1569, %v1711
        %v1868 = vmul.f32 %v1574, %v1699
        %v1869 = vmul.f32 %v1574, %v1703
        %v1870 = vmul.f32 %v1574, %v1707
        %v1871 = vmul.f32 %v1574, %v1711
        %v1872 = vmul.f32 %v1579, %v1699
        %v1873 = vmul.f32 %v1579, %v1703
        %v1874 = vmul.f32 %v1579, %v1707
        %v1875 = vmul.f32 %v1579, %v1711
        %v1876 = vmul.f32 %v1584, %v1699
        %v1877 = vmul.f32 %v1584, %v1703
        %v1878 = vmul.f32 %v1584, %v1707
        %v1879 = vmul.f32 %v1584, %v1711
        %v1880 = vmul.f32 %v1589, %v1699
        %v1881 = vmul.f32 %v1589, %v1703
        %v1882 = vmul.f32 %v1589, %v1707
        %v1883 = vmul.f32 %v1589, %v1711
        %v1884 = vmul.f32 %v1594, %v1699
        %v1885 = vmul.f32 %v1594, %v1703
        %v1886 = vmul.f32 %v1594, %v1707
        %v1887 = vmul.f32 %v1594, %v1711
        %v1888 = vmul.f32 %v1599, %v1699
        %v1889 = vmul.f32 %v1599, %v1703
        %v1890 = vmul.f32 %v1599, %v1707
        %v1891 = vmul.f32 %v1599, %v1711
        %v1892 = vmul.f32 %v1604, %v1699
        %v1893 = vmul.f32 %v1604, %v1703
        %v1894 = vmul.f32 %v1604, %v1707
        %v1895 = vmul.f32 %v1604, %v1711
        %v1896 = vmul.f32 %v1609, %v1699
        %v1897 = vmul.f32 %v1609, %v1703
        %v1898 = vmul.f32 %v1609, %v1707
        %v1899 = vmul.f32 %v1609, %v1711
        %v1900 = vmul.f32 %v1614, %v1699
        %v1901 = vmul.f32 %v1614, %v1703
        %v1902 = vmul.f32 %v1614, %v1707
        %v1903 = vmul.f32 %v1614, %v1711
        %v1904 = vmul.f32 %v1619, %v1699
        %v1905 = vmul.f32 %v1619, %v1703
        %v1906 = vmul.f32 %v1619, %v1707
        %v1907 = vmul.f32 %v1619, %v1711
        %v1908 = vmul.f32 %v1624, %v1699
        %v1909 = vmul.f32 %v1624, %v1703
        %v1910 = vmul.f32 %v1624, %v1707
        %v1911 = vmul.f32 %v1624, %v1711
        %v1912 = vmul.f32 %v1629, %v1699
        %v1913 = vmul.f32 %v1629, %v1703
        %v1914 = vmul.f32 %v1629, %v1707
        %v1915 = vmul.f32 %v1629, %v1711
        %v1916 = vmul.f32 %v1634, %v1699
        %v1917 = vmul.f32 %v1634, %v1703
        %v1918 = vmul.f32 %v1634, %v1707
        %v1919 = vmul.f32 %v1634, %v1711
        %v1920 = vmul.f32 %v1639, %v1699
        %v1921 = vmul.f32 %v1639, %v1703
        %v1922 = vmul.f32 %v1639, %v1707
        %v1923 = vmul.f32 %v1639, %v1711
        %v1924 = vmul.f32 %v1644, %v1699
        %v1925 = vmul.f32 %v1644, %v1703
        %v1926 = vmul.f32 %v1644, %v1707
        %v1927 = vmul.f32 %v1644, %v1711
        %v1928 = vmul.f32 %v1649, %v1699
        %v1929 = vmul.f32 %v1649, %v1703
        %v1930 = vmul.f32 %v1649, %v1707
        %v1931 = vmul.f32 %v1649, %v1711
        %v1932 = vmul.f32 %v1654, %v1699
        %v1933 = vmul.f32 %v1654, %v1703
        %v1934 = vmul.f32 %v1654, %v1707
        %v1935 = vmul.f32 %v1654, %v1711
        %v1936 = vmul.f32 %v1659, %v1699
        %v1937 = vmul.f32 %v1659, %v1703
        %v1938 = vmul.f32 %v1659, %v1707
        %v1939 = vmul.f32 %v1659, %v1711
        %v1940 = vmul.f32 %v1664, %v1699
        %v1941 = vmul.f32 %v1664, %v1703
        %v1942 = vmul.f32 %v1664, %v1707
        %v1943 = vmul.f32 %v1664, %v1711
        %v1944 = vmul.f32 %v1669, %v1699
        %v1945 = vmul.f32 %v1669, %v1703
        %v1946 = vmul.f32 %v1669, %v1707
        %v1947 = vmul.f32 %v1669, %v1711
        %v1948 = vmul.f32 %v1674, %v1699
        %v1949 = vmul.f32 %v1674, %v1703
        %v1950 = vmul.f32 %v1674, %v1707
        %v1951 = vmul.f32 %v1674, %v1711
        %v1952 = vmul.f32 %v1679, %v1699
        %v1953 = vmul.f32 %v1679, %v1703
        %v1954 = vmul.f32 %v1679, %v1707
        %v1955 = vmul.f32 %v1679, %v1711
        %v1956 = vmul.f32 %v1684, %v1699
        %v1957 = vmul.f32 %v1684, %v1703
        %v1958 = vmul.f32 %v1684, %v1707
        %v1959 = vmul.f32 %v1684, %v1711
        %v1960 = vmul.f32 %v1689, %v1699
        %v1961 = vmul.f32 %v1689, %v1703
        %v1962 = vmul.f32 %v1689, %v1707
        %v1963 = vmul.f32 %v1689, %v1711
        %v1964 = vmul.f32 %v1694, %v1699
        %v1965 = vmul.f32 %v1694, %v1703
        %v1966 = vmul.f32 %v1694, %v1707
        %v1967 = vmul.f32 %v1694, %v1711
        %1968 = vset.pattern.permute.xlu0 1
        %1969 = vperm.xlu0 %1968, %v1058
        %v1970 = vpop.permute.xlu0 %1969
        %1972 = vset.pattern.permute.xlu0 1
        %1973 = vperm.xlu0 %1972, %v1063
        %v1974 = vpop.permute.xlu0 %1973
        %1976 = vset.pattern.permute.xlu0 1
        %1977 = vperm.xlu0 %1976, %v1068
        %v1978 = vpop.permute.xlu0 %1977
        %1980 = vset.pattern.permute.xlu0 1
        %1981 = vperm.xlu0 %1980, %v1073
        %v1982 = vpop.permute.xlu0 %1981
        %1984 = vset.pattern.permute.xlu0 1
        %1985 = vperm.xlu0 %1984, %v1078
        %v1986 = vpop.permute.xlu0 %1985
        %1988 = vset.pattern.permute.xlu0 1
        %1989 = vperm.xlu0 %1988, %v1083
        %v1990 = vpop.permute.xlu0 %1989
        %1992 = vset.pattern.permute.xlu0 1
        %1993 = vperm.xlu0 %1992, %v1088
        %v1994 = vpop.permute.xlu0 %1993
        %1996 = vset.pattern.permute.xlu0 1
        %1997 = vperm.xlu0 %1996, %v1093
        %v1998 = vpop.permute.xlu0 %1997
        %2000 = vset.pattern.permute.xlu0 1
        %2001 = vperm.xlu0 %2000, %v1098
        %v2002 = vpop.permute.xlu0 %2001
        %2004 = vset.pattern.permute.xlu0 1
        %2005 = vperm.xlu0 %2004, %v1103
        %v2006 = vpop.permute.xlu0 %2005
        %2008 = vset.pattern.permute.xlu0 1
        %2009 = vperm.xlu0 %2008, %v1108
        %v2010 = vpop.permute.xlu0 %2009
        %2012 = vset.pattern.permute.xlu0 1
        %2013 = vperm.xlu0 %2012, %v1113
        %v2014 = vpop.permute.xlu0 %2013
        %2016 = vset.pattern.permute.xlu0 1
        %2017 = vperm.xlu0 %2016, %v1118
        %v2018 = vpop.permute.xlu0 %2017
        %2020 = vset.pattern.permute.xlu0 1
        %2021 = vperm.xlu0 %2020, %v1123
        %v2022 = vpop.permute.xlu0 %2021
        %2024 = vset.pattern.permute.xlu0 1
        %2025 = vperm.xlu0 %2024, %v1128
        %v2026 = vpop.permute.xlu0 %2025
        %2028 = vset.pattern.permute.xlu0 1
        %2029 = vperm.xlu0 %2028, %v1133
        %v2030 = vpop.permute.xlu0 %2029
        %2032 = vset.pattern.permute.xlu0 1
        %2033 = vperm.xlu0 %2032, %v1138
        %v2034 = vpop.permute.xlu0 %2033
        %2036 = vset.pattern.permute.xlu0 1
        %2037 = vperm.xlu0 %2036, %v1143
        %v2038 = vpop.permute.xlu0 %2037
        %2040 = vset.pattern.permute.xlu0 1
        %2041 = vperm.xlu0 %2040, %v1148
        %v2042 = vpop.permute.xlu0 %2041
        %2044 = vset.pattern.permute.xlu0 1
        %2045 = vperm.xlu0 %2044, %v1153
        %v2046 = vpop.permute.xlu0 %2045
        %2048 = vset.pattern.permute.xlu0 1
        %2049 = vperm.xlu0 %2048, %v1158
        %v2050 = vpop.permute.xlu0 %2049
        %2052 = vset.pattern.permute.xlu0 1
        %2053 = vperm.xlu0 %2052, %v1163
        %v2054 = vpop.permute.xlu0 %2053
        %2056 = vset.pattern.permute.xlu0 1
        %2057 = vperm.xlu0 %2056, %v1168
        %v2058 = vpop.permute.xlu0 %2057
        %2060 = vset.pattern.permute.xlu0 1
        %2061 = vperm.xlu0 %2060, %v1173
        %v2062 = vpop.permute.xlu0 %2061
        %2064 = vset.pattern.permute.xlu0 1
        %2065 = vperm.xlu0 %2064, %v1178
        %v2066 = vpop.permute.xlu0 %2065
        %2068 = vset.pattern.permute.xlu0 1
        %2069 = vperm.xlu0 %2068, %v1183
        %v2070 = vpop.permute.xlu0 %2069
        %2072 = vset.pattern.permute.xlu0 1
        %2073 = vperm.xlu0 %2072, %v1188
        %v2074 = vpop.permute.xlu0 %2073
        %2076 = vset.pattern.permute.xlu0 1
        %2077 = vperm.xlu0 %2076, %v1193
        %v2078 = vpop.permute.xlu0 %2077
        %2080 = vset.pattern.permute.xlu0 1
        %2081 = vperm.xlu0 %2080, %v1198
        %v2082 = vpop.permute.xlu0 %2081
        %2084 = vset.pattern.permute.xlu0 1
        %2085 = vperm.xlu0 %2084, %v1203
        %v2086 = vpop.permute.xlu0 %2085
        %2088 = vset.pattern.permute.xlu0 1
        %2089 = vperm.xlu0 %2088, %v1208
        %v2090 = vpop.permute.xlu0 %2089
        %2092 = vset.pattern.permute.xlu0 1
        %2093 = vperm.xlu0 %2092, %v1213
        %v2094 = vpop.permute.xlu0 %2093
        %2096 = vset.pattern.permute.xlu0 1
        %2097 = vperm.xlu0 %2096, %v1218
        %v2098 = vpop.permute.xlu0 %2097
        %2100 = vset.pattern.permute.xlu0 1
        %2101 = vperm.xlu0 %2100, %v1223
        %v2102 = vpop.permute.xlu0 %2101
        %2104 = vset.pattern.permute.xlu0 1
        %2105 = vperm.xlu0 %2104, %v1228
        %v2106 = vpop.permute.xlu0 %2105
        %2108 = vset.pattern.permute.xlu0 1
        %2109 = vperm.xlu0 %2108, %v1233
        %v2110 = vpop.permute.xlu0 %2109
        %2112 = vset.pattern.permute.xlu0 1
        %2113 = vperm.xlu0 %2112, %v1238
        %v2114 = vpop.permute.xlu0 %2113
        %2116 = vset.pattern.permute.xlu0 1
        %2117 = vperm.xlu0 %2116, %v1243
        %v2118 = vpop.permute.xlu0 %2117
        %2120 = vset.pattern.permute.xlu0 1
        %2121 = vperm.xlu0 %2120, %v1248
        %v2122 = vpop.permute.xlu0 %2121
        %2124 = vset.pattern.permute.xlu0 1
        %2125 = vperm.xlu0 %2124, %v1253
        %v2126 = vpop.permute.xlu0 %2125
        %2128 = vset.pattern.permute.xlu0 1
        %2129 = vperm.xlu0 %2128, %v1258
        %v2130 = vpop.permute.xlu0 %2129
        %2132 = vset.pattern.permute.xlu0 1
        %2133 = vperm.xlu0 %2132, %v1263
        %v2134 = vpop.permute.xlu0 %2133
        %2136 = vset.pattern.permute.xlu0 1
        %2137 = vperm.xlu0 %2136, %v1268
        %v2138 = vpop.permute.xlu0 %2137
        %2140 = vset.pattern.permute.xlu0 1
        %2141 = vperm.xlu0 %2140, %v1273
        %v2142 = vpop.permute.xlu0 %2141
        %2144 = vset.pattern.permute.xlu0 1
        %2145 = vperm.xlu0 %2144, %v1278
        %v2146 = vpop.permute.xlu0 %2145
        %2148 = vset.pattern.permute.xlu0 1
        %2149 = vperm.xlu0 %2148, %v1283
        %v2150 = vpop.permute.xlu0 %2149
        %2152 = vset.pattern.permute.xlu0 1
        %2153 = vperm.xlu0 %2152, %v1288
        %v2154 = vpop.permute.xlu0 %2153
        %2156 = vset.pattern.permute.xlu0 1
        %2157 = vperm.xlu0 %2156, %v1293
        %v2158 = vpop.permute.xlu0 %2157
        %2160 = vset.pattern.permute.xlu0 1
        %2161 = vperm.xlu0 %2160, %v1298
        %v2162 = vpop.permute.xlu0 %2161
        %2164 = vset.pattern.permute.xlu0 1
        %2165 = vperm.xlu0 %2164, %v1303
        %v2166 = vpop.permute.xlu0 %2165
        %2168 = vset.pattern.permute.xlu0 1
        %2169 = vperm.xlu0 %2168, %v1308
        %v2170 = vpop.permute.xlu0 %2169
        %2172 = vset.pattern.permute.xlu0 1
        %2173 = vperm.xlu0 %2172, %v1313
        %v2174 = vpop.permute.xlu0 %2173
        %2176 = vset.pattern.permute.xlu0 1
        %2177 = vperm.xlu0 %2176, %v1318
        %v2178 = vpop.permute.xlu0 %2177
        %2180 = vset.pattern.permute.xlu0 1
        %2181 = vperm.xlu0 %2180, %v1323
        %v2182 = vpop.permute.xlu0 %2181
        %2184 = vset.pattern.permute.xlu0 1
        %2185 = vperm.xlu0 %2184, %v1328
        %v2186 = vpop.permute.xlu0 %2185
        %2188 = vset.pattern.permute.xlu0 1
        %2189 = vperm.xlu0 %2188, %v1333
        %v2190 = vpop.permute.xlu0 %2189
        %2192 = vset.pattern.permute.xlu0 1
        %2193 = vperm.xlu0 %2192, %v1338
        %v2194 = vpop.permute.xlu0 %2193
        %2196 = vset.pattern.permute.xlu0 1
        %2197 = vperm.xlu0 %2196, %v1343
        %v2198 = vpop.permute.xlu0 %2197
        %2200 = vset.pattern.permute.xlu0 1
        %2201 = vperm.xlu0 %2200, %v1348
        %v2202 = vpop.permute.xlu0 %2201
        %2204 = vset.pattern.permute.xlu0 1
        %2205 = vperm.xlu0 %2204, %v1353
        %v2206 = vpop.permute.xlu0 %2205
        %2208 = vset.pattern.permute.xlu0 1
        %2209 = vperm.xlu0 %2208, %v1358
        %v2210 = vpop.permute.xlu0 %2209
        %2212 = vset.pattern.permute.xlu0 1
        %2213 = vperm.xlu0 %2212, %v1363
        %v2214 = vpop.permute.xlu0 %2213
        %2216 = vset.pattern.permute.xlu0 1
        %2217 = vperm.xlu0 %2216, %v1368
        %v2218 = vpop.permute.xlu0 %2217
        %2220 = vset.pattern.permute.xlu0 1
        %2221 = vperm.xlu0 %2220, %v1373
        %v2222 = vpop.permute.xlu0 %2221
        %v2224 = vlaneseq
        %v2225 = vshrl.u32 %v2224, 7
        %v2226 = vsub.s32 1, %v2225
        %v2227 = vrot.slane %v411, %v2226
        %v2228 = vlaneseq
        %v2229 = vshrl.u32 %v2228, 7
        %v2230 = vsub.s32 1, %v2229
        %v2231 = vrot.slane %v413, %v2230
        %v2232 = vlaneseq
        %v2233 = vshrl.u32 %v2232, 7
        %v2234 = vsub.s32 1, %v2233
        %v2235 = vrot.slane %v482, %v2234
        %v2236 = vlaneseq
        %v2237 = vshrl.u32 %v2236, 7
        %v2238 = vsub.s32 1, %v2237
        %v2239 = vrot.slane %v484, %v2238
        %v2240 = vmul.f32 %v1970, %v2227
        %v2241 = vmul.f32 %v1970, %v2231
        %v2242 = vmul.f32 %v1970, %v2235
        %v2243 = vmul.f32 %v1970, %v2239
        %v2244 = vmul.f32 %v1974, %v2227
        %v2245 = vmul.f32 %v1974, %v2231
        %v2246 = vmul.f32 %v1974, %v2235
        %v2247 = vmul.f32 %v1974, %v2239
        %v2248 = vmul.f32 %v1978, %v2227
        %v2249 = vmul.f32 %v1978, %v2231
        %v2250 = vmul.f32 %v1978, %v2235
        %v2251 = vmul.f32 %v1978, %v2239
        %v2252 = vmul.f32 %v1982, %v2227
        %v2253 = vmul.f32 %v1982, %v2231
        %v2254 = vmul.f32 %v1982, %v2235
        %v2255 = vmul.f32 %v1982, %v2239
        %v2256 = vmul.f32 %v1986, %v2227
        %v2257 = vmul.f32 %v1986, %v2231
        %v2258 = vmul.f32 %v1986, %v2235
        %v2259 = vmul.f32 %v1986, %v2239
        %v2260 = vmul.f32 %v1990, %v2227
        %v2261 = vmul.f32 %v1990, %v2231
        %v2262 = vmul.f32 %v1990, %v2235
        %v2263 = vmul.f32 %v1990, %v2239
        %v2264 = vmul.f32 %v1994, %v2227
        %v2265 = vmul.f32 %v1994, %v2231
        %v2266 = vmul.f32 %v1994, %v2235
        %v2267 = vmul.f32 %v1994, %v2239
        %v2268 = vmul.f32 %v1998, %v2227
        %v2269 = vmul.f32 %v1998, %v2231
        %v2270 = vmul.f32 %v1998, %v2235
        %v2271 = vmul.f32 %v1998, %v2239
        %v2272 = vmul.f32 %v2002, %v2227
        %v2273 = vmul.f32 %v2002, %v2231
        %v2274 = vmul.f32 %v2002, %v2235
        %v2275 = vmul.f32 %v2002, %v2239
        %v2276 = vmul.f32 %v2006, %v2227
        %v2277 = vmul.f32 %v2006, %v2231
        %v2278 = vmul.f32 %v2006, %v2235
        %v2279 = vmul.f32 %v2006, %v2239
        %v2280 = vmul.f32 %v2010, %v2227
        %v2281 = vmul.f32 %v2010, %v2231
        %v2282 = vmul.f32 %v2010, %v2235
        %v2283 = vmul.f32 %v2010, %v2239
        %v2284 = vmul.f32 %v2014, %v2227
        %v2285 = vmul.f32 %v2014, %v2231
        %v2286 = vmul.f32 %v2014, %v2235
        %v2287 = vmul.f32 %v2014, %v2239
        %v2288 = vmul.f32 %v2018, %v2227
        %v2289 = vmul.f32 %v2018, %v2231
        %v2290 = vmul.f32 %v2018, %v2235
        %v2291 = vmul.f32 %v2018, %v2239
        %v2292 = vmul.f32 %v2022, %v2227
        %v2293 = vmul.f32 %v2022, %v2231
        %v2294 = vmul.f32 %v2022, %v2235
        %v2295 = vmul.f32 %v2022, %v2239
        %v2296 = vmul.f32 %v2026, %v2227
        %v2297 = vmul.f32 %v2026, %v2231
        %v2298 = vmul.f32 %v2026, %v2235
        %v2299 = vmul.f32 %v2026, %v2239
        %v2300 = vmul.f32 %v2030, %v2227
        %v2301 = vmul.f32 %v2030, %v2231
        %v2302 = vmul.f32 %v2030, %v2235
        %v2303 = vmul.f32 %v2030, %v2239
        %v2304 = vmul.f32 %v2034, %v2227
        %v2305 = vmul.f32 %v2034, %v2231
        %v2306 = vmul.f32 %v2034, %v2235
        %v2307 = vmul.f32 %v2034, %v2239
        %v2308 = vmul.f32 %v2038, %v2227
        %v2309 = vmul.f32 %v2038, %v2231
        %v2310 = vmul.f32 %v2038, %v2235
        %v2311 = vmul.f32 %v2038, %v2239
        %v2312 = vmul.f32 %v2042, %v2227
        %v2313 = vmul.f32 %v2042, %v2231
        %v2314 = vmul.f32 %v2042, %v2235
        %v2315 = vmul.f32 %v2042, %v2239
        %v2316 = vmul.f32 %v2046, %v2227
        %v2317 = vmul.f32 %v2046, %v2231
        %v2318 = vmul.f32 %v2046, %v2235
        %v2319 = vmul.f32 %v2046, %v2239
        %v2320 = vmul.f32 %v2050, %v2227
        %v2321 = vmul.f32 %v2050, %v2231
        %v2322 = vmul.f32 %v2050, %v2235
        %v2323 = vmul.f32 %v2050, %v2239
        %v2324 = vmul.f32 %v2054, %v2227
        %v2325 = vmul.f32 %v2054, %v2231
        %v2326 = vmul.f32 %v2054, %v2235
        %v2327 = vmul.f32 %v2054, %v2239
        %v2328 = vmul.f32 %v2058, %v2227
        %v2329 = vmul.f32 %v2058, %v2231
        %v2330 = vmul.f32 %v2058, %v2235
        %v2331 = vmul.f32 %v2058, %v2239
        %v2332 = vmul.f32 %v2062, %v2227
        %v2333 = vmul.f32 %v2062, %v2231
        %v2334 = vmul.f32 %v2062, %v2235
        %v2335 = vmul.f32 %v2062, %v2239
        %v2336 = vmul.f32 %v2066, %v2227
        %v2337 = vmul.f32 %v2066, %v2231
        %v2338 = vmul.f32 %v2066, %v2235
        %v2339 = vmul.f32 %v2066, %v2239
        %v2340 = vmul.f32 %v2070, %v2227
        %v2341 = vmul.f32 %v2070, %v2231
        %v2342 = vmul.f32 %v2070, %v2235
        %v2343 = vmul.f32 %v2070, %v2239
        %v2344 = vmul.f32 %v2074, %v2227
        %v2345 = vmul.f32 %v2074, %v2231
        %v2346 = vmul.f32 %v2074, %v2235
        %v2347 = vmul.f32 %v2074, %v2239
        %v2348 = vmul.f32 %v2078, %v2227
        %v2349 = vmul.f32 %v2078, %v2231
        %v2350 = vmul.f32 %v2078, %v2235
        %v2351 = vmul.f32 %v2078, %v2239
        %v2352 = vmul.f32 %v2082, %v2227
        %v2353 = vmul.f32 %v2082, %v2231
        %v2354 = vmul.f32 %v2082, %v2235
        %v2355 = vmul.f32 %v2082, %v2239
        %v2356 = vmul.f32 %v2086, %v2227
        %v2357 = vmul.f32 %v2086, %v2231
        %v2358 = vmul.f32 %v2086, %v2235
        %v2359 = vmul.f32 %v2086, %v2239
        %v2360 = vmul.f32 %v2090, %v2227
        %v2361 = vmul.f32 %v2090, %v2231
        %v2362 = vmul.f32 %v2090, %v2235
        %v2363 = vmul.f32 %v2090, %v2239
        %v2364 = vmul.f32 %v2094, %v2227
        %v2365 = vmul.f32 %v2094, %v2231
        %v2366 = vmul.f32 %v2094, %v2235
        %v2367 = vmul.f32 %v2094, %v2239
        %v2368 = vmul.f32 %v2098, %v2227
        %v2369 = vmul.f32 %v2098, %v2231
        %v2370 = vmul.f32 %v2098, %v2235
        %v2371 = vmul.f32 %v2098, %v2239
        %v2372 = vmul.f32 %v2102, %v2227
        %v2373 = vmul.f32 %v2102, %v2231
        %v2374 = vmul.f32 %v2102, %v2235
        %v2375 = vmul.f32 %v2102, %v2239
        %v2376 = vmul.f32 %v2106, %v2227
        %v2377 = vmul.f32 %v2106, %v2231
        %v2378 = vmul.f32 %v2106, %v2235
        %v2379 = vmul.f32 %v2106, %v2239
        %v2380 = vmul.f32 %v2110, %v2227
        %v2381 = vmul.f32 %v2110, %v2231
        %v2382 = vmul.f32 %v2110, %v2235
        %v2383 = vmul.f32 %v2110, %v2239
        %v2384 = vmul.f32 %v2114, %v2227
        %v2385 = vmul.f32 %v2114, %v2231
        %v2386 = vmul.f32 %v2114, %v2235
        %v2387 = vmul.f32 %v2114, %v2239
        %v2388 = vmul.f32 %v2118, %v2227
        %v2389 = vmul.f32 %v2118, %v2231
        %v2390 = vmul.f32 %v2118, %v2235
        %v2391 = vmul.f32 %v2118, %v2239
        %v2392 = vmul.f32 %v2122, %v2227
        %v2393 = vmul.f32 %v2122, %v2231
        %v2394 = vmul.f32 %v2122, %v2235
        %v2395 = vmul.f32 %v2122, %v2239
        %v2396 = vmul.f32 %v2126, %v2227
        %v2397 = vmul.f32 %v2126, %v2231
        %v2398 = vmul.f32 %v2126, %v2235
        %v2399 = vmul.f32 %v2126, %v2239
        %v2400 = vmul.f32 %v2130, %v2227
        %v2401 = vmul.f32 %v2130, %v2231
        %v2402 = vmul.f32 %v2130, %v2235
        %v2403 = vmul.f32 %v2130, %v2239
        %v2404 = vmul.f32 %v2134, %v2227
        %v2405 = vmul.f32 %v2134, %v2231
        %v2406 = vmul.f32 %v2134, %v2235
        %v2407 = vmul.f32 %v2134, %v2239
        %v2408 = vmul.f32 %v2138, %v2227
        %v2409 = vmul.f32 %v2138, %v2231
        %v2410 = vmul.f32 %v2138, %v2235
        %v2411 = vmul.f32 %v2138, %v2239
        %v2412 = vmul.f32 %v2142, %v2227
        %v2413 = vmul.f32 %v2142, %v2231
        %v2414 = vmul.f32 %v2142, %v2235
        %v2415 = vmul.f32 %v2142, %v2239
        %v2416 = vmul.f32 %v2146, %v2227
        %v2417 = vmul.f32 %v2146, %v2231
        %v2418 = vmul.f32 %v2146, %v2235
        %v2419 = vmul.f32 %v2146, %v2239
        %v2420 = vmul.f32 %v2150, %v2227
        %v2421 = vmul.f32 %v2150, %v2231
        %v2422 = vmul.f32 %v2150, %v2235
        %v2423 = vmul.f32 %v2150, %v2239
        %v2424 = vmul.f32 %v2154, %v2227
        %v2425 = vmul.f32 %v2154, %v2231
        %v2426 = vmul.f32 %v2154, %v2235
        %v2427 = vmul.f32 %v2154, %v2239
        %v2428 = vmul.f32 %v2158, %v2227
        %v2429 = vmul.f32 %v2158, %v2231
        %v2430 = vmul.f32 %v2158, %v2235
        %v2431 = vmul.f32 %v2158, %v2239
        %v2432 = vmul.f32 %v2162, %v2227
        %v2433 = vmul.f32 %v2162, %v2231
        %v2434 = vmul.f32 %v2162, %v2235
        %v2435 = vmul.f32 %v2162, %v2239
        %v2436 = vmul.f32 %v2166, %v2227
        %v2437 = vmul.f32 %v2166, %v2231
        %v2438 = vmul.f32 %v2166, %v2235
        %v2439 = vmul.f32 %v2166, %v2239
        %v2440 = vmul.f32 %v2170, %v2227
        %v2441 = vmul.f32 %v2170, %v2231
        %v2442 = vmul.f32 %v2170, %v2235
        %v2443 = vmul.f32 %v2170, %v2239
        %v2444 = vmul.f32 %v2174, %v2227
        %v2445 = vmul.f32 %v2174, %v2231
        %v2446 = vmul.f32 %v2174, %v2235
        %v2447 = vmul.f32 %v2174, %v2239
        %v2448 = vmul.f32 %v2178, %v2227
        %v2449 = vmul.f32 %v2178, %v2231
        %v2450 = vmul.f32 %v2178, %v2235
        %v2451 = vmul.f32 %v2178, %v2239
        %v2452 = vmul.f32 %v2182, %v2227
        %v2453 = vmul.f32 %v2182, %v2231
        %v2454 = vmul.f32 %v2182, %v2235
        %v2455 = vmul.f32 %v2182, %v2239
        %v2456 = vmul.f32 %v2186, %v2227
        %v2457 = vmul.f32 %v2186, %v2231
        %v2458 = vmul.f32 %v2186, %v2235
        %v2459 = vmul.f32 %v2186, %v2239
        %v2460 = vmul.f32 %v2190, %v2227
        %v2461 = vmul.f32 %v2190, %v2231
        %v2462 = vmul.f32 %v2190, %v2235
        %v2463 = vmul.f32 %v2190, %v2239
        %v2464 = vmul.f32 %v2194, %v2227
        %v2465 = vmul.f32 %v2194, %v2231
        %v2466 = vmul.f32 %v2194, %v2235
        %v2467 = vmul.f32 %v2194, %v2239
        %v2468 = vmul.f32 %v2198, %v2227
        %v2469 = vmul.f32 %v2198, %v2231
        %v2470 = vmul.f32 %v2198, %v2235
        %v2471 = vmul.f32 %v2198, %v2239
        %v2472 = vmul.f32 %v2202, %v2227
        %v2473 = vmul.f32 %v2202, %v2231
        %v2474 = vmul.f32 %v2202, %v2235
        %v2475 = vmul.f32 %v2202, %v2239
        %v2476 = vmul.f32 %v2206, %v2227
        %v2477 = vmul.f32 %v2206, %v2231
        %v2478 = vmul.f32 %v2206, %v2235
        %v2479 = vmul.f32 %v2206, %v2239
        %v2480 = vmul.f32 %v2210, %v2227
        %v2481 = vmul.f32 %v2210, %v2231
        %v2482 = vmul.f32 %v2210, %v2235
        %v2483 = vmul.f32 %v2210, %v2239
        %v2484 = vmul.f32 %v2214, %v2227
        %v2485 = vmul.f32 %v2214, %v2231
        %v2486 = vmul.f32 %v2214, %v2235
        %v2487 = vmul.f32 %v2214, %v2239
        %v2488 = vmul.f32 %v2218, %v2227
        %v2489 = vmul.f32 %v2218, %v2231
        %v2490 = vmul.f32 %v2218, %v2235
        %v2491 = vmul.f32 %v2218, %v2239
        %v2492 = vmul.f32 %v2222, %v2227
        %v2493 = vmul.f32 %v2222, %v2231
        %v2494 = vmul.f32 %v2222, %v2235
        %v2495 = vmul.f32 %v2222, %v2239
        %v2496 = vadd.f32 %v1712, %v2240
        %v2497 = vadd.f32 %v1713, %v2241
        %v2498 = vadd.f32 %v1714, %v2242
        %v2499 = vadd.f32 %v1715, %v2243
        %v2500 = vadd.f32 %v1716, %v2244
        %v2501 = vadd.f32 %v1717, %v2245
        %v2502 = vadd.f32 %v1718, %v2246
        %v2503 = vadd.f32 %v1719, %v2247
        %v2504 = vadd.f32 %v1720, %v2248
        %v2505 = vadd.f32 %v1721, %v2249
        %v2506 = vadd.f32 %v1722, %v2250
        %v2507 = vadd.f32 %v1723, %v2251
        %v2508 = vadd.f32 %v1724, %v2252
        %v2509 = vadd.f32 %v1725, %v2253
        %v2510 = vadd.f32 %v1726, %v2254
        %v2511 = vadd.f32 %v1727, %v2255
        %v2512 = vadd.f32 %v1728, %v2256
        %v2513 = vadd.f32 %v1729, %v2257
        %v2514 = vadd.f32 %v1730, %v2258
        %v2515 = vadd.f32 %v1731, %v2259
        %v2516 = vadd.f32 %v1732, %v2260
        %v2517 = vadd.f32 %v1733, %v2261
        %v2518 = vadd.f32 %v1734, %v2262
        %v2519 = vadd.f32 %v1735, %v2263
        %v2520 = vadd.f32 %v1736, %v2264
        %v2521 = vadd.f32 %v1737, %v2265
        %v2522 = vadd.f32 %v1738, %v2266
        %v2523 = vadd.f32 %v1739, %v2267
        %v2524 = vadd.f32 %v1740, %v2268
        %v2525 = vadd.f32 %v1741, %v2269
        %v2526 = vadd.f32 %v1742, %v2270
        %v2527 = vadd.f32 %v1743, %v2271
        %v2528 = vadd.f32 %v1744, %v2272
        %v2529 = vadd.f32 %v1745, %v2273
        %v2530 = vadd.f32 %v1746, %v2274
        %v2531 = vadd.f32 %v1747, %v2275
        %v2532 = vadd.f32 %v1748, %v2276
        %v2533 = vadd.f32 %v1749, %v2277
        %v2534 = vadd.f32 %v1750, %v2278
        %v2535 = vadd.f32 %v1751, %v2279
        %v2536 = vadd.f32 %v1752, %v2280
        %v2537 = vadd.f32 %v1753, %v2281
        %v2538 = vadd.f32 %v1754, %v2282
        %v2539 = vadd.f32 %v1755, %v2283
        %v2540 = vadd.f32 %v1756, %v2284
        %v2541 = vadd.f32 %v1757, %v2285
        %v2542 = vadd.f32 %v1758, %v2286
        %v2543 = vadd.f32 %v1759, %v2287
        %v2544 = vadd.f32 %v1760, %v2288
        %v2545 = vadd.f32 %v1761, %v2289
        %v2546 = vadd.f32 %v1762, %v2290
        %v2547 = vadd.f32 %v1763, %v2291
        %v2548 = vadd.f32 %v1764, %v2292
        %v2549 = vadd.f32 %v1765, %v2293
        %v2550 = vadd.f32 %v1766, %v2294
        %v2551 = vadd.f32 %v1767, %v2295
        %v2552 = vadd.f32 %v1768, %v2296
        %v2553 = vadd.f32 %v1769, %v2297
        %v2554 = vadd.f32 %v1770, %v2298
        %v2555 = vadd.f32 %v1771, %v2299
        %v2556 = vadd.f32 %v1772, %v2300
        %v2557 = vadd.f32 %v1773, %v2301
        %v2558 = vadd.f32 %v1774, %v2302
        %v2559 = vadd.f32 %v1775, %v2303
        %v2560 = vadd.f32 %v1776, %v2304
        %v2561 = vadd.f32 %v1777, %v2305
        %v2562 = vadd.f32 %v1778, %v2306
        %v2563 = vadd.f32 %v1779, %v2307
        %v2564 = vadd.f32 %v1780, %v2308
        %v2565 = vadd.f32 %v1781, %v2309
        %v2566 = vadd.f32 %v1782, %v2310
        %v2567 = vadd.f32 %v1783, %v2311
        %v2568 = vadd.f32 %v1784, %v2312
        %v2569 = vadd.f32 %v1785, %v2313
        %v2570 = vadd.f32 %v1786, %v2314
        %v2571 = vadd.f32 %v1787, %v2315
        %v2572 = vadd.f32 %v1788, %v2316
        %v2573 = vadd.f32 %v1789, %v2317
        %v2574 = vadd.f32 %v1790, %v2318
        %v2575 = vadd.f32 %v1791, %v2319
        %v2576 = vadd.f32 %v1792, %v2320
        %v2577 = vadd.f32 %v1793, %v2321
        %v2578 = vadd.f32 %v1794, %v2322
        %v2579 = vadd.f32 %v1795, %v2323
        %v2580 = vadd.f32 %v1796, %v2324
        %v2581 = vadd.f32 %v1797, %v2325
        %v2582 = vadd.f32 %v1798, %v2326
        %v2583 = vadd.f32 %v1799, %v2327
        %v2584 = vadd.f32 %v1800, %v2328
        %v2585 = vadd.f32 %v1801, %v2329
        %v2586 = vadd.f32 %v1802, %v2330
        %v2587 = vadd.f32 %v1803, %v2331
        %v2588 = vadd.f32 %v1804, %v2332
        %v2589 = vadd.f32 %v1805, %v2333
        %v2590 = vadd.f32 %v1806, %v2334
        %v2591 = vadd.f32 %v1807, %v2335
        %v2592 = vadd.f32 %v1808, %v2336
        %v2593 = vadd.f32 %v1809, %v2337
        %v2594 = vadd.f32 %v1810, %v2338
        %v2595 = vadd.f32 %v1811, %v2339
        %v2596 = vadd.f32 %v1812, %v2340
        %v2597 = vadd.f32 %v1813, %v2341
        %v2598 = vadd.f32 %v1814, %v2342
        %v2599 = vadd.f32 %v1815, %v2343
        %v2600 = vadd.f32 %v1816, %v2344
        %v2601 = vadd.f32 %v1817, %v2345
        %v2602 = vadd.f32 %v1818, %v2346
        %v2603 = vadd.f32 %v1819, %v2347
        %v2604 = vadd.f32 %v1820, %v2348
        %v2605 = vadd.f32 %v1821, %v2349
        %v2606 = vadd.f32 %v1822, %v2350
        %v2607 = vadd.f32 %v1823, %v2351
        %v2608 = vadd.f32 %v1824, %v2352
        %v2609 = vadd.f32 %v1825, %v2353
        %v2610 = vadd.f32 %v1826, %v2354
        %v2611 = vadd.f32 %v1827, %v2355
        %v2612 = vadd.f32 %v1828, %v2356
        %v2613 = vadd.f32 %v1829, %v2357
        %v2614 = vadd.f32 %v1830, %v2358
        %v2615 = vadd.f32 %v1831, %v2359
        %v2616 = vadd.f32 %v1832, %v2360
        %v2617 = vadd.f32 %v1833, %v2361
        %v2618 = vadd.f32 %v1834, %v2362
        %v2619 = vadd.f32 %v1835, %v2363
        %v2620 = vadd.f32 %v1836, %v2364
        %v2621 = vadd.f32 %v1837, %v2365
        %v2622 = vadd.f32 %v1838, %v2366
        %v2623 = vadd.f32 %v1839, %v2367
        %v2624 = vadd.f32 %v1840, %v2368
        %v2625 = vadd.f32 %v1841, %v2369
        %v2626 = vadd.f32 %v1842, %v2370
        %v2627 = vadd.f32 %v1843, %v2371
        %v2628 = vadd.f32 %v1844, %v2372
        %v2629 = vadd.f32 %v1845, %v2373
        %v2630 = vadd.f32 %v1846, %v2374
        %v2631 = vadd.f32 %v1847, %v2375
        %v2632 = vadd.f32 %v1848, %v2376
        %v2633 = vadd.f32 %v1849, %v2377
        %v2634 = vadd.f32 %v1850, %v2378
        %v2635 = vadd.f32 %v1851, %v2379
        %v2636 = vadd.f32 %v1852, %v2380
        %v2637 = vadd.f32 %v1853, %v2381
        %v2638 = vadd.f32 %v1854, %v2382
        %v2639 = vadd.f32 %v1855, %v2383
        %v2640 = vadd.f32 %v1856, %v2384
        %v2641 = vadd.f32 %v1857, %v2385
        %v2642 = vadd.f32 %v1858, %v2386
        %v2643 = vadd.f32 %v1859, %v2387
        %v2644 = vadd.f32 %v1860, %v2388
        %v2645 = vadd.f32 %v1861, %v2389
        %v2646 = vadd.f32 %v1862, %v2390
        %v2647 = vadd.f32 %v1863, %v2391
        %v2648 = vadd.f32 %v1864, %v2392
        %v2649 = vadd.f32 %v1865, %v2393
        %v2650 = vadd.f32 %v1866, %v2394
        %v2651 = vadd.f32 %v1867, %v2395
        %v2652 = vadd.f32 %v1868, %v2396
        %v2653 = vadd.f32 %v1869, %v2397
        %v2654 = vadd.f32 %v1870, %v2398
        %v2655 = vadd.f32 %v1871, %v2399
        %v2656 = vadd.f32 %v1872, %v2400
        %v2657 = vadd.f32 %v1873, %v2401
        %v2658 = vadd.f32 %v1874, %v2402
        %v2659 = vadd.f32 %v1875, %v2403
        %v2660 = vadd.f32 %v1876, %v2404
        %v2661 = vadd.f32 %v1877, %v2405
        %v2662 = vadd.f32 %v1878, %v2406
        %v2663 = vadd.f32 %v1879, %v2407
        %v2664 = vadd.f32 %v1880, %v2408
        %v2665 = vadd.f32 %v1881, %v2409
        %v2666 = vadd.f32 %v1882, %v2410
        %v2667 = vadd.f32 %v1883, %v2411
        %v2668 = vadd.f32 %v1884, %v2412
        %v2669 = vadd.f32 %v1885, %v2413
        %v2670 = vadd.f32 %v1886, %v2414
        %v2671 = vadd.f32 %v1887, %v2415
        %v2672 = vadd.f32 %v1888, %v2416
        %v2673 = vadd.f32 %v1889, %v2417
        %v2674 = vadd.f32 %v1890, %v2418
        %v2675 = vadd.f32 %v1891, %v2419
        %v2676 = vadd.f32 %v1892, %v2420
        %v2677 = vadd.f32 %v1893, %v2421
        %v2678 = vadd.f32 %v1894, %v2422
        %v2679 = vadd.f32 %v1895, %v2423
        %v2680 = vadd.f32 %v1896, %v2424
        %v2681 = vadd.f32 %v1897, %v2425
        %v2682 = vadd.f32 %v1898, %v2426
        %v2683 = vadd.f32 %v1899, %v2427
        %v2684 = vadd.f32 %v1900, %v2428
        %v2685 = vadd.f32 %v1901, %v2429
        %v2686 = vadd.f32 %v1902, %v2430
        %v2687 = vadd.f32 %v1903, %v2431
        %v2688 = vadd.f32 %v1904, %v2432
        %v2689 = vadd.f32 %v1905, %v2433
        %v2690 = vadd.f32 %v1906, %v2434
        %v2691 = vadd.f32 %v1907, %v2435
        %v2692 = vadd.f32 %v1908, %v2436
        %v2693 = vadd.f32 %v1909, %v2437
        %v2694 = vadd.f32 %v1910, %v2438
        %v2695 = vadd.f32 %v1911, %v2439
        %v2696 = vadd.f32 %v1912, %v2440
        %v2697 = vadd.f32 %v1913, %v2441
        %v2698 = vadd.f32 %v1914, %v2442
        %v2699 = vadd.f32 %v1915, %v2443
        %v2700 = vadd.f32 %v1916, %v2444
        %v2701 = vadd.f32 %v1917, %v2445
        %v2702 = vadd.f32 %v1918, %v2446
        %v2703 = vadd.f32 %v1919, %v2447
        %v2704 = vadd.f32 %v1920, %v2448
        %v2705 = vadd.f32 %v1921, %v2449
        %v2706 = vadd.f32 %v1922, %v2450
        %v2707 = vadd.f32 %v1923, %v2451
        %v2708 = vadd.f32 %v1924, %v2452
        %v2709 = vadd.f32 %v1925, %v2453
        %v2710 = vadd.f32 %v1926, %v2454
        %v2711 = vadd.f32 %v1927, %v2455
        %v2712 = vadd.f32 %v1928, %v2456
        %v2713 = vadd.f32 %v1929, %v2457
        %v2714 = vadd.f32 %v1930, %v2458
        %v2715 = vadd.f32 %v1931, %v2459
        %v2716 = vadd.f32 %v1932, %v2460
        %v2717 = vadd.f32 %v1933, %v2461
        %v2718 = vadd.f32 %v1934, %v2462
        %v2719 = vadd.f32 %v1935, %v2463
        %v2720 = vadd.f32 %v1936, %v2464
        %v2721 = vadd.f32 %v1937, %v2465
        %v2722 = vadd.f32 %v1938, %v2466
        %v2723 = vadd.f32 %v1939, %v2467
        %v2724 = vadd.f32 %v1940, %v2468
        %v2725 = vadd.f32 %v1941, %v2469
        %v2726 = vadd.f32 %v1942, %v2470
        %v2727 = vadd.f32 %v1943, %v2471
        %v2728 = vadd.f32 %v1944, %v2472
        %v2729 = vadd.f32 %v1945, %v2473
        %v2730 = vadd.f32 %v1946, %v2474
        %v2731 = vadd.f32 %v1947, %v2475
        %v2732 = vadd.f32 %v1948, %v2476
        %v2733 = vadd.f32 %v1949, %v2477
        %v2734 = vadd.f32 %v1950, %v2478
        %v2735 = vadd.f32 %v1951, %v2479
        %v2736 = vadd.f32 %v1952, %v2480
        %v2737 = vadd.f32 %v1953, %v2481
        %v2738 = vadd.f32 %v1954, %v2482
        %v2739 = vadd.f32 %v1955, %v2483
        %v2740 = vadd.f32 %v1956, %v2484
        %v2741 = vadd.f32 %v1957, %v2485
        %v2742 = vadd.f32 %v1958, %v2486
        %v2743 = vadd.f32 %v1959, %v2487
        %v2744 = vadd.f32 %v1960, %v2488
        %v2745 = vadd.f32 %v1961, %v2489
        %v2746 = vadd.f32 %v1962, %v2490
        %v2747 = vadd.f32 %v1963, %v2491
        %v2748 = vadd.f32 %v1964, %v2492
        %v2749 = vadd.f32 %v1965, %v2493
        %v2750 = vadd.f32 %v1966, %v2494
        %v2751 = vadd.f32 %v1967, %v2495
        %v2752 = vmax.f32 %v2496, %v2497
        %v2753 = vmax.f32 %v2752, %v2498
        %v2754 = vmax.f32 %v2753, %v2499
        %2755 = vmax.xlane.f32.xlu0 %v2754
        %v2756 = vpop.xlane.xlu0 %2755
        %v2757 = vmax.f32 %v2500, %v2501
        %v2758 = vmax.f32 %v2757, %v2502
        %v2759 = vmax.f32 %v2758, %v2503
        %2760 = vmax.xlane.f32.xlu0 %v2759
        %v2761 = vpop.xlane.xlu0 %2760
        %v2762 = vmax.f32 %v2504, %v2505
        %v2763 = vmax.f32 %v2762, %v2506
        %v2764 = vmax.f32 %v2763, %v2507
        %2765 = vmax.xlane.f32.xlu0 %v2764
        %v2766 = vpop.xlane.xlu0 %2765
        %v2767 = vmax.f32 %v2508, %v2509
        %v2768 = vmax.f32 %v2767, %v2510
        %v2769 = vmax.f32 %v2768, %v2511
        %2770 = vmax.xlane.f32.xlu0 %v2769
        %v2771 = vpop.xlane.xlu0 %2770
        %v2772 = vmax.f32 %v2512, %v2513
        %v2773 = vmax.f32 %v2772, %v2514
        %v2774 = vmax.f32 %v2773, %v2515
        %2775 = vmax.xlane.f32.xlu0 %v2774
        %v2776 = vpop.xlane.xlu0 %2775
        %v2777 = vmax.f32 %v2516, %v2517
        %v2778 = vmax.f32 %v2777, %v2518
        %v2779 = vmax.f32 %v2778, %v2519
        %2780 = vmax.xlane.f32.xlu0 %v2779
        %v2781 = vpop.xlane.xlu0 %2780
        %v2782 = vmax.f32 %v2520, %v2521
        %v2783 = vmax.f32 %v2782, %v2522
        %v2784 = vmax.f32 %v2783, %v2523
        %2785 = vmax.xlane.f32.xlu0 %v2784
        %v2786 = vpop.xlane.xlu0 %2785
        %v2787 = vmax.f32 %v2524, %v2525
        %v2788 = vmax.f32 %v2787, %v2526
        %v2789 = vmax.f32 %v2788, %v2527
        %2790 = vmax.xlane.f32.xlu0 %v2789
        %v2791 = vpop.xlane.xlu0 %2790
        %v2792 = vmax.f32 %v2528, %v2529
        %v2793 = vmax.f32 %v2792, %v2530
        %v2794 = vmax.f32 %v2793, %v2531
        %2795 = vmax.xlane.f32.xlu0 %v2794
        %v2796 = vpop.xlane.xlu0 %2795
        %v2797 = vmax.f32 %v2532, %v2533
        %v2798 = vmax.f32 %v2797, %v2534
        %v2799 = vmax.f32 %v2798, %v2535
        %2800 = vmax.xlane.f32.xlu0 %v2799
        %v2801 = vpop.xlane.xlu0 %2800
        %v2802 = vmax.f32 %v2536, %v2537
        %v2803 = vmax.f32 %v2802, %v2538
        %v2804 = vmax.f32 %v2803, %v2539
        %2805 = vmax.xlane.f32.xlu0 %v2804
        %v2806 = vpop.xlane.xlu0 %2805
        %v2807 = vmax.f32 %v2540, %v2541
        %v2808 = vmax.f32 %v2807, %v2542
        %v2809 = vmax.f32 %v2808, %v2543
        %2810 = vmax.xlane.f32.xlu0 %v2809
        %v2811 = vpop.xlane.xlu0 %2810
        %v2812 = vmax.f32 %v2544, %v2545
        %v2813 = vmax.f32 %v2812, %v2546
        %v2814 = vmax.f32 %v2813, %v2547
        %2815 = vmax.xlane.f32.xlu0 %v2814
        %v2816 = vpop.xlane.xlu0 %2815
        %v2817 = vmax.f32 %v2548, %v2549
        %v2818 = vmax.f32 %v2817, %v2550
        %v2819 = vmax.f32 %v2818, %v2551
        %2820 = vmax.xlane.f32.xlu0 %v2819
        %v2821 = vpop.xlane.xlu0 %2820
        %v2822 = vmax.f32 %v2552, %v2553
        %v2823 = vmax.f32 %v2822, %v2554
        %v2824 = vmax.f32 %v2823, %v2555
        %2825 = vmax.xlane.f32.xlu0 %v2824
        %v2826 = vpop.xlane.xlu0 %2825
        %v2827 = vmax.f32 %v2556, %v2557
        %v2828 = vmax.f32 %v2827, %v2558
        %v2829 = vmax.f32 %v2828, %v2559
        %2830 = vmax.xlane.f32.xlu0 %v2829
        %v2831 = vpop.xlane.xlu0 %2830
        %v2832 = vmax.f32 %v2560, %v2561
        %v2833 = vmax.f32 %v2832, %v2562
        %v2834 = vmax.f32 %v2833, %v2563
        %2835 = vmax.xlane.f32.xlu0 %v2834
        %v2836 = vpop.xlane.xlu0 %2835
        %v2837 = vmax.f32 %v2564, %v2565
        %v2838 = vmax.f32 %v2837, %v2566
        %v2839 = vmax.f32 %v2838, %v2567
        %2840 = vmax.xlane.f32.xlu0 %v2839
        %v2841 = vpop.xlane.xlu0 %2840
        %v2842 = vmax.f32 %v2568, %v2569
        %v2843 = vmax.f32 %v2842, %v2570
        %v2844 = vmax.f32 %v2843, %v2571
        %2845 = vmax.xlane.f32.xlu0 %v2844
        %v2846 = vpop.xlane.xlu0 %2845
        %v2847 = vmax.f32 %v2572, %v2573
        %v2848 = vmax.f32 %v2847, %v2574
        %v2849 = vmax.f32 %v2848, %v2575
        %2850 = vmax.xlane.f32.xlu0 %v2849
        %v2851 = vpop.xlane.xlu0 %2850
        %v2852 = vmax.f32 %v2576, %v2577
        %v2853 = vmax.f32 %v2852, %v2578
        %v2854 = vmax.f32 %v2853, %v2579
        %2855 = vmax.xlane.f32.xlu0 %v2854
        %v2856 = vpop.xlane.xlu0 %2855
        %v2857 = vmax.f32 %v2580, %v2581
        %v2858 = vmax.f32 %v2857, %v2582
        %v2859 = vmax.f32 %v2858, %v2583
        %2860 = vmax.xlane.f32.xlu0 %v2859
        %v2861 = vpop.xlane.xlu0 %2860
        %v2862 = vmax.f32 %v2584, %v2585
        %v2863 = vmax.f32 %v2862, %v2586
        %v2864 = vmax.f32 %v2863, %v2587
        %2865 = vmax.xlane.f32.xlu0 %v2864
        %v2866 = vpop.xlane.xlu0 %2865
        %v2867 = vmax.f32 %v2588, %v2589
        %v2868 = vmax.f32 %v2867, %v2590
        %v2869 = vmax.f32 %v2868, %v2591
        %2870 = vmax.xlane.f32.xlu0 %v2869
        %v2871 = vpop.xlane.xlu0 %2870
        %v2872 = vmax.f32 %v2592, %v2593
        %v2873 = vmax.f32 %v2872, %v2594
        %v2874 = vmax.f32 %v2873, %v2595
        %2875 = vmax.xlane.f32.xlu0 %v2874
        %v2876 = vpop.xlane.xlu0 %2875
        %v2877 = vmax.f32 %v2596, %v2597
        %v2878 = vmax.f32 %v2877, %v2598
        %v2879 = vmax.f32 %v2878, %v2599
        %2880 = vmax.xlane.f32.xlu0 %v2879
        %v2881 = vpop.xlane.xlu0 %2880
        %v2882 = vmax.f32 %v2600, %v2601
        %v2883 = vmax.f32 %v2882, %v2602
        %v2884 = vmax.f32 %v2883, %v2603
        %2885 = vmax.xlane.f32.xlu0 %v2884
        %v2886 = vpop.xlane.xlu0 %2885
        %v2887 = vmax.f32 %v2604, %v2605
        %v2888 = vmax.f32 %v2887, %v2606
        %v2889 = vmax.f32 %v2888, %v2607
        %2890 = vmax.xlane.f32.xlu0 %v2889
        %v2891 = vpop.xlane.xlu0 %2890
        %v2892 = vmax.f32 %v2608, %v2609
        %v2893 = vmax.f32 %v2892, %v2610
        %v2894 = vmax.f32 %v2893, %v2611
        %2895 = vmax.xlane.f32.xlu0 %v2894
        %v2896 = vpop.xlane.xlu0 %2895
        %v2897 = vmax.f32 %v2612, %v2613
        %v2898 = vmax.f32 %v2897, %v2614
        %v2899 = vmax.f32 %v2898, %v2615
        %2900 = vmax.xlane.f32.xlu0 %v2899
        %v2901 = vpop.xlane.xlu0 %2900
        %v2902 = vmax.f32 %v2616, %v2617
        %v2903 = vmax.f32 %v2902, %v2618
        %v2904 = vmax.f32 %v2903, %v2619
        %2905 = vmax.xlane.f32.xlu0 %v2904
        %v2906 = vpop.xlane.xlu0 %2905
        %v2907 = vmax.f32 %v2620, %v2621
        %v2908 = vmax.f32 %v2907, %v2622
        %v2909 = vmax.f32 %v2908, %v2623
        %2910 = vmax.xlane.f32.xlu0 %v2909
        %v2911 = vpop.xlane.xlu0 %2910
        %v2912 = vmax.f32 %v2624, %v2625
        %v2913 = vmax.f32 %v2912, %v2626
        %v2914 = vmax.f32 %v2913, %v2627
        %2915 = vmax.xlane.f32.xlu0 %v2914
        %v2916 = vpop.xlane.xlu0 %2915
        %v2917 = vmax.f32 %v2628, %v2629
        %v2918 = vmax.f32 %v2917, %v2630
        %v2919 = vmax.f32 %v2918, %v2631
        %2920 = vmax.xlane.f32.xlu0 %v2919
        %v2921 = vpop.xlane.xlu0 %2920
        %v2922 = vmax.f32 %v2632, %v2633
        %v2923 = vmax.f32 %v2922, %v2634
        %v2924 = vmax.f32 %v2923, %v2635
        %2925 = vmax.xlane.f32.xlu0 %v2924
        %v2926 = vpop.xlane.xlu0 %2925
        %v2927 = vmax.f32 %v2636, %v2637
        %v2928 = vmax.f32 %v2927, %v2638
        %v2929 = vmax.f32 %v2928, %v2639
        %2930 = vmax.xlane.f32.xlu0 %v2929
        %v2931 = vpop.xlane.xlu0 %2930
        %v2932 = vmax.f32 %v2640, %v2641
        %v2933 = vmax.f32 %v2932, %v2642
        %v2934 = vmax.f32 %v2933, %v2643
        %2935 = vmax.xlane.f32.xlu0 %v2934
        %v2936 = vpop.xlane.xlu0 %2935
        %v2937 = vmax.f32 %v2644, %v2645
        %v2938 = vmax.f32 %v2937, %v2646
        %v2939 = vmax.f32 %v2938, %v2647
        %2940 = vmax.xlane.f32.xlu0 %v2939
        %v2941 = vpop.xlane.xlu0 %2940
        %v2942 = vmax.f32 %v2648, %v2649
        %v2943 = vmax.f32 %v2942, %v2650
        %v2944 = vmax.f32 %v2943, %v2651
        %2945 = vmax.xlane.f32.xlu0 %v2944
        %v2946 = vpop.xlane.xlu0 %2945
        %v2947 = vmax.f32 %v2652, %v2653
        %v2948 = vmax.f32 %v2947, %v2654
        %v2949 = vmax.f32 %v2948, %v2655
        %2950 = vmax.xlane.f32.xlu0 %v2949
        %v2951 = vpop.xlane.xlu0 %2950
        %v2952 = vmax.f32 %v2656, %v2657
        %v2953 = vmax.f32 %v2952, %v2658
        %v2954 = vmax.f32 %v2953, %v2659
        %2955 = vmax.xlane.f32.xlu0 %v2954
        %v2956 = vpop.xlane.xlu0 %2955
        %v2957 = vmax.f32 %v2660, %v2661
        %v2958 = vmax.f32 %v2957, %v2662
        %v2959 = vmax.f32 %v2958, %v2663
        %2960 = vmax.xlane.f32.xlu0 %v2959
        %v2961 = vpop.xlane.xlu0 %2960
        %v2962 = vmax.f32 %v2664, %v2665
        %v2963 = vmax.f32 %v2962, %v2666
        %v2964 = vmax.f32 %v2963, %v2667
        %2965 = vmax.xlane.f32.xlu0 %v2964
        %v2966 = vpop.xlane.xlu0 %2965
        %v2967 = vmax.f32 %v2668, %v2669
        %v2968 = vmax.f32 %v2967, %v2670
        %v2969 = vmax.f32 %v2968, %v2671
        %2970 = vmax.xlane.f32.xlu0 %v2969
        %v2971 = vpop.xlane.xlu0 %2970
        %v2972 = vmax.f32 %v2672, %v2673
        %v2973 = vmax.f32 %v2972, %v2674
        %v2974 = vmax.f32 %v2973, %v2675
        %2975 = vmax.xlane.f32.xlu0 %v2974
        %v2976 = vpop.xlane.xlu0 %2975
        %v2977 = vmax.f32 %v2676, %v2677
        %v2978 = vmax.f32 %v2977, %v2678
        %v2979 = vmax.f32 %v2978, %v2679
        %2980 = vmax.xlane.f32.xlu0 %v2979
        %v2981 = vpop.xlane.xlu0 %2980
        %v2982 = vmax.f32 %v2680, %v2681
        %v2983 = vmax.f32 %v2982, %v2682
        %v2984 = vmax.f32 %v2983, %v2683
        %2985 = vmax.xlane.f32.xlu0 %v2984
        %v2986 = vpop.xlane.xlu0 %2985
        %v2987 = vmax.f32 %v2684, %v2685
        %v2988 = vmax.f32 %v2987, %v2686
        %v2989 = vmax.f32 %v2988, %v2687
        %2990 = vmax.xlane.f32.xlu0 %v2989
        %v2991 = vpop.xlane.xlu0 %2990
        %v2992 = vmax.f32 %v2688, %v2689
        %v2993 = vmax.f32 %v2992, %v2690
        %v2994 = vmax.f32 %v2993, %v2691
        %2995 = vmax.xlane.f32.xlu0 %v2994
        %v2996 = vpop.xlane.xlu0 %2995
        %v2997 = vmax.f32 %v2692, %v2693
        %v2998 = vmax.f32 %v2997, %v2694
        %v2999 = vmax.f32 %v2998, %v2695
        %3000 = vmax.xlane.f32.xlu0 %v2999
        %v3001 = vpop.xlane.xlu0 %3000
        %v3002 = vmax.f32 %v2696, %v2697
        %v3003 = vmax.f32 %v3002, %v2698
        %v3004 = vmax.f32 %v3003, %v2699
        %3005 = vmax.xlane.f32.xlu0 %v3004
        %v3006 = vpop.xlane.xlu0 %3005
        %v3007 = vmax.f32 %v2700, %v2701
        %v3008 = vmax.f32 %v3007, %v2702
        %v3009 = vmax.f32 %v3008, %v2703
        %3010 = vmax.xlane.f32.xlu0 %v3009
        %v3011 = vpop.xlane.xlu0 %3010
        %v3012 = vmax.f32 %v2704, %v2705
        %v3013 = vmax.f32 %v3012, %v2706
        %v3014 = vmax.f32 %v3013, %v2707
        %3015 = vmax.xlane.f32.xlu0 %v3014
        %v3016 = vpop.xlane.xlu0 %3015
        %v3017 = vmax.f32 %v2708, %v2709
        %v3018 = vmax.f32 %v3017, %v2710
        %v3019 = vmax.f32 %v3018, %v2711
        %3020 = vmax.xlane.f32.xlu0 %v3019
        %v3021 = vpop.xlane.xlu0 %3020
        %v3022 = vmax.f32 %v2712, %v2713
        %v3023 = vmax.f32 %v3022, %v2714
        %v3024 = vmax.f32 %v3023, %v2715
        %3025 = vmax.xlane.f32.xlu0 %v3024
        %v3026 = vpop.xlane.xlu0 %3025
        %v3027 = vmax.f32 %v2716, %v2717
        %v3028 = vmax.f32 %v3027, %v2718
        %v3029 = vmax.f32 %v3028, %v2719
        %3030 = vmax.xlane.f32.xlu0 %v3029
        %v3031 = vpop.xlane.xlu0 %3030
        %v3032 = vmax.f32 %v2720, %v2721
        %v3033 = vmax.f32 %v3032, %v2722
        %v3034 = vmax.f32 %v3033, %v2723
        %3035 = vmax.xlane.f32.xlu0 %v3034
        %v3036 = vpop.xlane.xlu0 %3035
        %v3037 = vmax.f32 %v2724, %v2725
        %v3038 = vmax.f32 %v3037, %v2726
        %v3039 = vmax.f32 %v3038, %v2727
        %3040 = vmax.xlane.f32.xlu0 %v3039
        %v3041 = vpop.xlane.xlu0 %3040
        %v3042 = vmax.f32 %v2728, %v2729
        %v3043 = vmax.f32 %v3042, %v2730
        %v3044 = vmax.f32 %v3043, %v2731
        %3045 = vmax.xlane.f32.xlu0 %v3044
        %v3046 = vpop.xlane.xlu0 %3045
        %v3047 = vmax.f32 %v2732, %v2733
        %v3048 = vmax.f32 %v3047, %v2734
        %v3049 = vmax.f32 %v3048, %v2735
        %3050 = vmax.xlane.f32.xlu0 %v3049
        %v3051 = vpop.xlane.xlu0 %3050
        %v3052 = vmax.f32 %v2736, %v2737
        %v3053 = vmax.f32 %v3052, %v2738
        %v3054 = vmax.f32 %v3053, %v2739
        %3055 = vmax.xlane.f32.xlu0 %v3054
        %v3056 = vpop.xlane.xlu0 %3055
        %v3057 = vmax.f32 %v2740, %v2741
        %v3058 = vmax.f32 %v3057, %v2742
        %v3059 = vmax.f32 %v3058, %v2743
        %3060 = vmax.xlane.f32.xlu0 %v3059
        %v3061 = vpop.xlane.xlu0 %3060
        %v3062 = vmax.f32 %v2744, %v2745
        %v3063 = vmax.f32 %v3062, %v2746
        %v3064 = vmax.f32 %v3063, %v2747
        %3065 = vmax.xlane.f32.xlu0 %v3064
        %v3066 = vpop.xlane.xlu0 %3065
        %v3067 = vmax.f32 %v2748, %v2749
        %v3068 = vmax.f32 %v3067, %v2750
        %v3069 = vmax.f32 %v3068, %v2751
        %3070 = vmax.xlane.f32.xlu0 %v3069
        %v3071 = vpop.xlane.xlu0 %3070
        %v3072 = vsub.f32 %v2496, %v2756
        %v3073 = vsub.f32 %v2497, %v2756
        %v3074 = vsub.f32 %v2498, %v2756
        %v3075 = vsub.f32 %v2499, %v2756
        %v3076 = vsub.f32 %v2500, %v2761
        %v3077 = vsub.f32 %v2501, %v2761
        %v3078 = vsub.f32 %v2502, %v2761
        %v3079 = vsub.f32 %v2503, %v2761
        %v3080 = vsub.f32 %v2504, %v2766
        %v3081 = vsub.f32 %v2505, %v2766
        %v3082 = vsub.f32 %v2506, %v2766
        %v3083 = vsub.f32 %v2507, %v2766
        %v3084 = vsub.f32 %v2508, %v2771
        %v3085 = vsub.f32 %v2509, %v2771
        %v3086 = vsub.f32 %v2510, %v2771
        %v3087 = vsub.f32 %v2511, %v2771
        %v3088 = vsub.f32 %v2512, %v2776
        %v3089 = vsub.f32 %v2513, %v2776
        %v3090 = vsub.f32 %v2514, %v2776
        %v3091 = vsub.f32 %v2515, %v2776
        %v3092 = vsub.f32 %v2516, %v2781
        %v3093 = vsub.f32 %v2517, %v2781
        %v3094 = vsub.f32 %v2518, %v2781
        %v3095 = vsub.f32 %v2519, %v2781
        %v3096 = vsub.f32 %v2520, %v2786
        %v3097 = vsub.f32 %v2521, %v2786
        %v3098 = vsub.f32 %v2522, %v2786
        %v3099 = vsub.f32 %v2523, %v2786
        %v3100 = vsub.f32 %v2524, %v2791
        %v3101 = vsub.f32 %v2525, %v2791
        %v3102 = vsub.f32 %v2526, %v2791
        %v3103 = vsub.f32 %v2527, %v2791
        %v3104 = vsub.f32 %v2528, %v2796
        %v3105 = vsub.f32 %v2529, %v2796
        %v3106 = vsub.f32 %v2530, %v2796
        %v3107 = vsub.f32 %v2531, %v2796
        %v3108 = vsub.f32 %v2532, %v2801
        %v3109 = vsub.f32 %v2533, %v2801
        %v3110 = vsub.f32 %v2534, %v2801
        %v3111 = vsub.f32 %v2535, %v2801
        %v3112 = vsub.f32 %v2536, %v2806
        %v3113 = vsub.f32 %v2537, %v2806
        %v3114 = vsub.f32 %v2538, %v2806
        %v3115 = vsub.f32 %v2539, %v2806
        %v3116 = vsub.f32 %v2540, %v2811
        %v3117 = vsub.f32 %v2541, %v2811
        %v3118 = vsub.f32 %v2542, %v2811
        %v3119 = vsub.f32 %v2543, %v2811
        %v3120 = vsub.f32 %v2544, %v2816
        %v3121 = vsub.f32 %v2545, %v2816
        %v3122 = vsub.f32 %v2546, %v2816
        %v3123 = vsub.f32 %v2547, %v2816
        %v3124 = vsub.f32 %v2548, %v2821
        %v3125 = vsub.f32 %v2549, %v2821
        %v3126 = vsub.f32 %v2550, %v2821
        %v3127 = vsub.f32 %v2551, %v2821
        %v3128 = vsub.f32 %v2552, %v2826
        %v3129 = vsub.f32 %v2553, %v2826
        %v3130 = vsub.f32 %v2554, %v2826
        %v3131 = vsub.f32 %v2555, %v2826
        %v3132 = vsub.f32 %v2556, %v2831
        %v3133 = vsub.f32 %v2557, %v2831
        %v3134 = vsub.f32 %v2558, %v2831
        %v3135 = vsub.f32 %v2559, %v2831
        %v3136 = vsub.f32 %v2560, %v2836
        %v3137 = vsub.f32 %v2561, %v2836
        %v3138 = vsub.f32 %v2562, %v2836
        %v3139 = vsub.f32 %v2563, %v2836
        %v3140 = vsub.f32 %v2564, %v2841
        %v3141 = vsub.f32 %v2565, %v2841
        %v3142 = vsub.f32 %v2566, %v2841
        %v3143 = vsub.f32 %v2567, %v2841
        %v3144 = vsub.f32 %v2568, %v2846
        %v3145 = vsub.f32 %v2569, %v2846
        %v3146 = vsub.f32 %v2570, %v2846
        %v3147 = vsub.f32 %v2571, %v2846
        %v3148 = vsub.f32 %v2572, %v2851
        %v3149 = vsub.f32 %v2573, %v2851
        %v3150 = vsub.f32 %v2574, %v2851
        %v3151 = vsub.f32 %v2575, %v2851
        %v3152 = vsub.f32 %v2576, %v2856
        %v3153 = vsub.f32 %v2577, %v2856
        %v3154 = vsub.f32 %v2578, %v2856
        %v3155 = vsub.f32 %v2579, %v2856
        %v3156 = vsub.f32 %v2580, %v2861
        %v3157 = vsub.f32 %v2581, %v2861
        %v3158 = vsub.f32 %v2582, %v2861
        %v3159 = vsub.f32 %v2583, %v2861
        %v3160 = vsub.f32 %v2584, %v2866
        %v3161 = vsub.f32 %v2585, %v2866
        %v3162 = vsub.f32 %v2586, %v2866
        %v3163 = vsub.f32 %v2587, %v2866
        %v3164 = vsub.f32 %v2588, %v2871
        %v3165 = vsub.f32 %v2589, %v2871
        %v3166 = vsub.f32 %v2590, %v2871
        %v3167 = vsub.f32 %v2591, %v2871
        %v3168 = vsub.f32 %v2592, %v2876
        %v3169 = vsub.f32 %v2593, %v2876
        %v3170 = vsub.f32 %v2594, %v2876
        %v3171 = vsub.f32 %v2595, %v2876
        %v3172 = vsub.f32 %v2596, %v2881
        %v3173 = vsub.f32 %v2597, %v2881
        %v3174 = vsub.f32 %v2598, %v2881
        %v3175 = vsub.f32 %v2599, %v2881
        %v3176 = vsub.f32 %v2600, %v2886
        %v3177 = vsub.f32 %v2601, %v2886
        %v3178 = vsub.f32 %v2602, %v2886
        %v3179 = vsub.f32 %v2603, %v2886
        %v3180 = vsub.f32 %v2604, %v2891
        %v3181 = vsub.f32 %v2605, %v2891
        %v3182 = vsub.f32 %v2606, %v2891
        %v3183 = vsub.f32 %v2607, %v2891
        %v3184 = vsub.f32 %v2608, %v2896
        %v3185 = vsub.f32 %v2609, %v2896
        %v3186 = vsub.f32 %v2610, %v2896
        %v3187 = vsub.f32 %v2611, %v2896
        %v3188 = vsub.f32 %v2612, %v2901
        %v3189 = vsub.f32 %v2613, %v2901
        %v3190 = vsub.f32 %v2614, %v2901
        %v3191 = vsub.f32 %v2615, %v2901
        %v3192 = vsub.f32 %v2616, %v2906
        %v3193 = vsub.f32 %v2617, %v2906
        %v3194 = vsub.f32 %v2618, %v2906
        %v3195 = vsub.f32 %v2619, %v2906
        %v3196 = vsub.f32 %v2620, %v2911
        %v3197 = vsub.f32 %v2621, %v2911
        %v3198 = vsub.f32 %v2622, %v2911
        %v3199 = vsub.f32 %v2623, %v2911
        %v3200 = vsub.f32 %v2624, %v2916
        %v3201 = vsub.f32 %v2625, %v2916
        %v3202 = vsub.f32 %v2626, %v2916
        %v3203 = vsub.f32 %v2627, %v2916
        %v3204 = vsub.f32 %v2628, %v2921
        %v3205 = vsub.f32 %v2629, %v2921
        %v3206 = vsub.f32 %v2630, %v2921
        %v3207 = vsub.f32 %v2631, %v2921
        %v3208 = vsub.f32 %v2632, %v2926
        %v3209 = vsub.f32 %v2633, %v2926
        %v3210 = vsub.f32 %v2634, %v2926
        %v3211 = vsub.f32 %v2635, %v2926
        %v3212 = vsub.f32 %v2636, %v2931
        %v3213 = vsub.f32 %v2637, %v2931
        %v3214 = vsub.f32 %v2638, %v2931
        %v3215 = vsub.f32 %v2639, %v2931
        %v3216 = vsub.f32 %v2640, %v2936
        %v3217 = vsub.f32 %v2641, %v2936
        %v3218 = vsub.f32 %v2642, %v2936
        %v3219 = vsub.f32 %v2643, %v2936
        %v3220 = vsub.f32 %v2644, %v2941
        %v3221 = vsub.f32 %v2645, %v2941
        %v3222 = vsub.f32 %v2646, %v2941
        %v3223 = vsub.f32 %v2647, %v2941
        %v3224 = vsub.f32 %v2648, %v2946
        %v3225 = vsub.f32 %v2649, %v2946
        %v3226 = vsub.f32 %v2650, %v2946
        %v3227 = vsub.f32 %v2651, %v2946
        %v3228 = vsub.f32 %v2652, %v2951
        %v3229 = vsub.f32 %v2653, %v2951
        %v3230 = vsub.f32 %v2654, %v2951
        %v3231 = vsub.f32 %v2655, %v2951
        %v3232 = vsub.f32 %v2656, %v2956
        %v3233 = vsub.f32 %v2657, %v2956
        %v3234 = vsub.f32 %v2658, %v2956
        %v3235 = vsub.f32 %v2659, %v2956
        %v3236 = vsub.f32 %v2660, %v2961
        %v3237 = vsub.f32 %v2661, %v2961
        %v3238 = vsub.f32 %v2662, %v2961
        %v3239 = vsub.f32 %v2663, %v2961
        %v3240 = vsub.f32 %v2664, %v2966
        %v3241 = vsub.f32 %v2665, %v2966
        %v3242 = vsub.f32 %v2666, %v2966
        %v3243 = vsub.f32 %v2667, %v2966
        %v3244 = vsub.f32 %v2668, %v2971
        %v3245 = vsub.f32 %v2669, %v2971
        %v3246 = vsub.f32 %v2670, %v2971
        %v3247 = vsub.f32 %v2671, %v2971
        %v3248 = vsub.f32 %v2672, %v2976
        %v3249 = vsub.f32 %v2673, %v2976
        %v3250 = vsub.f32 %v2674, %v2976
        %v3251 = vsub.f32 %v2675, %v2976
        %v3252 = vsub.f32 %v2676, %v2981
        %v3253 = vsub.f32 %v2677, %v2981
        %v3254 = vsub.f32 %v2678, %v2981
        %v3255 = vsub.f32 %v2679, %v2981
        %v3256 = vsub.f32 %v2680, %v2986
        %v3257 = vsub.f32 %v2681, %v2986
        %v3258 = vsub.f32 %v2682, %v2986
        %v3259 = vsub.f32 %v2683, %v2986
        %v3260 = vsub.f32 %v2684, %v2991
        %v3261 = vsub.f32 %v2685, %v2991
        %v3262 = vsub.f32 %v2686, %v2991
        %v3263 = vsub.f32 %v2687, %v2991
        %v3264 = vsub.f32 %v2688, %v2996
        %v3265 = vsub.f32 %v2689, %v2996
        %v3266 = vsub.f32 %v2690, %v2996
        %v3267 = vsub.f32 %v2691, %v2996
        %v3268 = vsub.f32 %v2692, %v3001
        %v3269 = vsub.f32 %v2693, %v3001
        %v3270 = vsub.f32 %v2694, %v3001
        %v3271 = vsub.f32 %v2695, %v3001
        %v3272 = vsub.f32 %v2696, %v3006
        %v3273 = vsub.f32 %v2697, %v3006
        %v3274 = vsub.f32 %v2698, %v3006
        %v3275 = vsub.f32 %v2699, %v3006
        %v3276 = vsub.f32 %v2700, %v3011
        %v3277 = vsub.f32 %v2701, %v3011
        %v3278 = vsub.f32 %v2702, %v3011
        %v3279 = vsub.f32 %v2703, %v3011
        %v3280 = vsub.f32 %v2704, %v3016
        %v3281 = vsub.f32 %v2705, %v3016
        %v3282 = vsub.f32 %v2706, %v3016
        %v3283 = vsub.f32 %v2707, %v3016
        %v3284 = vsub.f32 %v2708, %v3021
        %v3285 = vsub.f32 %v2709, %v3021
        %v3286 = vsub.f32 %v2710, %v3021
        %v3287 = vsub.f32 %v2711, %v3021
        %v3288 = vsub.f32 %v2712, %v3026
        %v3289 = vsub.f32 %v2713, %v3026
        %v3290 = vsub.f32 %v2714, %v3026
        %v3291 = vsub.f32 %v2715, %v3026
        %v3292 = vsub.f32 %v2716, %v3031
        %v3293 = vsub.f32 %v2717, %v3031
        %v3294 = vsub.f32 %v2718, %v3031
        %v3295 = vsub.f32 %v2719, %v3031
        %v3296 = vsub.f32 %v2720, %v3036
        %v3297 = vsub.f32 %v2721, %v3036
        %v3298 = vsub.f32 %v2722, %v3036
        %v3299 = vsub.f32 %v2723, %v3036
        %v3300 = vsub.f32 %v2724, %v3041
        %v3301 = vsub.f32 %v2725, %v3041
        %v3302 = vsub.f32 %v2726, %v3041
        %v3303 = vsub.f32 %v2727, %v3041
        %v3304 = vsub.f32 %v2728, %v3046
        %v3305 = vsub.f32 %v2729, %v3046
        %v3306 = vsub.f32 %v2730, %v3046
        %v3307 = vsub.f32 %v2731, %v3046
        %v3308 = vsub.f32 %v2732, %v3051
        %v3309 = vsub.f32 %v2733, %v3051
        %v3310 = vsub.f32 %v2734, %v3051
        %v3311 = vsub.f32 %v2735, %v3051
        %v3312 = vsub.f32 %v2736, %v3056
        %v3313 = vsub.f32 %v2737, %v3056
        %v3314 = vsub.f32 %v2738, %v3056
        %v3315 = vsub.f32 %v2739, %v3056
        %v3316 = vsub.f32 %v2740, %v3061
        %v3317 = vsub.f32 %v2741, %v3061
        %v3318 = vsub.f32 %v2742, %v3061
        %v3319 = vsub.f32 %v2743, %v3061
        %v3320 = vsub.f32 %v2744, %v3066
        %v3321 = vsub.f32 %v2745, %v3066
        %v3322 = vsub.f32 %v2746, %v3066
        %v3323 = vsub.f32 %v2747, %v3066
        %v3324 = vsub.f32 %v2748, %v3071
        %v3325 = vsub.f32 %v2749, %v3071
        %v3326 = vsub.f32 %v2750, %v3071
        %v3327 = vsub.f32 %v2751, %v3071
        %v3328 = vmul.f32 %v3072, 1.442695
        %v3329 = vpow.pop %v3328
        %v3330 = vmul.f32 %v3073, 1.442695
        %v3331 = vpow.pop %v3330
        %v3332 = vmul.f32 %v3074, 1.442695
        %v3333 = vpow.pop %v3332
        %v3334 = vmul.f32 %v3075, 1.442695
        %v3335 = vpow.pop %v3334
        %v3336 = vmul.f32 %v3076, 1.442695
        %v3337 = vpow.pop %v3336
        %v3338 = vmul.f32 %v3077, 1.442695
        %v3339 = vpow.pop %v3338
        %v3340 = vmul.f32 %v3078, 1.442695
        %v3341 = vpow.pop %v3340
        %v3342 = vmul.f32 %v3079, 1.442695
        %v3343 = vpow.pop %v3342
        %v3344 = vmul.f32 %v3080, 1.442695
        %v3345 = vpow.pop %v3344
        %v3346 = vmul.f32 %v3081, 1.442695
        %v3347 = vpow.pop %v3346
        %v3348 = vmul.f32 %v3082, 1.442695
        %v3349 = vpow.pop %v3348
        %v3350 = vmul.f32 %v3083, 1.442695
        %v3351 = vpow.pop %v3350
        %v3352 = vmul.f32 %v3084, 1.442695
        %v3353 = vpow.pop %v3352
        %v3354 = vmul.f32 %v3085, 1.442695
        %v3355 = vpow.pop %v3354
        %v3356 = vmul.f32 %v3086, 1.442695
        %v3357 = vpow.pop %v3356
        %v3358 = vmul.f32 %v3087, 1.442695
        %v3359 = vpow.pop %v3358
        %v3360 = vmul.f32 %v3088, 1.442695
        %v3361 = vpow.pop %v3360
        %v3362 = vmul.f32 %v3089, 1.442695
        %v3363 = vpow.pop %v3362
        %v3364 = vmul.f32 %v3090, 1.442695
        %v3365 = vpow.pop %v3364
        %v3366 = vmul.f32 %v3091, 1.442695
        %v3367 = vpow.pop %v3366
        %v3368 = vmul.f32 %v3092, 1.442695
        %v3369 = vpow.pop %v3368
        %v3370 = vmul.f32 %v3093, 1.442695
        %v3371 = vpow.pop %v3370
        %v3372 = vmul.f32 %v3094, 1.442695
        %v3373 = vpow.pop %v3372
        %v3374 = vmul.f32 %v3095, 1.442695
        %v3375 = vpow.pop %v3374
        %v3376 = vmul.f32 %v3096, 1.442695
        %v3377 = vpow.pop %v3376
        %v3378 = vmul.f32 %v3097, 1.442695
        %v3379 = vpow.pop %v3378
        %v3380 = vmul.f32 %v3098, 1.442695
        %v3381 = vpow.pop %v3380
        %v3382 = vmul.f32 %v3099, 1.442695
        %v3383 = vpow.pop %v3382
        %v3384 = vmul.f32 %v3100, 1.442695
        %v3385 = vpow.pop %v3384
        %v3386 = vmul.f32 %v3101, 1.442695
        %v3387 = vpow.pop %v3386
        %v3388 = vmul.f32 %v3102, 1.442695
        %v3389 = vpow.pop %v3388
        %v3390 = vmul.f32 %v3103, 1.442695
        %v3391 = vpow.pop %v3390
        %v3392 = vmul.f32 %v3104, 1.442695
        %v3393 = vpow.pop %v3392
        %v3394 = vmul.f32 %v3105, 1.442695
        %v3395 = vpow.pop %v3394
        %v3396 = vmul.f32 %v3106, 1.442695
        %v3397 = vpow.pop %v3396
        %v3398 = vmul.f32 %v3107, 1.442695
        %v3399 = vpow.pop %v3398
        %v3400 = vmul.f32 %v3108, 1.442695
        %v3401 = vpow.pop %v3400
        %v3402 = vmul.f32 %v3109, 1.442695
        %v3403 = vpow.pop %v3402
        %v3404 = vmul.f32 %v3110, 1.442695
        %v3405 = vpow.pop %v3404
        %v3406 = vmul.f32 %v3111, 1.442695
        %v3407 = vpow.pop %v3406
        %v3408 = vmul.f32 %v3112, 1.442695
        %v3409 = vpow.pop %v3408
        %v3410 = vmul.f32 %v3113, 1.442695
        %v3411 = vpow.pop %v3410
        %v3412 = vmul.f32 %v3114, 1.442695
        %v3413 = vpow.pop %v3412
        %v3414 = vmul.f32 %v3115, 1.442695
        %v3415 = vpow.pop %v3414
        %v3416 = vmul.f32 %v3116, 1.442695
        %v3417 = vpow.pop %v3416
        %v3418 = vmul.f32 %v3117, 1.442695
        %v3419 = vpow.pop %v3418
        %v3420 = vmul.f32 %v3118, 1.442695
        %v3421 = vpow.pop %v3420
        %v3422 = vmul.f32 %v3119, 1.442695
        %v3423 = vpow.pop %v3422
        %v3424 = vmul.f32 %v3120, 1.442695
        %v3425 = vpow.pop %v3424
        %v3426 = vmul.f32 %v3121, 1.442695
        %v3427 = vpow.pop %v3426
        %v3428 = vmul.f32 %v3122, 1.442695
        %v3429 = vpow.pop %v3428
        %v3430 = vmul.f32 %v3123, 1.442695
        %v3431 = vpow.pop %v3430
        %v3432 = vmul.f32 %v3124, 1.442695
        %v3433 = vpow.pop %v3432
        %v3434 = vmul.f32 %v3125, 1.442695
        %v3435 = vpow.pop %v3434
        %v3436 = vmul.f32 %v3126, 1.442695
        %v3437 = vpow.pop %v3436
        %v3438 = vmul.f32 %v3127, 1.442695
        %v3439 = vpow.pop %v3438
        %v3440 = vmul.f32 %v3128, 1.442695
        %v3441 = vpow.pop %v3440
        %v3442 = vmul.f32 %v3129, 1.442695
        %v3443 = vpow.pop %v3442
        %v3444 = vmul.f32 %v3130, 1.442695
        %v3445 = vpow.pop %v3444
        %v3446 = vmul.f32 %v3131, 1.442695
        %v3447 = vpow.pop %v3446
        %v3448 = vmul.f32 %v3132, 1.442695
        %v3449 = vpow.pop %v3448
        %v3450 = vmul.f32 %v3133, 1.442695
        %v3451 = vpow.pop %v3450
        %v3452 = vmul.f32 %v3134, 1.442695
        %v3453 = vpow.pop %v3452
        %v3454 = vmul.f32 %v3135, 1.442695
        %v3455 = vpow.pop %v3454
        %v3456 = vmul.f32 %v3136, 1.442695
        %v3457 = vpow.pop %v3456
        %v3458 = vmul.f32 %v3137, 1.442695
        %v3459 = vpow.pop %v3458
        %v3460 = vmul.f32 %v3138, 1.442695
        %v3461 = vpow.pop %v3460
        %v3462 = vmul.f32 %v3139, 1.442695
        %v3463 = vpow.pop %v3462
        %v3464 = vmul.f32 %v3140, 1.442695
        %v3465 = vpow.pop %v3464
        %v3466 = vmul.f32 %v3141, 1.442695
        %v3467 = vpow.pop %v3466
        %v3468 = vmul.f32 %v3142, 1.442695
        %v3469 = vpow.pop %v3468
        %v3470 = vmul.f32 %v3143, 1.442695
        %v3471 = vpow.pop %v3470
        %v3472 = vmul.f32 %v3144, 1.442695
        %v3473 = vpow.pop %v3472
        %v3474 = vmul.f32 %v3145, 1.442695
        %v3475 = vpow.pop %v3474
        %v3476 = vmul.f32 %v3146, 1.442695
        %v3477 = vpow.pop %v3476
        %v3478 = vmul.f32 %v3147, 1.442695
        %v3479 = vpow.pop %v3478
        %v3480 = vmul.f32 %v3148, 1.442695
        %v3481 = vpow.pop %v3480
        %v3482 = vmul.f32 %v3149, 1.442695
        %v3483 = vpow.pop %v3482
        %v3484 = vmul.f32 %v3150, 1.442695
        %v3485 = vpow.pop %v3484
        %v3486 = vmul.f32 %v3151, 1.442695
        %v3487 = vpow.pop %v3486
        %v3488 = vmul.f32 %v3152, 1.442695
        %v3489 = vpow.pop %v3488
        %v3490 = vmul.f32 %v3153, 1.442695
        %v3491 = vpow.pop %v3490
        %v3492 = vmul.f32 %v3154, 1.442695
        %v3493 = vpow.pop %v3492
        %v3494 = vmul.f32 %v3155, 1.442695
        %v3495 = vpow.pop %v3494
        %v3496 = vmul.f32 %v3156, 1.442695
        %v3497 = vpow.pop %v3496
        %v3498 = vmul.f32 %v3157, 1.442695
        %v3499 = vpow.pop %v3498
        %v3500 = vmul.f32 %v3158, 1.442695
        %v3501 = vpow.pop %v3500
        %v3502 = vmul.f32 %v3159, 1.442695
        %v3503 = vpow.pop %v3502
        %v3504 = vmul.f32 %v3160, 1.442695
        %v3505 = vpow.pop %v3504
        %v3506 = vmul.f32 %v3161, 1.442695
        %v3507 = vpow.pop %v3506
        %v3508 = vmul.f32 %v3162, 1.442695
        %v3509 = vpow.pop %v3508
        %v3510 = vmul.f32 %v3163, 1.442695
        %v3511 = vpow.pop %v3510
        %v3512 = vmul.f32 %v3164, 1.442695
        %v3513 = vpow.pop %v3512
        %v3514 = vmul.f32 %v3165, 1.442695
        %v3515 = vpow.pop %v3514
        %v3516 = vmul.f32 %v3166, 1.442695
        %v3517 = vpow.pop %v3516
        %v3518 = vmul.f32 %v3167, 1.442695
        %v3519 = vpow.pop %v3518
        %v3520 = vmul.f32 %v3168, 1.442695
        %v3521 = vpow.pop %v3520
        %v3522 = vmul.f32 %v3169, 1.442695
        %v3523 = vpow.pop %v3522
        %v3524 = vmul.f32 %v3170, 1.442695
        %v3525 = vpow.pop %v3524
        %v3526 = vmul.f32 %v3171, 1.442695
        %v3527 = vpow.pop %v3526
        %v3528 = vmul.f32 %v3172, 1.442695
        %v3529 = vpow.pop %v3528
        %v3530 = vmul.f32 %v3173, 1.442695
        %v3531 = vpow.pop %v3530
        %v3532 = vmul.f32 %v3174, 1.442695
        %v3533 = vpow.pop %v3532
        %v3534 = vmul.f32 %v3175, 1.442695
        %v3535 = vpow.pop %v3534
        %v3536 = vmul.f32 %v3176, 1.442695
        %v3537 = vpow.pop %v3536
        %v3538 = vmul.f32 %v3177, 1.442695
        %v3539 = vpow.pop %v3538
        %v3540 = vmul.f32 %v3178, 1.442695
        %v3541 = vpow.pop %v3540
        %v3542 = vmul.f32 %v3179, 1.442695
        %v3543 = vpow.pop %v3542
        %v3544 = vmul.f32 %v3180, 1.442695
        %v3545 = vpow.pop %v3544
        %v3546 = vmul.f32 %v3181, 1.442695
        %v3547 = vpow.pop %v3546
        %v3548 = vmul.f32 %v3182, 1.442695
        %v3549 = vpow.pop %v3548
        %v3550 = vmul.f32 %v3183, 1.442695
        %v3551 = vpow.pop %v3550
        %v3552 = vmul.f32 %v3184, 1.442695
        %v3553 = vpow.pop %v3552
        %v3554 = vmul.f32 %v3185, 1.442695
        %v3555 = vpow.pop %v3554
        %v3556 = vmul.f32 %v3186, 1.442695
        %v3557 = vpow.pop %v3556
        %v3558 = vmul.f32 %v3187, 1.442695
        %v3559 = vpow.pop %v3558
        %v3560 = vmul.f32 %v3188, 1.442695
        %v3561 = vpow.pop %v3560
        %v3562 = vmul.f32 %v3189, 1.442695
        %v3563 = vpow.pop %v3562
        %v3564 = vmul.f32 %v3190, 1.442695
        %v3565 = vpow.pop %v3564
        %v3566 = vmul.f32 %v3191, 1.442695
        %v3567 = vpow.pop %v3566
        %v3568 = vmul.f32 %v3192, 1.442695
        %v3569 = vpow.pop %v3568
        %v3570 = vmul.f32 %v3193, 1.442695
        %v3571 = vpow.pop %v3570
        %v3572 = vmul.f32 %v3194, 1.442695
        %v3573 = vpow.pop %v3572
        %v3574 = vmul.f32 %v3195, 1.442695
        %v3575 = vpow.pop %v3574
        %v3576 = vmul.f32 %v3196, 1.442695
        %v3577 = vpow.pop %v3576
        %v3578 = vmul.f32 %v3197, 1.442695
        %v3579 = vpow.pop %v3578
        %v3580 = vmul.f32 %v3198, 1.442695
        %v3581 = vpow.pop %v3580
        %v3582 = vmul.f32 %v3199, 1.442695
        %v3583 = vpow.pop %v3582
        %v3584 = vmul.f32 %v3200, 1.442695
        %v3585 = vpow.pop %v3584
        %v3586 = vmul.f32 %v3201, 1.442695
        %v3587 = vpow.pop %v3586
        %v3588 = vmul.f32 %v3202, 1.442695
        %v3589 = vpow.pop %v3588
        %v3590 = vmul.f32 %v3203, 1.442695
        %v3591 = vpow.pop %v3590
        %v3592 = vmul.f32 %v3204, 1.442695
        %v3593 = vpow.pop %v3592
        %v3594 = vmul.f32 %v3205, 1.442695
        %v3595 = vpow.pop %v3594
        %v3596 = vmul.f32 %v3206, 1.442695
        %v3597 = vpow.pop %v3596
        %v3598 = vmul.f32 %v3207, 1.442695
        %v3599 = vpow.pop %v3598
        %v3600 = vmul.f32 %v3208, 1.442695
        %v3601 = vpow.pop %v3600
        %v3602 = vmul.f32 %v3209, 1.442695
        %v3603 = vpow.pop %v3602
        %v3604 = vmul.f32 %v3210, 1.442695
        %v3605 = vpow.pop %v3604
        %v3606 = vmul.f32 %v3211, 1.442695
        %v3607 = vpow.pop %v3606
        %v3608 = vmul.f32 %v3212, 1.442695
        %v3609 = vpow.pop %v3608
        %v3610 = vmul.f32 %v3213, 1.442695
        %v3611 = vpow.pop %v3610
        %v3612 = vmul.f32 %v3214, 1.442695
        %v3613 = vpow.pop %v3612
        %v3614 = vmul.f32 %v3215, 1.442695
        %v3615 = vpow.pop %v3614
        %v3616 = vmul.f32 %v3216, 1.442695
        %v3617 = vpow.pop %v3616
        %v3618 = vmul.f32 %v3217, 1.442695
        %v3619 = vpow.pop %v3618
        %v3620 = vmul.f32 %v3218, 1.442695
        %v3621 = vpow.pop %v3620
        %v3622 = vmul.f32 %v3219, 1.442695
        %v3623 = vpow.pop %v3622
        %v3624 = vmul.f32 %v3220, 1.442695
        %v3625 = vpow.pop %v3624
        %v3626 = vmul.f32 %v3221, 1.442695
        %v3627 = vpow.pop %v3626
        %v3628 = vmul.f32 %v3222, 1.442695
        %v3629 = vpow.pop %v3628
        %v3630 = vmul.f32 %v3223, 1.442695
        %v3631 = vpow.pop %v3630
        %v3632 = vmul.f32 %v3224, 1.442695
        %v3633 = vpow.pop %v3632
        %v3634 = vmul.f32 %v3225, 1.442695
        %v3635 = vpow.pop %v3634
        %v3636 = vmul.f32 %v3226, 1.442695
        %v3637 = vpow.pop %v3636
        %v3638 = vmul.f32 %v3227, 1.442695
        %v3639 = vpow.pop %v3638
        %v3640 = vmul.f32 %v3228, 1.442695
        %v3641 = vpow.pop %v3640
        %v3642 = vmul.f32 %v3229, 1.442695
        %v3643 = vpow.pop %v3642
        %v3644 = vmul.f32 %v3230, 1.442695
        %v3645 = vpow.pop %v3644
        %v3646 = vmul.f32 %v3231, 1.442695
        %v3647 = vpow.pop %v3646
        %v3648 = vmul.f32 %v3232, 1.442695
        %v3649 = vpow.pop %v3648
        %v3650 = vmul.f32 %v3233, 1.442695
        %v3651 = vpow.pop %v3650
        %v3652 = vmul.f32 %v3234, 1.442695
        %v3653 = vpow.pop %v3652
        %v3654 = vmul.f32 %v3235, 1.442695
        %v3655 = vpow.pop %v3654
        %v3656 = vmul.f32 %v3236, 1.442695
        %v3657 = vpow.pop %v3656
        %v3658 = vmul.f32 %v3237, 1.442695
        %v3659 = vpow.pop %v3658
        %v3660 = vmul.f32 %v3238, 1.442695
        %v3661 = vpow.pop %v3660
        %v3662 = vmul.f32 %v3239, 1.442695
        %v3663 = vpow.pop %v3662
        %v3664 = vmul.f32 %v3240, 1.442695
        %v3665 = vpow.pop %v3664
        %v3666 = vmul.f32 %v3241, 1.442695
        %v3667 = vpow.pop %v3666
        %v3668 = vmul.f32 %v3242, 1.442695
        %v3669 = vpow.pop %v3668
        %v3670 = vmul.f32 %v3243, 1.442695
        %v3671 = vpow.pop %v3670
        %v3672 = vmul.f32 %v3244, 1.442695
        %v3673 = vpow.pop %v3672
        %v3674 = vmul.f32 %v3245, 1.442695
        %v3675 = vpow.pop %v3674
        %v3676 = vmul.f32 %v3246, 1.442695
        %v3677 = vpow.pop %v3676
        %v3678 = vmul.f32 %v3247, 1.442695
        %v3679 = vpow.pop %v3678
        %v3680 = vmul.f32 %v3248, 1.442695
        %v3681 = vpow.pop %v3680
        %v3682 = vmul.f32 %v3249, 1.442695
        %v3683 = vpow.pop %v3682
        %v3684 = vmul.f32 %v3250, 1.442695
        %v3685 = vpow.pop %v3684
        %v3686 = vmul.f32 %v3251, 1.442695
        %v3687 = vpow.pop %v3686
        %v3688 = vmul.f32 %v3252, 1.442695
        %v3689 = vpow.pop %v3688
        %v3690 = vmul.f32 %v3253, 1.442695
        %v3691 = vpow.pop %v3690
        %v3692 = vmul.f32 %v3254, 1.442695
        %v3693 = vpow.pop %v3692
        %v3694 = vmul.f32 %v3255, 1.442695
        %v3695 = vpow.pop %v3694
        %v3696 = vmul.f32 %v3256, 1.442695
        %v3697 = vpow.pop %v3696
        %v3698 = vmul.f32 %v3257, 1.442695
        %v3699 = vpow.pop %v3698
        %v3700 = vmul.f32 %v3258, 1.442695
        %v3701 = vpow.pop %v3700
        %v3702 = vmul.f32 %v3259, 1.442695
        %v3703 = vpow.pop %v3702
        %v3704 = vmul.f32 %v3260, 1.442695
        %v3705 = vpow.pop %v3704
        %v3706 = vmul.f32 %v3261, 1.442695
        %v3707 = vpow.pop %v3706
        %v3708 = vmul.f32 %v3262, 1.442695
        %v3709 = vpow.pop %v3708
        %v3710 = vmul.f32 %v3263, 1.442695
        %v3711 = vpow.pop %v3710
        %v3712 = vmul.f32 %v3264, 1.442695
        %v3713 = vpow.pop %v3712
        %v3714 = vmul.f32 %v3265, 1.442695
        %v3715 = vpow.pop %v3714
        %v3716 = vmul.f32 %v3266, 1.442695
        %v3717 = vpow.pop %v3716
        %v3718 = vmul.f32 %v3267, 1.442695
        %v3719 = vpow.pop %v3718
        %v3720 = vmul.f32 %v3268, 1.442695
        %v3721 = vpow.pop %v3720
        %v3722 = vmul.f32 %v3269, 1.442695
        %v3723 = vpow.pop %v3722
        %v3724 = vmul.f32 %v3270, 1.442695
        %v3725 = vpow.pop %v3724
        %v3726 = vmul.f32 %v3271, 1.442695
        %v3727 = vpow.pop %v3726
        %v3728 = vmul.f32 %v3272, 1.442695
        %v3729 = vpow.pop %v3728
        %v3730 = vmul.f32 %v3273, 1.442695
        %v3731 = vpow.pop %v3730
        %v3732 = vmul.f32 %v3274, 1.442695
        %v3733 = vpow.pop %v3732
        %v3734 = vmul.f32 %v3275, 1.442695
        %v3735 = vpow.pop %v3734
        %v3736 = vmul.f32 %v3276, 1.442695
        %v3737 = vpow.pop %v3736
        %v3738 = vmul.f32 %v3277, 1.442695
        %v3739 = vpow.pop %v3738
        %v3740 = vmul.f32 %v3278, 1.442695
        %v3741 = vpow.pop %v3740
        %v3742 = vmul.f32 %v3279, 1.442695
        %v3743 = vpow.pop %v3742
        %v3744 = vmul.f32 %v3280, 1.442695
        %v3745 = vpow.pop %v3744
        %v3746 = vmul.f32 %v3281, 1.442695
        %v3747 = vpow.pop %v3746
        %v3748 = vmul.f32 %v3282, 1.442695
        %v3749 = vpow.pop %v3748
        %v3750 = vmul.f32 %v3283, 1.442695
        %v3751 = vpow.pop %v3750
        %v3752 = vmul.f32 %v3284, 1.442695
        %v3753 = vpow.pop %v3752
        %v3754 = vmul.f32 %v3285, 1.442695
        %v3755 = vpow.pop %v3754
        %v3756 = vmul.f32 %v3286, 1.442695
        %v3757 = vpow.pop %v3756
        %v3758 = vmul.f32 %v3287, 1.442695
        %v3759 = vpow.pop %v3758
        %v3760 = vmul.f32 %v3288, 1.442695
        %v3761 = vpow.pop %v3760
        %v3762 = vmul.f32 %v3289, 1.442695
        %v3763 = vpow.pop %v3762
        %v3764 = vmul.f32 %v3290, 1.442695
        %v3765 = vpow.pop %v3764
        %v3766 = vmul.f32 %v3291, 1.442695
        %v3767 = vpow.pop %v3766
        %v3768 = vmul.f32 %v3292, 1.442695
        %v3769 = vpow.pop %v3768
        %v3770 = vmul.f32 %v3293, 1.442695
        %v3771 = vpow.pop %v3770
        %v3772 = vmul.f32 %v3294, 1.442695
        %v3773 = vpow.pop %v3772
        %v3774 = vmul.f32 %v3295, 1.442695
        %v3775 = vpow.pop %v3774
        %v3776 = vmul.f32 %v3296, 1.442695
        %v3777 = vpow.pop %v3776
        %v3778 = vmul.f32 %v3297, 1.442695
        %v3779 = vpow.pop %v3778
        %v3780 = vmul.f32 %v3298, 1.442695
        %v3781 = vpow.pop %v3780
        %v3782 = vmul.f32 %v3299, 1.442695
        %v3783 = vpow.pop %v3782
        %v3784 = vmul.f32 %v3300, 1.442695
        %v3785 = vpow.pop %v3784
        %v3786 = vmul.f32 %v3301, 1.442695
        %v3787 = vpow.pop %v3786
        %v3788 = vmul.f32 %v3302, 1.442695
        %v3789 = vpow.pop %v3788
        %v3790 = vmul.f32 %v3303, 1.442695
        %v3791 = vpow.pop %v3790
        %v3792 = vmul.f32 %v3304, 1.442695
        %v3793 = vpow.pop %v3792
        %v3794 = vmul.f32 %v3305, 1.442695
        %v3795 = vpow.pop %v3794
        %v3796 = vmul.f32 %v3306, 1.442695
        %v3797 = vpow.pop %v3796
        %v3798 = vmul.f32 %v3307, 1.442695
        %v3799 = vpow.pop %v3798
        %v3800 = vmul.f32 %v3308, 1.442695
        %v3801 = vpow.pop %v3800
        %v3802 = vmul.f32 %v3309, 1.442695
        %v3803 = vpow.pop %v3802
        %v3804 = vmul.f32 %v3310, 1.442695
        %v3805 = vpow.pop %v3804
        %v3806 = vmul.f32 %v3311, 1.442695
        %v3807 = vpow.pop %v3806
        %v3808 = vmul.f32 %v3312, 1.442695
        %v3809 = vpow.pop %v3808
        %v3810 = vmul.f32 %v3313, 1.442695
        %v3811 = vpow.pop %v3810
        %v3812 = vmul.f32 %v3314, 1.442695
        %v3813 = vpow.pop %v3812
        %v3814 = vmul.f32 %v3315, 1.442695
        %v3815 = vpow.pop %v3814
        %v3816 = vmul.f32 %v3316, 1.442695
        %v3817 = vpow.pop %v3816
        %v3818 = vmul.f32 %v3317, 1.442695
        %v3819 = vpow.pop %v3818
        %v3820 = vmul.f32 %v3318, 1.442695
        %v3821 = vpow.pop %v3820
        %v3822 = vmul.f32 %v3319, 1.442695
        %v3823 = vpow.pop %v3822
        %v3824 = vmul.f32 %v3320, 1.442695
        %v3825 = vpow.pop %v3824
        %v3826 = vmul.f32 %v3321, 1.442695
        %v3827 = vpow.pop %v3826
        %v3828 = vmul.f32 %v3322, 1.442695
        %v3829 = vpow.pop %v3828
        %v3830 = vmul.f32 %v3323, 1.442695
        %v3831 = vpow.pop %v3830
        %v3832 = vmul.f32 %v3324, 1.442695
        %v3833 = vpow.pop %v3832
        %v3834 = vmul.f32 %v3325, 1.442695
        %v3835 = vpow.pop %v3834
        %v3836 = vmul.f32 %v3326, 1.442695
        %v3837 = vpow.pop %v3836
        %v3838 = vmul.f32 %v3327, 1.442695
        %v3839 = vpow.pop %v3838
        %v3840 = vadd.f32 %v3329, %v3331
        %v3841 = vadd.f32 %v3840, %v3333
        %v3842 = vadd.f32 %v3841, %v3335
        %3843 = vadd.xlane.f32.xlu0 %v3842
        %v3844 = vpop.xlane.xlu0 %3843
        %v3845 = vadd.f32 %v3337, %v3339
        %v3846 = vadd.f32 %v3845, %v3341
        %v3847 = vadd.f32 %v3846, %v3343
        %3848 = vadd.xlane.f32.xlu0 %v3847
        %v3849 = vpop.xlane.xlu0 %3848
        %v3850 = vadd.f32 %v3345, %v3347
        %v3851 = vadd.f32 %v3850, %v3349
        %v3852 = vadd.f32 %v3851, %v3351
        %3853 = vadd.xlane.f32.xlu0 %v3852
        %v3854 = vpop.xlane.xlu0 %3853
        %v3855 = vadd.f32 %v3353, %v3355
        %v3856 = vadd.f32 %v3855, %v3357
        %v3857 = vadd.f32 %v3856, %v3359
        %3858 = vadd.xlane.f32.xlu0 %v3857
        %v3859 = vpop.xlane.xlu0 %3858
        %v3860 = vadd.f32 %v3361, %v3363
        %v3861 = vadd.f32 %v3860, %v3365
        %v3862 = vadd.f32 %v3861, %v3367
        %3863 = vadd.xlane.f32.xlu0 %v3862
        %v3864 = vpop.xlane.xlu0 %3863
        %v3865 = vadd.f32 %v3369, %v3371
        %v3866 = vadd.f32 %v3865, %v3373
        %v3867 = vadd.f32 %v3866, %v3375
        %3868 = vadd.xlane.f32.xlu0 %v3867
        %v3869 = vpop.xlane.xlu0 %3868
        %v3870 = vadd.f32 %v3377, %v3379
        %v3871 = vadd.f32 %v3870, %v3381
        %v3872 = vadd.f32 %v3871, %v3383
        %3873 = vadd.xlane.f32.xlu0 %v3872
        %v3874 = vpop.xlane.xlu0 %3873
        %v3875 = vadd.f32 %v3385, %v3387
        %v3876 = vadd.f32 %v3875, %v3389
        %v3877 = vadd.f32 %v3876, %v3391
        %3878 = vadd.xlane.f32.xlu0 %v3877
        %v3879 = vpop.xlane.xlu0 %3878
        %v3880 = vadd.f32 %v3393, %v3395
        %v3881 = vadd.f32 %v3880, %v3397
        %v3882 = vadd.f32 %v3881, %v3399
        %3883 = vadd.xlane.f32.xlu0 %v3882
        %v3884 = vpop.xlane.xlu0 %3883
        %v3885 = vadd.f32 %v3401, %v3403
        %v3886 = vadd.f32 %v3885, %v3405
        %v3887 = vadd.f32 %v3886, %v3407
        %3888 = vadd.xlane.f32.xlu0 %v3887
        %v3889 = vpop.xlane.xlu0 %3888
        %v3890 = vadd.f32 %v3409, %v3411
        %v3891 = vadd.f32 %v3890, %v3413
        %v3892 = vadd.f32 %v3891, %v3415
        %3893 = vadd.xlane.f32.xlu0 %v3892
        %v3894 = vpop.xlane.xlu0 %3893
        %v3895 = vadd.f32 %v3417, %v3419
        %v3896 = vadd.f32 %v3895, %v3421
        %v3897 = vadd.f32 %v3896, %v3423
        %3898 = vadd.xlane.f32.xlu0 %v3897
        %v3899 = vpop.xlane.xlu0 %3898
        %v3900 = vadd.f32 %v3425, %v3427
        %v3901 = vadd.f32 %v3900, %v3429
        %v3902 = vadd.f32 %v3901, %v3431
        %3903 = vadd.xlane.f32.xlu0 %v3902
        %v3904 = vpop.xlane.xlu0 %3903
        %v3905 = vadd.f32 %v3433, %v3435
        %v3906 = vadd.f32 %v3905, %v3437
        %v3907 = vadd.f32 %v3906, %v3439
        %3908 = vadd.xlane.f32.xlu0 %v3907
        %v3909 = vpop.xlane.xlu0 %3908
        %v3910 = vadd.f32 %v3441, %v3443
        %v3911 = vadd.f32 %v3910, %v3445
        %v3912 = vadd.f32 %v3911, %v3447
        %3913 = vadd.xlane.f32.xlu0 %v3912
        %v3914 = vpop.xlane.xlu0 %3913
        %v3915 = vadd.f32 %v3449, %v3451
        %v3916 = vadd.f32 %v3915, %v3453
        %v3917 = vadd.f32 %v3916, %v3455
        %3918 = vadd.xlane.f32.xlu0 %v3917
        %v3919 = vpop.xlane.xlu0 %3918
        %v3920 = vadd.f32 %v3457, %v3459
        %v3921 = vadd.f32 %v3920, %v3461
        %v3922 = vadd.f32 %v3921, %v3463
        %3923 = vadd.xlane.f32.xlu0 %v3922
        %v3924 = vpop.xlane.xlu0 %3923
        %v3925 = vadd.f32 %v3465, %v3467
        %v3926 = vadd.f32 %v3925, %v3469
        %v3927 = vadd.f32 %v3926, %v3471
        %3928 = vadd.xlane.f32.xlu0 %v3927
        %v3929 = vpop.xlane.xlu0 %3928
        %v3930 = vadd.f32 %v3473, %v3475
        %v3931 = vadd.f32 %v3930, %v3477
        %v3932 = vadd.f32 %v3931, %v3479
        %3933 = vadd.xlane.f32.xlu0 %v3932
        %v3934 = vpop.xlane.xlu0 %3933
        %v3935 = vadd.f32 %v3481, %v3483
        %v3936 = vadd.f32 %v3935, %v3485
        %v3937 = vadd.f32 %v3936, %v3487
        %3938 = vadd.xlane.f32.xlu0 %v3937
        %v3939 = vpop.xlane.xlu0 %3938
        %v3940 = vadd.f32 %v3489, %v3491
        %v3941 = vadd.f32 %v3940, %v3493
        %v3942 = vadd.f32 %v3941, %v3495
        %3943 = vadd.xlane.f32.xlu0 %v3942
        %v3944 = vpop.xlane.xlu0 %3943
        %v3945 = vadd.f32 %v3497, %v3499
        %v3946 = vadd.f32 %v3945, %v3501
        %v3947 = vadd.f32 %v3946, %v3503
        %3948 = vadd.xlane.f32.xlu0 %v3947
        %v3949 = vpop.xlane.xlu0 %3948
        %v3950 = vadd.f32 %v3505, %v3507
        %v3951 = vadd.f32 %v3950, %v3509
        %v3952 = vadd.f32 %v3951, %v3511
        %3953 = vadd.xlane.f32.xlu0 %v3952
        %v3954 = vpop.xlane.xlu0 %3953
        %v3955 = vadd.f32 %v3513, %v3515
        %v3956 = vadd.f32 %v3955, %v3517
        %v3957 = vadd.f32 %v3956, %v3519
        %3958 = vadd.xlane.f32.xlu0 %v3957
        %v3959 = vpop.xlane.xlu0 %3958
        %v3960 = vadd.f32 %v3521, %v3523
        %v3961 = vadd.f32 %v3960, %v3525
        %v3962 = vadd.f32 %v3961, %v3527
        %3963 = vadd.xlane.f32.xlu0 %v3962
        %v3964 = vpop.xlane.xlu0 %3963
        %v3965 = vadd.f32 %v3529, %v3531
        %v3966 = vadd.f32 %v3965, %v3533
        %v3967 = vadd.f32 %v3966, %v3535
        %3968 = vadd.xlane.f32.xlu0 %v3967
        %v3969 = vpop.xlane.xlu0 %3968
        %v3970 = vadd.f32 %v3537, %v3539
        %v3971 = vadd.f32 %v3970, %v3541
        %v3972 = vadd.f32 %v3971, %v3543
        %3973 = vadd.xlane.f32.xlu0 %v3972
        %v3974 = vpop.xlane.xlu0 %3973
        %v3975 = vadd.f32 %v3545, %v3547
        %v3976 = vadd.f32 %v3975, %v3549
        %v3977 = vadd.f32 %v3976, %v3551
        %3978 = vadd.xlane.f32.xlu0 %v3977
        %v3979 = vpop.xlane.xlu0 %3978
        %v3980 = vadd.f32 %v3553, %v3555
        %v3981 = vadd.f32 %v3980, %v3557
        %v3982 = vadd.f32 %v3981, %v3559
        %3983 = vadd.xlane.f32.xlu0 %v3982
        %v3984 = vpop.xlane.xlu0 %3983
        %v3985 = vadd.f32 %v3561, %v3563
        %v3986 = vadd.f32 %v3985, %v3565
        %v3987 = vadd.f32 %v3986, %v3567
        %3988 = vadd.xlane.f32.xlu0 %v3987
        %v3989 = vpop.xlane.xlu0 %3988
        %v3990 = vadd.f32 %v3569, %v3571
        %v3991 = vadd.f32 %v3990, %v3573
        %v3992 = vadd.f32 %v3991, %v3575
        %3993 = vadd.xlane.f32.xlu0 %v3992
        %v3994 = vpop.xlane.xlu0 %3993
        %v3995 = vadd.f32 %v3577, %v3579
        %v3996 = vadd.f32 %v3995, %v3581
        %v3997 = vadd.f32 %v3996, %v3583
        %3998 = vadd.xlane.f32.xlu0 %v3997
        %v3999 = vpop.xlane.xlu0 %3998
        %v4000 = vadd.f32 %v3585, %v3587
        %v4001 = vadd.f32 %v4000, %v3589
        %v4002 = vadd.f32 %v4001, %v3591
        %4003 = vadd.xlane.f32.xlu0 %v4002
        %v4004 = vpop.xlane.xlu0 %4003
        %v4005 = vadd.f32 %v3593, %v3595
        %v4006 = vadd.f32 %v4005, %v3597
        %v4007 = vadd.f32 %v4006, %v3599
        %4008 = vadd.xlane.f32.xlu0 %v4007
        %v4009 = vpop.xlane.xlu0 %4008
        %v4010 = vadd.f32 %v3601, %v3603
        %v4011 = vadd.f32 %v4010, %v3605
        %v4012 = vadd.f32 %v4011, %v3607
        %4013 = vadd.xlane.f32.xlu0 %v4012
        %v4014 = vpop.xlane.xlu0 %4013
        %v4015 = vadd.f32 %v3609, %v3611
        %v4016 = vadd.f32 %v4015, %v3613
        %v4017 = vadd.f32 %v4016, %v3615
        %4018 = vadd.xlane.f32.xlu0 %v4017
        %v4019 = vpop.xlane.xlu0 %4018
        %v4020 = vadd.f32 %v3617, %v3619
        %v4021 = vadd.f32 %v4020, %v3621
        %v4022 = vadd.f32 %v4021, %v3623
        %4023 = vadd.xlane.f32.xlu0 %v4022
        %v4024 = vpop.xlane.xlu0 %4023
        %v4025 = vadd.f32 %v3625, %v3627
        %v4026 = vadd.f32 %v4025, %v3629
        %v4027 = vadd.f32 %v4026, %v3631
        %4028 = vadd.xlane.f32.xlu0 %v4027
        %v4029 = vpop.xlane.xlu0 %4028
        %v4030 = vadd.f32 %v3633, %v3635
        %v4031 = vadd.f32 %v4030, %v3637
        %v4032 = vadd.f32 %v4031, %v3639
        %4033 = vadd.xlane.f32.xlu0 %v4032
        %v4034 = vpop.xlane.xlu0 %4033
        %v4035 = vadd.f32 %v3641, %v3643
        %v4036 = vadd.f32 %v4035, %v3645
        %v4037 = vadd.f32 %v4036, %v3647
        %4038 = vadd.xlane.f32.xlu0 %v4037
        %v4039 = vpop.xlane.xlu0 %4038
        %v4040 = vadd.f32 %v3649, %v3651
        %v4041 = vadd.f32 %v4040, %v3653
        %v4042 = vadd.f32 %v4041, %v3655
        %4043 = vadd.xlane.f32.xlu0 %v4042
        %v4044 = vpop.xlane.xlu0 %4043
        %v4045 = vadd.f32 %v3657, %v3659
        %v4046 = vadd.f32 %v4045, %v3661
        %v4047 = vadd.f32 %v4046, %v3663
        %4048 = vadd.xlane.f32.xlu0 %v4047
        %v4049 = vpop.xlane.xlu0 %4048
        %v4050 = vadd.f32 %v3665, %v3667
        %v4051 = vadd.f32 %v4050, %v3669
        %v4052 = vadd.f32 %v4051, %v3671
        %4053 = vadd.xlane.f32.xlu0 %v4052
        %v4054 = vpop.xlane.xlu0 %4053
        %v4055 = vadd.f32 %v3673, %v3675
        %v4056 = vadd.f32 %v4055, %v3677
        %v4057 = vadd.f32 %v4056, %v3679
        %4058 = vadd.xlane.f32.xlu0 %v4057
        %v4059 = vpop.xlane.xlu0 %4058
        %v4060 = vadd.f32 %v3681, %v3683
        %v4061 = vadd.f32 %v4060, %v3685
        %v4062 = vadd.f32 %v4061, %v3687
        %4063 = vadd.xlane.f32.xlu0 %v4062
        %v4064 = vpop.xlane.xlu0 %4063
        %v4065 = vadd.f32 %v3689, %v3691
        %v4066 = vadd.f32 %v4065, %v3693
        %v4067 = vadd.f32 %v4066, %v3695
        %4068 = vadd.xlane.f32.xlu0 %v4067
        %v4069 = vpop.xlane.xlu0 %4068
        %v4070 = vadd.f32 %v3697, %v3699
        %v4071 = vadd.f32 %v4070, %v3701
        %v4072 = vadd.f32 %v4071, %v3703
        %4073 = vadd.xlane.f32.xlu0 %v4072
        %v4074 = vpop.xlane.xlu0 %4073
        %v4075 = vadd.f32 %v3705, %v3707
        %v4076 = vadd.f32 %v4075, %v3709
        %v4077 = vadd.f32 %v4076, %v3711
        %4078 = vadd.xlane.f32.xlu0 %v4077
        %v4079 = vpop.xlane.xlu0 %4078
        %v4080 = vadd.f32 %v3713, %v3715
        %v4081 = vadd.f32 %v4080, %v3717
        %v4082 = vadd.f32 %v4081, %v3719
        %4083 = vadd.xlane.f32.xlu0 %v4082
        %v4084 = vpop.xlane.xlu0 %4083
        %v4085 = vadd.f32 %v3721, %v3723
        %v4086 = vadd.f32 %v4085, %v3725
        %v4087 = vadd.f32 %v4086, %v3727
        %4088 = vadd.xlane.f32.xlu0 %v4087
        %v4089 = vpop.xlane.xlu0 %4088
        %v4090 = vadd.f32 %v3729, %v3731
        %v4091 = vadd.f32 %v4090, %v3733
        %v4092 = vadd.f32 %v4091, %v3735
        %4093 = vadd.xlane.f32.xlu0 %v4092
        %v4094 = vpop.xlane.xlu0 %4093
        %v4095 = vadd.f32 %v3737, %v3739
        %v4096 = vadd.f32 %v4095, %v3741
        %v4097 = vadd.f32 %v4096, %v3743
        %4098 = vadd.xlane.f32.xlu0 %v4097
        %v4099 = vpop.xlane.xlu0 %4098
        %v4100 = vadd.f32 %v3745, %v3747
        %v4101 = vadd.f32 %v4100, %v3749
        %v4102 = vadd.f32 %v4101, %v3751
        %4103 = vadd.xlane.f32.xlu0 %v4102
        %v4104 = vpop.xlane.xlu0 %4103
        %v4105 = vadd.f32 %v3753, %v3755
        %v4106 = vadd.f32 %v4105, %v3757
        %v4107 = vadd.f32 %v4106, %v3759
        %4108 = vadd.xlane.f32.xlu0 %v4107
        %v4109 = vpop.xlane.xlu0 %4108
        %v4110 = vadd.f32 %v3761, %v3763
        %v4111 = vadd.f32 %v4110, %v3765
        %v4112 = vadd.f32 %v4111, %v3767
        %4113 = vadd.xlane.f32.xlu0 %v4112
        %v4114 = vpop.xlane.xlu0 %4113
        %v4115 = vadd.f32 %v3769, %v3771
        %v4116 = vadd.f32 %v4115, %v3773
        %v4117 = vadd.f32 %v4116, %v3775
        %4118 = vadd.xlane.f32.xlu0 %v4117
        %v4119 = vpop.xlane.xlu0 %4118
        %v4120 = vadd.f32 %v3777, %v3779
        %v4121 = vadd.f32 %v4120, %v3781
        %v4122 = vadd.f32 %v4121, %v3783
        %4123 = vadd.xlane.f32.xlu0 %v4122
        %v4124 = vpop.xlane.xlu0 %4123
        %v4125 = vadd.f32 %v3785, %v3787
        %v4126 = vadd.f32 %v4125, %v3789
        %v4127 = vadd.f32 %v4126, %v3791
        %4128 = vadd.xlane.f32.xlu0 %v4127
        %v4129 = vpop.xlane.xlu0 %4128
        %v4130 = vadd.f32 %v3793, %v3795
        %v4131 = vadd.f32 %v4130, %v3797
        %v4132 = vadd.f32 %v4131, %v3799
        %4133 = vadd.xlane.f32.xlu0 %v4132
        %v4134 = vpop.xlane.xlu0 %4133
        %v4135 = vadd.f32 %v3801, %v3803
        %v4136 = vadd.f32 %v4135, %v3805
        %v4137 = vadd.f32 %v4136, %v3807
        %4138 = vadd.xlane.f32.xlu0 %v4137
        %v4139 = vpop.xlane.xlu0 %4138
        %v4140 = vadd.f32 %v3809, %v3811
        %v4141 = vadd.f32 %v4140, %v3813
        %v4142 = vadd.f32 %v4141, %v3815
        %4143 = vadd.xlane.f32.xlu0 %v4142
        %v4144 = vpop.xlane.xlu0 %4143
        %v4145 = vadd.f32 %v3817, %v3819
        %v4146 = vadd.f32 %v4145, %v3821
        %v4147 = vadd.f32 %v4146, %v3823
        %4148 = vadd.xlane.f32.xlu0 %v4147
        %v4149 = vpop.xlane.xlu0 %4148
        %v4150 = vadd.f32 %v3825, %v3827
        %v4151 = vadd.f32 %v4150, %v3829
        %v4152 = vadd.f32 %v4151, %v3831
        %4153 = vadd.xlane.f32.xlu0 %v4152
        %v4154 = vpop.xlane.xlu0 %4153
        %v4155 = vadd.f32 %v3833, %v3835
        %v4156 = vadd.f32 %v4155, %v3837
        %v4157 = vadd.f32 %v4156, %v3839
        %4158 = vadd.xlane.f32.xlu0 %v4157
        %v4159 = vpop.xlane.xlu0 %4158
        %v4160 = vrcp.pop %v3844
        %v4161 = vrcp.pop %v3849
        %v4162 = vrcp.pop %v3854
        %v4163 = vrcp.pop %v3859
        %v4164 = vrcp.pop %v3864
        %v4165 = vrcp.pop %v3869
        %v4166 = vrcp.pop %v3874
        %v4167 = vrcp.pop %v3879
        %v4168 = vrcp.pop %v3884
        %v4169 = vrcp.pop %v3889
        %v4170 = vrcp.pop %v3894
        %v4171 = vrcp.pop %v3899
        %v4172 = vrcp.pop %v3904
        %v4173 = vrcp.pop %v3909
        %v4174 = vrcp.pop %v3914
        %v4175 = vrcp.pop %v3919
        %v4176 = vrcp.pop %v3924
        %v4177 = vrcp.pop %v3929
        %v4178 = vrcp.pop %v3934
        %v4179 = vrcp.pop %v3939
        %v4180 = vrcp.pop %v3944
        %v4181 = vrcp.pop %v3949
        %v4182 = vrcp.pop %v3954
        %v4183 = vrcp.pop %v3959
        %v4184 = vrcp.pop %v3964
        %v4185 = vrcp.pop %v3969
        %v4186 = vrcp.pop %v3974
        %v4187 = vrcp.pop %v3979
        %v4188 = vrcp.pop %v3984
        %v4189 = vrcp.pop %v3989
        %v4190 = vrcp.pop %v3994
        %v4191 = vrcp.pop %v3999
        %v4192 = vrcp.pop %v4004
        %v4193 = vrcp.pop %v4009
        %v4194 = vrcp.pop %v4014
        %v4195 = vrcp.pop %v4019
        %v4196 = vrcp.pop %v4024
        %v4197 = vrcp.pop %v4029
        %v4198 = vrcp.pop %v4034
        %v4199 = vrcp.pop %v4039
        %v4200 = vrcp.pop %v4044
        %v4201 = vrcp.pop %v4049
        %v4202 = vrcp.pop %v4054
        %v4203 = vrcp.pop %v4059
        %v4204 = vrcp.pop %v4064
        %v4205 = vrcp.pop %v4069
        %v4206 = vrcp.pop %v4074
        %v4207 = vrcp.pop %v4079
        %v4208 = vrcp.pop %v4084
        %v4209 = vrcp.pop %v4089
        %v4210 = vrcp.pop %v4094
        %v4211 = vrcp.pop %v4099
        %v4212 = vrcp.pop %v4104
        %v4213 = vrcp.pop %v4109
        %v4214 = vrcp.pop %v4114
        %v4215 = vrcp.pop %v4119
        %v4216 = vrcp.pop %v4124
        %v4217 = vrcp.pop %v4129
        %v4218 = vrcp.pop %v4134
        %v4219 = vrcp.pop %v4139
        %v4220 = vrcp.pop %v4144
        %v4221 = vrcp.pop %v4149
        %v4222 = vrcp.pop %v4154
        %v4223 = vrcp.pop %v4159
        %v4224 = vmul.f32 %v3329, %v4160
        %v4225 = vmul.f32 %v3331, %v4160
        %v4226 = vmul.f32 %v3333, %v4160
        %v4227 = vmul.f32 %v3335, %v4160
        %v4228 = vmul.f32 %v3337, %v4161
        %v4229 = vmul.f32 %v3339, %v4161
        %v4230 = vmul.f32 %v3341, %v4161
        %v4231 = vmul.f32 %v3343, %v4161
        %v4232 = vmul.f32 %v3345, %v4162
        %v4233 = vmul.f32 %v3347, %v4162
        %v4234 = vmul.f32 %v3349, %v4162
        %v4235 = vmul.f32 %v3351, %v4162
        %v4236 = vmul.f32 %v3353, %v4163
        %v4237 = vmul.f32 %v3355, %v4163
        %v4238 = vmul.f32 %v3357, %v4163
        %v4239 = vmul.f32 %v3359, %v4163
        %v4240 = vmul.f32 %v3361, %v4164
        %v4241 = vmul.f32 %v3363, %v4164
        %v4242 = vmul.f32 %v3365, %v4164
        %v4243 = vmul.f32 %v3367, %v4164
        %v4244 = vmul.f32 %v3369, %v4165
        %v4245 = vmul.f32 %v3371, %v4165
        %v4246 = vmul.f32 %v3373, %v4165
        %v4247 = vmul.f32 %v3375, %v4165
        %v4248 = vmul.f32 %v3377, %v4166
        %v4249 = vmul.f32 %v3379, %v4166
        %v4250 = vmul.f32 %v3381, %v4166
        %v4251 = vmul.f32 %v3383, %v4166
        %v4252 = vmul.f32 %v3385, %v4167
        %v4253 = vmul.f32 %v3387, %v4167
        %v4254 = vmul.f32 %v3389, %v4167
        %v4255 = vmul.f32 %v3391, %v4167
        %v4256 = vmul.f32 %v3393, %v4168
        %v4257 = vmul.f32 %v3395, %v4168
        %v4258 = vmul.f32 %v3397, %v4168
        %v4259 = vmul.f32 %v3399, %v4168
        %v4260 = vmul.f32 %v3401, %v4169
        %v4261 = vmul.f32 %v3403, %v4169
        %v4262 = vmul.f32 %v3405, %v4169
        %v4263 = vmul.f32 %v3407, %v4169
        %v4264 = vmul.f32 %v3409, %v4170
        %v4265 = vmul.f32 %v3411, %v4170
        %v4266 = vmul.f32 %v3413, %v4170
        %v4267 = vmul.f32 %v3415, %v4170
        %v4268 = vmul.f32 %v3417, %v4171
        %v4269 = vmul.f32 %v3419, %v4171
        %v4270 = vmul.f32 %v3421, %v4171
        %v4271 = vmul.f32 %v3423, %v4171
        %v4272 = vmul.f32 %v3425, %v4172
        %v4273 = vmul.f32 %v3427, %v4172
        %v4274 = vmul.f32 %v3429, %v4172
        %v4275 = vmul.f32 %v3431, %v4172
        %v4276 = vmul.f32 %v3433, %v4173
        %v4277 = vmul.f32 %v3435, %v4173
        %v4278 = vmul.f32 %v3437, %v4173
        %v4279 = vmul.f32 %v3439, %v4173
        %v4280 = vmul.f32 %v3441, %v4174
        %v4281 = vmul.f32 %v3443, %v4174
        %v4282 = vmul.f32 %v3445, %v4174
        %v4283 = vmul.f32 %v3447, %v4174
        %v4284 = vmul.f32 %v3449, %v4175
        %v4285 = vmul.f32 %v3451, %v4175
        %v4286 = vmul.f32 %v3453, %v4175
        %v4287 = vmul.f32 %v3455, %v4175
        %v4288 = vmul.f32 %v3457, %v4176
        %v4289 = vmul.f32 %v3459, %v4176
        %v4290 = vmul.f32 %v3461, %v4176
        %v4291 = vmul.f32 %v3463, %v4176
        %v4292 = vmul.f32 %v3465, %v4177
        %v4293 = vmul.f32 %v3467, %v4177
        %v4294 = vmul.f32 %v3469, %v4177
        %v4295 = vmul.f32 %v3471, %v4177
        %v4296 = vmul.f32 %v3473, %v4178
        %v4297 = vmul.f32 %v3475, %v4178
        %v4298 = vmul.f32 %v3477, %v4178
        %v4299 = vmul.f32 %v3479, %v4178
        %v4300 = vmul.f32 %v3481, %v4179
        %v4301 = vmul.f32 %v3483, %v4179
        %v4302 = vmul.f32 %v3485, %v4179
        %v4303 = vmul.f32 %v3487, %v4179
        %v4304 = vmul.f32 %v3489, %v4180
        %v4305 = vmul.f32 %v3491, %v4180
        %v4306 = vmul.f32 %v3493, %v4180
        %v4307 = vmul.f32 %v3495, %v4180
        %v4308 = vmul.f32 %v3497, %v4181
        %v4309 = vmul.f32 %v3499, %v4181
        %v4310 = vmul.f32 %v3501, %v4181
        %v4311 = vmul.f32 %v3503, %v4181
        %v4312 = vmul.f32 %v3505, %v4182
        %v4313 = vmul.f32 %v3507, %v4182
        %v4314 = vmul.f32 %v3509, %v4182
        %v4315 = vmul.f32 %v3511, %v4182
        %v4316 = vmul.f32 %v3513, %v4183
        %v4317 = vmul.f32 %v3515, %v4183
        %v4318 = vmul.f32 %v3517, %v4183
        %v4319 = vmul.f32 %v3519, %v4183
        %v4320 = vmul.f32 %v3521, %v4184
        %v4321 = vmul.f32 %v3523, %v4184
        %v4322 = vmul.f32 %v3525, %v4184
        %v4323 = vmul.f32 %v3527, %v4184
        %v4324 = vmul.f32 %v3529, %v4185
        %v4325 = vmul.f32 %v3531, %v4185
        %v4326 = vmul.f32 %v3533, %v4185
        %v4327 = vmul.f32 %v3535, %v4185
        %v4328 = vmul.f32 %v3537, %v4186
        %v4329 = vmul.f32 %v3539, %v4186
        %v4330 = vmul.f32 %v3541, %v4186
        %v4331 = vmul.f32 %v3543, %v4186
        %v4332 = vmul.f32 %v3545, %v4187
        %v4333 = vmul.f32 %v3547, %v4187
        %v4334 = vmul.f32 %v3549, %v4187
        %v4335 = vmul.f32 %v3551, %v4187
        %v4336 = vmul.f32 %v3553, %v4188
        %v4337 = vmul.f32 %v3555, %v4188
        %v4338 = vmul.f32 %v3557, %v4188
        %v4339 = vmul.f32 %v3559, %v4188
        %v4340 = vmul.f32 %v3561, %v4189
        %v4341 = vmul.f32 %v3563, %v4189
        %v4342 = vmul.f32 %v3565, %v4189
        %v4343 = vmul.f32 %v3567, %v4189
        %v4344 = vmul.f32 %v3569, %v4190
        %v4345 = vmul.f32 %v3571, %v4190
        %v4346 = vmul.f32 %v3573, %v4190
        %v4347 = vmul.f32 %v3575, %v4190
        %v4348 = vmul.f32 %v3577, %v4191
        %v4349 = vmul.f32 %v3579, %v4191
        %v4350 = vmul.f32 %v3581, %v4191
        %v4351 = vmul.f32 %v3583, %v4191
        %v4352 = vmul.f32 %v3585, %v4192
        %v4353 = vmul.f32 %v3587, %v4192
        %v4354 = vmul.f32 %v3589, %v4192
        %v4355 = vmul.f32 %v3591, %v4192
        %v4356 = vmul.f32 %v3593, %v4193
        %v4357 = vmul.f32 %v3595, %v4193
        %v4358 = vmul.f32 %v3597, %v4193
        %v4359 = vmul.f32 %v3599, %v4193
        %v4360 = vmul.f32 %v3601, %v4194
        %v4361 = vmul.f32 %v3603, %v4194
        %v4362 = vmul.f32 %v3605, %v4194
        %v4363 = vmul.f32 %v3607, %v4194
        %v4364 = vmul.f32 %v3609, %v4195
        %v4365 = vmul.f32 %v3611, %v4195
        %v4366 = vmul.f32 %v3613, %v4195
        %v4367 = vmul.f32 %v3615, %v4195
        %v4368 = vmul.f32 %v3617, %v4196
        %v4369 = vmul.f32 %v3619, %v4196
        %v4370 = vmul.f32 %v3621, %v4196
        %v4371 = vmul.f32 %v3623, %v4196
        %v4372 = vmul.f32 %v3625, %v4197
        %v4373 = vmul.f32 %v3627, %v4197
        %v4374 = vmul.f32 %v3629, %v4197
        %v4375 = vmul.f32 %v3631, %v4197
        %v4376 = vmul.f32 %v3633, %v4198
        %v4377 = vmul.f32 %v3635, %v4198
        %v4378 = vmul.f32 %v3637, %v4198
        %v4379 = vmul.f32 %v3639, %v4198
        %v4380 = vmul.f32 %v3641, %v4199
        %v4381 = vmul.f32 %v3643, %v4199
        %v4382 = vmul.f32 %v3645, %v4199
        %v4383 = vmul.f32 %v3647, %v4199
        %v4384 = vmul.f32 %v3649, %v4200
        %v4385 = vmul.f32 %v3651, %v4200
        %v4386 = vmul.f32 %v3653, %v4200
        %v4387 = vmul.f32 %v3655, %v4200
        %v4388 = vmul.f32 %v3657, %v4201
        %v4389 = vmul.f32 %v3659, %v4201
        %v4390 = vmul.f32 %v3661, %v4201
        %v4391 = vmul.f32 %v3663, %v4201
        %v4392 = vmul.f32 %v3665, %v4202
        %v4393 = vmul.f32 %v3667, %v4202
        %v4394 = vmul.f32 %v3669, %v4202
        %v4395 = vmul.f32 %v3671, %v4202
        %v4396 = vmul.f32 %v3673, %v4203
        %v4397 = vmul.f32 %v3675, %v4203
        %v4398 = vmul.f32 %v3677, %v4203
        %v4399 = vmul.f32 %v3679, %v4203
        %v4400 = vmul.f32 %v3681, %v4204
        %v4401 = vmul.f32 %v3683, %v4204
        %v4402 = vmul.f32 %v3685, %v4204
        %v4403 = vmul.f32 %v3687, %v4204
        %v4404 = vmul.f32 %v3689, %v4205
        %v4405 = vmul.f32 %v3691, %v4205
        %v4406 = vmul.f32 %v3693, %v4205
        %v4407 = vmul.f32 %v3695, %v4205
        %v4408 = vmul.f32 %v3697, %v4206
        %v4409 = vmul.f32 %v3699, %v4206
        %v4410 = vmul.f32 %v3701, %v4206
        %v4411 = vmul.f32 %v3703, %v4206
        %v4412 = vmul.f32 %v3705, %v4207
        %v4413 = vmul.f32 %v3707, %v4207
        %v4414 = vmul.f32 %v3709, %v4207
        %v4415 = vmul.f32 %v3711, %v4207
        %v4416 = vmul.f32 %v3713, %v4208
        %v4417 = vmul.f32 %v3715, %v4208
        %v4418 = vmul.f32 %v3717, %v4208
        %v4419 = vmul.f32 %v3719, %v4208
        %v4420 = vmul.f32 %v3721, %v4209
        %v4421 = vmul.f32 %v3723, %v4209
        %v4422 = vmul.f32 %v3725, %v4209
        %v4423 = vmul.f32 %v3727, %v4209
        %v4424 = vmul.f32 %v3729, %v4210
        %v4425 = vmul.f32 %v3731, %v4210
        %v4426 = vmul.f32 %v3733, %v4210
        %v4427 = vmul.f32 %v3735, %v4210
        %v4428 = vmul.f32 %v3737, %v4211
        %v4429 = vmul.f32 %v3739, %v4211
        %v4430 = vmul.f32 %v3741, %v4211
        %v4431 = vmul.f32 %v3743, %v4211
        %v4432 = vmul.f32 %v3745, %v4212
        %v4433 = vmul.f32 %v3747, %v4212
        %v4434 = vmul.f32 %v3749, %v4212
        %v4435 = vmul.f32 %v3751, %v4212
        %v4436 = vmul.f32 %v3753, %v4213
        %v4437 = vmul.f32 %v3755, %v4213
        %v4438 = vmul.f32 %v3757, %v4213
        %v4439 = vmul.f32 %v3759, %v4213
        %v4440 = vmul.f32 %v3761, %v4214
        %v4441 = vmul.f32 %v3763, %v4214
        %v4442 = vmul.f32 %v3765, %v4214
        %v4443 = vmul.f32 %v3767, %v4214
        %v4444 = vmul.f32 %v3769, %v4215
        %v4445 = vmul.f32 %v3771, %v4215
        %v4446 = vmul.f32 %v3773, %v4215
        %v4447 = vmul.f32 %v3775, %v4215
        %v4448 = vmul.f32 %v3777, %v4216
        %v4449 = vmul.f32 %v3779, %v4216
        %v4450 = vmul.f32 %v3781, %v4216
        %v4451 = vmul.f32 %v3783, %v4216
        %v4452 = vmul.f32 %v3785, %v4217
        %v4453 = vmul.f32 %v3787, %v4217
        %v4454 = vmul.f32 %v3789, %v4217
        %v4455 = vmul.f32 %v3791, %v4217
        %v4456 = vmul.f32 %v3793, %v4218
        %v4457 = vmul.f32 %v3795, %v4218
        %v4458 = vmul.f32 %v3797, %v4218
        %v4459 = vmul.f32 %v3799, %v4218
        %v4460 = vmul.f32 %v3801, %v4219
        %v4461 = vmul.f32 %v3803, %v4219
        %v4462 = vmul.f32 %v3805, %v4219
        %v4463 = vmul.f32 %v3807, %v4219
        %v4464 = vmul.f32 %v3809, %v4220
        %v4465 = vmul.f32 %v3811, %v4220
        %v4466 = vmul.f32 %v3813, %v4220
        %v4467 = vmul.f32 %v3815, %v4220
        %v4468 = vmul.f32 %v3817, %v4221
        %v4469 = vmul.f32 %v3819, %v4221
        %v4470 = vmul.f32 %v3821, %v4221
        %v4471 = vmul.f32 %v3823, %v4221
        %v4472 = vmul.f32 %v3825, %v4222
        %v4473 = vmul.f32 %v3827, %v4222
        %v4474 = vmul.f32 %v3829, %v4222
        %v4475 = vmul.f32 %v3831, %v4222
        %v4476 = vmul.f32 %v3833, %v4223
        %v4477 = vmul.f32 %v3835, %v4223
        %v4478 = vmul.f32 %v3837, %v4223
        %v4479 = vmul.f32 %v3839, %v4223
        %v4480 = vpack.c.bf16 %v579, %v573
        %v4481 = vpack.c.bf16 %v581, %v575
        %v4482 = vpack.c.bf16 %v656, %v650
        %v4483 = vpack.c.bf16 %v658, %v652
        %v4484 = vpack.c.bf16 %v4228, %v4224
        %v4485 = vpack.c.bf16 %v4229, %v4225
        %v4486 = vpack.c.bf16 %v4230, %v4226
        %v4487 = vpack.c.bf16 %v4231, %v4227
        %v4488 = vpack.c.bf16 %v4236, %v4232
        %v4489 = vpack.c.bf16 %v4237, %v4233
        %v4490 = vpack.c.bf16 %v4238, %v4234
        %v4491 = vpack.c.bf16 %v4239, %v4235
        %v4492 = vpack.c.bf16 %v4244, %v4240
        %v4493 = vpack.c.bf16 %v4245, %v4241
        %v4494 = vpack.c.bf16 %v4246, %v4242
        %v4495 = vpack.c.bf16 %v4247, %v4243
        %v4496 = vpack.c.bf16 %v4252, %v4248
        %v4497 = vpack.c.bf16 %v4253, %v4249
        %v4498 = vpack.c.bf16 %v4254, %v4250
        %v4499 = vpack.c.bf16 %v4255, %v4251
        %v4500 = vpack.c.bf16 %v4260, %v4256
        %v4501 = vpack.c.bf16 %v4261, %v4257
        %v4502 = vpack.c.bf16 %v4262, %v4258
        %v4503 = vpack.c.bf16 %v4263, %v4259
        %v4504 = vpack.c.bf16 %v4268, %v4264
        %v4505 = vpack.c.bf16 %v4269, %v4265
        %v4506 = vpack.c.bf16 %v4270, %v4266
        %v4507 = vpack.c.bf16 %v4271, %v4267
        %v4508 = vpack.c.bf16 %v4276, %v4272
        %v4509 = vpack.c.bf16 %v4277, %v4273
        %v4510 = vpack.c.bf16 %v4278, %v4274
        %v4511 = vpack.c.bf16 %v4279, %v4275
        %v4512 = vpack.c.bf16 %v4284, %v4280
        %v4513 = vpack.c.bf16 %v4285, %v4281
        %v4514 = vpack.c.bf16 %v4286, %v4282
        %v4515 = vpack.c.bf16 %v4287, %v4283
        %v4516 = vpack.c.bf16 %v4292, %v4288
        %v4517 = vpack.c.bf16 %v4293, %v4289
        %v4518 = vpack.c.bf16 %v4294, %v4290
        %v4519 = vpack.c.bf16 %v4295, %v4291
        %v4520 = vpack.c.bf16 %v4300, %v4296
        %v4521 = vpack.c.bf16 %v4301, %v4297
        %v4522 = vpack.c.bf16 %v4302, %v4298
        %v4523 = vpack.c.bf16 %v4303, %v4299
        %v4524 = vpack.c.bf16 %v4308, %v4304
        %v4525 = vpack.c.bf16 %v4309, %v4305
        %v4526 = vpack.c.bf16 %v4310, %v4306
        %v4527 = vpack.c.bf16 %v4311, %v4307
        %v4528 = vpack.c.bf16 %v4316, %v4312
        %v4529 = vpack.c.bf16 %v4317, %v4313
        %v4530 = vpack.c.bf16 %v4318, %v4314
        %v4531 = vpack.c.bf16 %v4319, %v4315
        %v4532 = vpack.c.bf16 %v4324, %v4320
        %v4533 = vpack.c.bf16 %v4325, %v4321
        %v4534 = vpack.c.bf16 %v4326, %v4322
        %v4535 = vpack.c.bf16 %v4327, %v4323
        %v4536 = vpack.c.bf16 %v4332, %v4328
        %v4537 = vpack.c.bf16 %v4333, %v4329
        %v4538 = vpack.c.bf16 %v4334, %v4330
        %v4539 = vpack.c.bf16 %v4335, %v4331
        %v4540 = vpack.c.bf16 %v4340, %v4336
        %v4541 = vpack.c.bf16 %v4341, %v4337
        %v4542 = vpack.c.bf16 %v4342, %v4338
        %v4543 = vpack.c.bf16 %v4343, %v4339
        %v4544 = vpack.c.bf16 %v4348, %v4344
        %v4545 = vpack.c.bf16 %v4349, %v4345
        %v4546 = vpack.c.bf16 %v4350, %v4346
        %v4547 = vpack.c.bf16 %v4351, %v4347
        %v4548 = vpack.c.bf16 %v4356, %v4352
        %v4549 = vpack.c.bf16 %v4357, %v4353
        %v4550 = vpack.c.bf16 %v4358, %v4354
        %v4551 = vpack.c.bf16 %v4359, %v4355
        %v4552 = vpack.c.bf16 %v4364, %v4360
        %v4553 = vpack.c.bf16 %v4365, %v4361
        %v4554 = vpack.c.bf16 %v4366, %v4362
        %v4555 = vpack.c.bf16 %v4367, %v4363
        %v4556 = vpack.c.bf16 %v4372, %v4368
        %v4557 = vpack.c.bf16 %v4373, %v4369
        %v4558 = vpack.c.bf16 %v4374, %v4370
        %v4559 = vpack.c.bf16 %v4375, %v4371
        %v4560 = vpack.c.bf16 %v4380, %v4376
        %v4561 = vpack.c.bf16 %v4381, %v4377
        %v4562 = vpack.c.bf16 %v4382, %v4378
        %v4563 = vpack.c.bf16 %v4383, %v4379
        %v4564 = vpack.c.bf16 %v4388, %v4384
        %v4565 = vpack.c.bf16 %v4389, %v4385
        %v4566 = vpack.c.bf16 %v4390, %v4386
        %v4567 = vpack.c.bf16 %v4391, %v4387
        %v4568 = vpack.c.bf16 %v4396, %v4392
        %v4569 = vpack.c.bf16 %v4397, %v4393
        %v4570 = vpack.c.bf16 %v4398, %v4394
        %v4571 = vpack.c.bf16 %v4399, %v4395
        %v4572 = vpack.c.bf16 %v4404, %v4400
        %v4573 = vpack.c.bf16 %v4405, %v4401
        %v4574 = vpack.c.bf16 %v4406, %v4402
        %v4575 = vpack.c.bf16 %v4407, %v4403
        %v4576 = vpack.c.bf16 %v4412, %v4408
        %v4577 = vpack.c.bf16 %v4413, %v4409
        %v4578 = vpack.c.bf16 %v4414, %v4410
        %v4579 = vpack.c.bf16 %v4415, %v4411
        %v4580 = vpack.c.bf16 %v4420, %v4416
        %v4581 = vpack.c.bf16 %v4421, %v4417
        %v4582 = vpack.c.bf16 %v4422, %v4418
        %v4583 = vpack.c.bf16 %v4423, %v4419
        %v4584 = vpack.c.bf16 %v4428, %v4424
        %v4585 = vpack.c.bf16 %v4429, %v4425
        %v4586 = vpack.c.bf16 %v4430, %v4426
        %v4587 = vpack.c.bf16 %v4431, %v4427
        %v4588 = vpack.c.bf16 %v4436, %v4432
        %v4589 = vpack.c.bf16 %v4437, %v4433
        %v4590 = vpack.c.bf16 %v4438, %v4434
        %v4591 = vpack.c.bf16 %v4439, %v4435
        %v4592 = vpack.c.bf16 %v4444, %v4440
        %v4593 = vpack.c.bf16 %v4445, %v4441
        %v4594 = vpack.c.bf16 %v4446, %v4442
        %v4595 = vpack.c.bf16 %v4447, %v4443
        %v4596 = vpack.c.bf16 %v4452, %v4448
        %v4597 = vpack.c.bf16 %v4453, %v4449
        %v4598 = vpack.c.bf16 %v4454, %v4450
        %v4599 = vpack.c.bf16 %v4455, %v4451
        %v4600 = vpack.c.bf16 %v4460, %v4456
        %v4601 = vpack.c.bf16 %v4461, %v4457
        %v4602 = vpack.c.bf16 %v4462, %v4458
        %v4603 = vpack.c.bf16 %v4463, %v4459
        %v4604 = vpack.c.bf16 %v4468, %v4464
        %v4605 = vpack.c.bf16 %v4469, %v4465
        %v4606 = vpack.c.bf16 %v4470, %v4466
        %v4607 = vpack.c.bf16 %v4471, %v4467
        %v4608 = vpack.c.bf16 %v4476, %v4472
        %v4609 = vpack.c.bf16 %v4477, %v4473
        %v4610 = vpack.c.bf16 %v4478, %v4474
        %v4611 = vpack.c.bf16 %v4479, %v4475
        %4612 = vmatprep.subr.bf16.mxu0 %v4485
        %4613 = vmatpush1.bf16.xpose.msra.mxu0 %v4484
        %4614 = vmatprep.subr.bf16.mxu0 %v4489
        %4615 = vmatpush1.bf16.xpose.msra.mxu0 %v4488
        %4616 = vmatprep.subr.bf16.mxu0 %v4493
        %4617 = vmatpush1.bf16.xpose.msra.mxu0 %v4492
        %4618 = vmatprep.subr.bf16.mxu0 %v4497
        %4619 = vmatpush1.bf16.xpose.msra.mxu0 %v4496
        %4620 = vmatprep.subr.bf16.mxu0 %v4501
        %4621 = vmatpush1.bf16.xpose.msra.mxu0 %v4500
        %4622 = vmatprep.subr.bf16.mxu0 %v4505
        %4623 = vmatpush1.bf16.xpose.msra.mxu0 %v4504
        %4624 = vmatprep.subr.bf16.mxu0 %v4509
        %4625 = vmatpush1.bf16.xpose.msra.mxu0 %v4508
        %4626 = vmatprep.subr.bf16.mxu0 %v4513
        %4627 = vmatpush1.bf16.xpose.msra.mxu0 %v4512
        %4628 = vmatprep.subr.bf16.mxu0 %v4517
        %4629 = vmatpush1.bf16.xpose.msra.mxu0 %v4516
        %4630 = vmatprep.subr.bf16.mxu0 %v4521
        %4631 = vmatpush1.bf16.xpose.msra.mxu0 %v4520
        %4632 = vmatprep.subr.bf16.mxu0 %v4525
        %4633 = vmatpush1.bf16.xpose.msra.mxu0 %v4524
        %4634 = vmatprep.subr.bf16.mxu0 %v4529
        %4635 = vmatpush1.bf16.xpose.msra.mxu0 %v4528
        %4636 = vmatprep.subr.bf16.mxu0 %v4533
        %4637 = vmatpush1.bf16.xpose.msra.mxu0 %v4532
        %4638 = vmatprep.subr.bf16.mxu0 %v4537
        %4639 = vmatpush1.bf16.xpose.msra.mxu0 %v4536
        %4640 = vmatprep.subr.bf16.mxu0 %v4541
        %4641 = vmatpush1.bf16.xpose.msra.mxu0 %v4540
        %4642 = vmatprep.subr.bf16.mxu0 %v4545
        %4643 = vmatpush1.bf16.xpose.msra.mxu0 %v4544
        %4644 = vmatprep.mubr.bf16.mxu0 %v4481
        %4645 = vmatmul.mubr.bf16.gmra.mrb[0].mxu0 %v4480
        %v4646 = vpop.f32.mrb[0].mxu0
        %v4647 = vadd.f32 %v325, %v4646
        %v4648 = vpop.f32.mrb[0].mxu0
        %v4649 = vadd.f32 %v326, %v4648
        %v4650 = vpop.f32.mrb[0].mxu0
        %v4651 = vadd.f32 %v329, %v4650
        %v4652 = vpop.f32.mrb[0].mxu0
        %v4653 = vadd.f32 %v330, %v4652
        %4654 = vdwg.mxu0
        %4655 = vmatprep.subr.bf16.mxu0 %v4487
        %4656 = vmatpush1.bf16.xpose.msra.mxu0 %v4486
        %4657 = vmatprep.subr.bf16.mxu0 %v4491
        %4658 = vmatpush1.bf16.xpose.msra.mxu0 %v4490
        %4659 = vmatprep.subr.bf16.mxu0 %v4495
        %4660 = vmatpush1.bf16.xpose.msra.mxu0 %v4494
        %4661 = vmatprep.subr.bf16.mxu0 %v4499
        %4662 = vmatpush1.bf16.xpose.msra.mxu0 %v4498
        %4663 = vmatprep.subr.bf16.mxu0 %v4503
        %4664 = vmatpush1.bf16.xpose.msra.mxu0 %v4502
        %4665 = vmatprep.subr.bf16.mxu0 %v4507
        %4666 = vmatpush1.bf16.xpose.msra.mxu0 %v4506
        %4667 = vmatprep.subr.bf16.mxu0 %v4511
        %4668 = vmatpush1.bf16.xpose.msra.mxu0 %v4510
        %4669 = vmatprep.subr.bf16.mxu0 %v4515
        %4670 = vmatpush1.bf16.xpose.msra.mxu0 %v4514
        %4671 = vmatprep.subr.bf16.mxu0 %v4519
        %4672 = vmatpush1.bf16.xpose.msra.mxu0 %v4518
        %4673 = vmatprep.subr.bf16.mxu0 %v4523
        %4674 = vmatpush1.bf16.xpose.msra.mxu0 %v4522
        %4675 = vmatprep.subr.bf16.mxu0 %v4527
        %4676 = vmatpush1.bf16.xpose.msra.mxu0 %v4526
        %4677 = vmatprep.subr.bf16.mxu0 %v4531
        %4678 = vmatpush1.bf16.xpose.msra.mxu0 %v4530
        %4679 = vmatprep.subr.bf16.mxu0 %v4535
        %4680 = vmatpush1.bf16.xpose.msra.mxu0 %v4534
        %4681 = vmatprep.subr.bf16.mxu0 %v4539
        %4682 = vmatpush1.bf16.xpose.msra.mxu0 %v4538
        %4683 = vmatprep.subr.bf16.mxu0 %v4543
        %4684 = vmatpush1.bf16.xpose.msra.mxu0 %v4542
        %4685 = vmatprep.subr.bf16.mxu0 %v4547
        %4686 = vmatpush1.bf16.xpose.msra.mxu0 %v4546
        %4687 = vmatprep.mubr.bf16.mxu0 %v4483
        %4688 = vmatmul.mubr.bf16.gmra.mrb[0].mxu0 %v4482
        %v4689 = vpop.f32.mrb[0].mxu0
        %v4690 = vadd.f32 %v4647, %v4689
        %v4691 = vpop.f32.mrb[0].mxu0
        %v4692 = vadd.f32 %v4649, %v4691
        %v4693 = vpop.f32.mrb[0].mxu0
        %v4694 = vadd.f32 %v4651, %v4693
        %v4695 = vpop.f32.mrb[0].mxu0
        %v4696 = vadd.f32 %v4653, %v4695
        %4697 = vdwg.mxu0
        %4698 = vmatprep.subr.bf16.mxu0 %v4549
        %4699 = vmatpush1.bf16.xpose.msra.mxu0 %v4548
        %4700 = vmatprep.subr.bf16.mxu0 %v4553
        %4701 = vmatpush1.bf16.xpose.msra.mxu0 %v4552
        %4702 = vmatprep.subr.bf16.mxu0 %v4557
        %4703 = vmatpush1.bf16.xpose.msra.mxu0 %v4556
        %4704 = vmatprep.subr.bf16.mxu0 %v4561
        %4705 = vmatpush1.bf16.xpose.msra.mxu0 %v4560
        %4706 = vmatprep.subr.bf16.mxu0 %v4565
        %4707 = vmatpush1.bf16.xpose.msra.mxu0 %v4564
        %4708 = vmatprep.subr.bf16.mxu0 %v4569
        %4709 = vmatpush1.bf16.xpose.msra.mxu0 %v4568
        %4710 = vmatprep.subr.bf16.mxu0 %v4573
        %4711 = vmatpush1.bf16.xpose.msra.mxu0 %v4572
        %4712 = vmatprep.subr.bf16.mxu0 %v4577
        %4713 = vmatpush1.bf16.xpose.msra.mxu0 %v4576
        %4714 = vmatprep.subr.bf16.mxu0 %v4581
        %4715 = vmatpush1.bf16.xpose.msra.mxu0 %v4580
        %4716 = vmatprep.subr.bf16.mxu0 %v4585
        %4717 = vmatpush1.bf16.xpose.msra.mxu0 %v4584
        %4718 = vmatprep.subr.bf16.mxu0 %v4589
        %4719 = vmatpush1.bf16.xpose.msra.mxu0 %v4588
        %4720 = vmatprep.subr.bf16.mxu0 %v4593
        %4721 = vmatpush1.bf16.xpose.msra.mxu0 %v4592
        %4722 = vmatprep.subr.bf16.mxu0 %v4597
        %4723 = vmatpush1.bf16.xpose.msra.mxu0 %v4596
        %4724 = vmatprep.subr.bf16.mxu0 %v4601
        %4725 = vmatpush1.bf16.xpose.msra.mxu0 %v4600
        %4726 = vmatprep.subr.bf16.mxu0 %v4605
        %4727 = vmatpush1.bf16.xpose.msra.mxu0 %v4604
        %4728 = vmatprep.subr.bf16.mxu0 %v4609
        %4729 = vmatpush1.bf16.xpose.msra.mxu0 %v4608
        %4730 = vmatprep.mubr.bf16.mxu0 %v4481
        %4731 = vmatmul.mubr.bf16.gmra.mrb[0].mxu0 %v4480
        %v4732 = vpop.f32.mrb[0].mxu0
        %v4733 = vadd.f32 %v327, %v4732
        %v4734 = vpop.f32.mrb[0].mxu0
        %v4735 = vadd.f32 %v328, %v4734
        %v4736 = vpop.f32.mrb[0].mxu0
        %v4737 = vadd.f32 %v331, %v4736
        %v4738 = vpop.f32.mrb[0].mxu0
        %v4739 = vadd.f32 %v332, %v4738
        %4740 = vdwg.mxu0
        %4741 = vmatprep.subr.bf16.mxu0 %v4551
        %4742 = vmatpush1.bf16.xpose.msra.mxu0 %v4550
        %4743 = vmatprep.subr.bf16.mxu0 %v4555
        %4744 = vmatpush1.bf16.xpose.msra.mxu0 %v4554
        %4745 = vmatprep.subr.bf16.mxu0 %v4559
        %4746 = vmatpush1.bf16.xpose.msra.mxu0 %v4558
        %4747 = vmatprep.subr.bf16.mxu0 %v4563
        %4748 = vmatpush1.bf16.xpose.msra.mxu0 %v4562
        %4749 = vmatprep.subr.bf16.mxu0 %v4567
        %4750 = vmatpush1.bf16.xpose.msra.mxu0 %v4566
        %4751 = vmatprep.subr.bf16.mxu0 %v4571
        %4752 = vmatpush1.bf16.xpose.msra.mxu0 %v4570
        %4753 = vmatprep.subr.bf16.mxu0 %v4575
        %4754 = vmatpush1.bf16.xpose.msra.mxu0 %v4574
        %4755 = vmatprep.subr.bf16.mxu0 %v4579
        %4756 = vmatpush1.bf16.xpose.msra.mxu0 %v4578
        %4757 = vmatprep.subr.bf16.mxu0 %v4583
        %4758 = vmatpush1.bf16.xpose.msra.mxu0 %v4582
        %4759 = vmatprep.subr.bf16.mxu0 %v4587
        %4760 = vmatpush1.bf16.xpose.msra.mxu0 %v4586
        %4761 = vmatprep.subr.bf16.mxu0 %v4591
        %4762 = vmatpush1.bf16.xpose.msra.mxu0 %v4590
        %4763 = vmatprep.subr.bf16.mxu0 %v4595
        %4764 = vmatpush1.bf16.xpose.msra.mxu0 %v4594
        %4765 = vmatprep.subr.bf16.mxu0 %v4599
        %4766 = vmatpush1.bf16.xpose.msra.mxu0 %v4598
        %4767 = vmatprep.subr.bf16.mxu0 %v4603
        %4768 = vmatpush1.bf16.xpose.msra.mxu0 %v4602
        %4769 = vmatprep.subr.bf16.mxu0 %v4607
        %4770 = vmatpush1.bf16.xpose.msra.mxu0 %v4606
        %4771 = vmatprep.subr.bf16.mxu0 %v4611
        %4772 = vmatpush1.bf16.xpose.msra.mxu0 %v4610
        %4773 = vmatprep.mubr.bf16.mxu0 %v4483
        %4774 = vmatmul.mubr.bf16.gmra.mrb[0].mxu0 %v4482
        %v4775 = vpop.f32.mrb[0].mxu0
        %v4776 = vadd.f32 %v4733, %v4775
        %v4777 = vpop.f32.mrb[0].mxu0
        %v4778 = vadd.f32 %v4735, %v4777
        %v4779 = vpop.f32.mrb[0].mxu0
        %v4780 = vadd.f32 %v4737, %v4779
        %v4781 = vpop.f32.mrb[0].mxu0
        %v4782 = vadd.f32 %v4739, %v4781
        %4783 = vdwg.mxu0
        %4784 = vst [vmem:[%s310] sm:$0xff] %v4690
        %4785 = vst [vmem:[%s310 + $0x8] sm:$0xff] %v4692
        %4786 = vst [vmem:[%s310 + $0x10] sm:$0xff] %v4776
        %4787 = vst [vmem:[%s310 + $0x18] sm:$0xff] %v4778
        %4788 = vst [vmem:[%s310 + $0x20] sm:$0xff] %v4694
        %4789 = vst [vmem:[%s310 + $0x28] sm:$0xff] %v4696
        %4790 = vst [vmem:[%s310 + $0x30] sm:$0xff] %v4780
        %4791 = vst [vmem:[%s310 + $0x38] sm:$0xff] %v4782
        %s4792 = sand.u32 %s198, 1
        %s4793 = scalar_lea.sflag [#allocation4], %s4792
        %s4794 = sand.u32 %s198, 1
        %s4795 = smul.addr %s4794, 64
        %s4796 = scalar_lea.vmem [#allocation5], %s4795
        // Predicated region
        $region53: #{tpu_custom_call.1} parent=47 // pred_check
          %p4797 = pneg %p208
        $region54: #{tpu_custom_call.1} parent=47 // pred_check_branch
          %4799 = sbr.rel (%p4797) target = $region56
        $region55: #{tpu_custom_call.1} parent=47 // pred_region
          %s4800 = smul.u32 4, %s29
          %s4802 = ssub.s32 1024, 1024
          %4803 = vsyncadd %s4793, %s4802
          %s4804 = smul.addr %s28, 8
          %s4805 = sadd.s32 %s4800, %s4804
          %s4806 = smul.addr %s4805, 128
          %s4807 = scalar_lea.hbm %s7, %s4806
          %s4808 = sshll.u32 %s4796, 4
          %s4809 = int_to_ptr.vmem [resolvable:$true] %s4808
          %4814 = dma.vmem_to_hbm [thread:$0]  %s4809, 1024, %s4807, %s4793, 512, 512, 32
        $region56: #{tpu_custom_call.1} parent=47 // pred_fallthru
          _
      $region48: #{tpu_custom_call.1} parent=5 // pred_fallthru
        _
      %p4815 = scmp.le.s32.totalorder 2, %s19
      // Predicated region
      $region57: #{tpu_custom_call.1} parent=5 // pred_check
        %p4816 = pneg %p4815
      $region58: #{tpu_custom_call.1} parent=5 // pred_check_branch
        %4818 = sbr.rel (%p4816) target = $region60
      $region59: #{tpu_custom_call.1} parent=5 // pred_region
        %s4819 = ssub.s32 %s19, 2
        // Predicated region
        $region61: #{tpu_custom_call.1} parent=59 // pred_check
          %p4820 = pneg %p214
        $region62: #{tpu_custom_call.1} parent=59 // pred_check_branch
          %4822 = sbr.rel (%p4820) target = $region64
        $region63: #{tpu_custom_call.1} parent=59 // pred_region
          %s4823 = sand.u32 %s199, 1
          %s4824 = scalar_lea.sflag [#allocation4], %s4823
          %s4825 = sand.u32 %s199, 1
          %s4826 = smul.addr %s4825, 64
          %s4827 = scalar_lea.vmem [#allocation5], %s4826
          %4828 = dma.done %s4824, 1024
        $region64: #{tpu_custom_call.1} parent=59 // pred_fallthru
          _
      $region60: #{tpu_custom_call.1} parent=5 // pred_fallthru
        _
    $region6: #{tpu_custom_call.1} parent=1 // loop_footer
      %s23 = sadd.s32 1, %s19
    $region7: #{tpu_custom_call.1} parent=1 // loop_footer_branch
      %18 = sbr.rel target = $region3
    $region8: #{tpu_custom_call.1} parent=1 // loop_exit
      _
    %4829 = vsyncpa [#allocation3], 1
    %s4830 = scalar_lea.sflag [#allocation3], 1
    %4831 = vsyncpa %s4830, 1
    %4832 = vsyncpa [#allocation4], 1
    %s4833 = scalar_lea.sflag [#allocation4], 1
    %4834 = vsyncpa %s4833, 1

</llo_original>
